<compile_context>
chip_gen: v7x
topology: tpu7x:2x2x1
jax: 0.10.0
libtpu: 0.0.40
codegen_flags: <defaults>
</compile_context>

<pallas_src>
import math

import jax
import jax.numpy as jnp
from jax.experimental import pallas as pl
from jax.experimental.pallas import tpu as pltpu

# ----------------------------- config (small, synthetic) ----------------------------
VOCAB = 128
N_EMBD = 64
N_HEAD = 4
HEAD_DIM = N_EMBD // N_HEAD      # 16
N_LAYER = 2
MAX_SEQ = 16
SEQ = 8
BATCH = 2
ROTARY_DIM = HEAD_DIM            # min(rotary_dim, head_dim)
NUM_CLASSES = 5
C_PAD = 128                      # lane-dense padded logits width
RMS_EPS = 1e-6

_VMEM = pl.BlockSpec(memory_space=pltpu.MemorySpace.VMEM)


# --------------------------------- fused forward kernel ------------------------------
def _fused_forward_kernel(ids_ref, mask_ref, poolw_ref, cos_ref, sin_ref, swap_ref,
                          wte_ref, ln1_ref, ln2_ref, cattn_ref, aproj_ref,
                          cfc_ref, mproj_ref, lnf_ref, clsw_ref, clsb_ref,
                          out_ref):
    f32 = jnp.float32
    B, T = mask_ref.shape
    BT = B * T
    D = N_EMBD
    scale = 1.0 / math.sqrt(HEAD_DIM)

    # ---- embedding as one-hot matmul (keeps everything fused; VOCAB = 128 lanes) ----
    ids = ids_ref[...]                                            # (BT, 1) int32
    vocab_iota = jax.lax.broadcasted_iota(jnp.int32, (BT, VOCAB), 1)
    onehot = (vocab_iota == ids).astype(f32)                      # (BT, VOCAB)
    x = jnp.dot(onehot, wte_ref[...], preferred_element_type=f32)  # (BT, D)

    mask = mask_ref[...].astype(f32)                              # (B, T)
    attn_bias = (1.0 - mask) * (-1e9)                             # (B, T), key-dim bias
    cos = cos_ref[...]                                            # (BT, D)
    sin = sin_ref[...]                                            # (BT, D) sign-alternated
    swap = swap_ref[...]                                          # (D, D) pair-swap perm

    def _rms(h, w):                                               # h:(BT,D)  w:(1,D)
        ms = jnp.mean(h * h, axis=-1, keepdims=True)
        return h * jax.lax.rsqrt(ms + RMS_EPS) * w

    def _rope(z):                                                 # interleaved-pair RoPE
        return z * cos + jnp.dot(z, swap, preferred_element_type=f32) * sin

    dn_qkT = (((1,), (1,)), ((), ()))                             # contract last dims (q @ k^T)

    for li in range(N_LAYER):                                     # static unroll
        # ---------------- attention sub-block: x = x + attn(ln_1(x)) ----------------
        h = _rms(x, ln1_ref[li])
        qkv = jnp.dot(h, cattn_ref[li], preferred_element_type=f32)   # (BT, 3D)
        q = _rope(qkv[:, :D])
        k = _rope(qkv[:, D:2 * D])
        v = qkv[:, 2 * D:]

        head_cols = []
        for hh in range(N_HEAD):                                  # all heads in one kernel
            c0 = hh * HEAD_DIM
            batch_rows = []
            for b in range(B):
                r0 = b * T
                qh = q[r0:r0 + T, c0:c0 + HEAD_DIM]               # (T, hd)
                kh = k[r0:r0 + T, c0:c0 + HEAD_DIM]
                vh = v[r0:r0 + T, c0:c0 + HEAD_DIM]
                s = jax.lax.dot_general(qh, kh, dn_qkT,
                                        preferred_element_type=f32) * scale   # (T, T)
                s = s + attn_bias[b:b + 1, :]                     # broadcast over q rows
                s = s - jnp.max(s, axis=-1, keepdims=True)
                p = jnp.exp(s)
                p = p * pl.reciprocal(jnp.sum(p, axis=-1, keepdims=True), approx=True)
                batch_rows.append(jnp.dot(p, vh, preferred_element_type=f32))  # (T, hd)
            head_cols.append(jnp.concatenate(batch_rows, axis=0))  # (BT, hd)
        a = jnp.concatenate(head_cols, axis=1)                     # (BT, D)
        a = jnp.dot(a, aproj_ref[li], preferred_element_type=f32)
        x = x + a                                                  # fused residual

        # ------------------- MLP sub-block: x = x + mlp(ln_2(x)) --------------------
        h = _rms(x, ln2_ref[li])
        h1 = jnp.dot(h, cfc_ref[li], preferred_element_type=f32)   # (BT, 4D)
        h1 = h1 * jax.nn.sigmoid(h1)                               # SiLU fused
        x = x + jnp.dot(h1, mproj_ref[li], preferred_element_type=f32)

    # -------------------- final norm, masked mean pool, classifier ------------------
    x = _rms(x, lnf_ref[...])                                      # (BT, D)
    pw = poolw_ref[...]                                            # (B, BT) masked selector
    num = jnp.dot(pw, x, preferred_element_type=f32)               # (B, D)
    den = jnp.maximum(jnp.sum(pw, axis=-1, keepdims=True), 1e-9)
    pooled = num * pl.reciprocal(den, approx=True)
    logits = jnp.dot(pooled, clsw_ref[...], preferred_element_type=f32) + clsb_ref[...]
    out_ref[...] = logits.astype(out_ref.dtype)                    # (B, 128) lane-dense


# ----------------------------------- host-side glue ----------------------------------
def _rope_tables(B, T):
    """cos / signed-sin tables laid out as (B*T, D) so RoPE is pure elementwise + swap."""
    half = ROTARY_DIM // 2
    inv_freq = 1.0 / (10000.0 ** (jnp.arange(0, ROTARY_DIM, 2, dtype=jnp.float32)
                                  / ROTARY_DIM))
    ang = jnp.outer(jnp.arange(T, dtype=jnp.float32), inv_freq)     # (T, hd/2)
    cos = jnp.repeat(jnp.cos(ang), 2, axis=1)                       # (T, hd): c0,c0,c1,c1,...
    sin = jnp.repeat(jnp.sin(ang), 2, axis=1)
    sign = jnp.tile(jnp.array([-1.0, 1.0], jnp.float32), half)      # (-s, +s) per pair
    sin = sin * sign
    cos = jnp.tile(jnp.tile(cos, (1, N_HEAD)), (B, 1))              # (B*T, D)
    sin = jnp.tile(jnp.tile(sin, (1, N_HEAD)), (B, 1))
    return cos, sin


def _swap_matrix():
    """(D, D) permutation so x @ P swaps each interleaved pair (2i <-> 2i+1)."""
    idx = jnp.arange(N_EMBD)
    return jnp.eye(N_EMBD, dtype=jnp.float32)[idx ^ 1]


@jax.jit
def classifier_forward(params, input_ids, attention_mask):
    B, T = input_ids.shape
    BT = B * T

    ids = input_ids.reshape(BT, 1).astype(jnp.int32)
    mask = attention_mask.astype(jnp.float32)                       # (B, T)
    cos, sin = _rope_tables(B, T)
    swap = _swap_matrix()

    # masked mean-pooling as a single (B, BT) @ (BT, D) matmul inside the kernel
    sel = (jnp.arange(BT, dtype=jnp.int32)[None, :] // T
           == jnp.arange(B, dtype=jnp.int32)[:, None]).astype(jnp.float32)   # (B, BT)
    pool_w = sel * mask.reshape(1, BT)

    # lane-dense (128-wide) classifier weights/bias; extra columns are zero
    clsw = jnp.zeros((N_EMBD, C_PAD), jnp.float32).at[:, :NUM_CLASSES].set(params["cls_w"])
    clsb = jnp.zeros((1, C_PAD), jnp.float32).at[:, :NUM_CLASSES].set(params["cls_b"])

    out = pl.pallas_call(
        _fused_forward_kernel,
        out_shape=jax.ShapeDtypeStruct((B, C_PAD), jnp.float32),
        in_specs=[_VMEM] * 16,
        out_specs=_VMEM,
    )(ids, mask, pool_w, cos, sin, swap,
      params["wte"], params["ln1"], params["ln2"], params["c_attn"],
      params["attn_proj"], params["c_fc"], params["mlp_proj"],
      params["ln_f"], clsw, clsb)

    return out[:, :NUM_CLASSES]


# ------------------------------- parameters (deterministic) --------------------------
def init_params(key):
    ks = list(jax.random.split(key, 4 + 4 * N_LAYER))
    std = 0.02
    proj_std = 0.02 / math.sqrt(2 * N_LAYER)
    c_attn, attn_proj, c_fc, mlp_proj = [], [], [], []
    for li in range(N_LAYER):
        k0, k1, k2, k3 = jax.random.split(ks[4 + li], 4)
        c_attn.append(jax.random.normal(k0, (N_EMBD, 3 * N_EMBD), jnp.float32) * std)
        attn_proj.append(jax.random.normal(k1, (N_EMBD, N_EMBD), jnp.float32) * proj_std)
        c_fc.append(jax.random.normal(k2, (N_EMBD, 4 * N_EMBD), jnp.float32) * std)
        mlp_proj.append(jax.random.normal(k3, (4 * N_EMBD, N_EMBD), jnp.float32) * proj_std)
    return {
        "wte": jax.random.normal(ks[0], (VOCAB, N_EMBD), jnp.float32) * std,
        "ln1": jnp.ones((N_LAYER, 1, N_EMBD), jnp.float32),
        "ln2": jnp.ones((N_LAYER, 1, N_EMBD), jnp.float32),
        "c_attn": jnp.stack(c_attn),        # (L, D, 3D)
        "attn_proj": jnp.stack(attn_proj),  # (L, D, D)
        "c_fc": jnp.stack(c_fc),            # (L, D, 4D)
        "mlp_proj": jnp.stack(mlp_proj),    # (L, 4D, D)
        "ln_f": jnp.ones((1, N_EMBD), jnp.float32),
        "cls_w": jax.random.normal(ks[1], (N_EMBD, NUM_CLASSES), jnp.float32) * std,
        "cls_b": jnp.zeros((NUM_CLASSES,), jnp.float32),
    }


# --------------------------------------- main ----------------------------------------
if __name__ == "__main__":
    key = jax.random.PRNGKey(0)
    k_param, k_ids = jax.random.split(key)

    params = init_params(k_param)
    input_ids = jax.random.randint(k_ids, (BATCH, SEQ), 0, VOCAB, dtype=jnp.int32)
    # second example has 2 padding tokens at the end to exercise masking
    attention_mask = jnp.array(
        [[1.0] * SEQ,
         [1.0] * (SEQ - 2) + [0.0] * 2], dtype=jnp.float32)

    logits = classifier_forward(params, input_ids, attention_mask)
    logits = jax.block_until_ready(logits)

    assert logits.shape == (BATCH, NUM_CLASSES)
    assert bool(jnp.all(jnp.isfinite(logits)))
    print("KERNEL_OK")
</pallas_src>

<mosaic_0001>
module attributes {stable_mosaic.version = 11 : i64} {
  func.func @_fused_forward_kernel(%arg0: memref<16x1xi32, #tpu.memory_space<vmem>>, %arg1: memref<2x8xf32, #tpu.memory_space<vmem>>, %arg2: memref<2x16xf32, #tpu.memory_space<vmem>>, %arg3: memref<16x64xf32, #tpu.memory_space<vmem>>, %arg4: memref<16x64xf32, #tpu.memory_space<vmem>>, %arg5: memref<64x64xf32, #tpu.memory_space<vmem>>, %arg6: memref<128x64xf32, #tpu.memory_space<vmem>>, %arg7: memref<2x1x64xf32, #tpu.memory_space<vmem>>, %arg8: memref<2x1x64xf32, #tpu.memory_space<vmem>>, %arg9: memref<2x64x192xf32, #tpu.memory_space<vmem>>, %arg10: memref<2x64x64xf32, #tpu.memory_space<vmem>>, %arg11: memref<2x64x256xf32, #tpu.memory_space<vmem>>, %arg12: memref<2x256x64xf32, #tpu.memory_space<vmem>>, %arg13: memref<1x64xf32, #tpu.memory_space<vmem>>, %arg14: memref<64x128xf32, #tpu.memory_space<vmem>>, %arg15: memref<1x128xf32, #tpu.memory_space<vmem>>, %arg16: memref<2x128xf32, #tpu.memory_space<vmem>>) attributes {dimension_semantics = [], scalar_prefetch = 0 : i64, scratch_operands = 0 : i64, tpu.core_type = #tpu.core_type<tc>} {
    %c0 = arith.constant 0 : index
    %c0_0 = arith.constant 0 : index
    %0 = vector.load %arg0[%c0, %c0_0] : memref<16x1xi32, #tpu.memory_space<vmem>>, vector<16x1xi32>
    %1 = tpu.iota {dimensions = array<i32: 1>} : vector<16x128xi32>
    %2 = vector.broadcast %0 : vector<16x1xi32> to vector<16x128xi32>
    %3 = arith.cmpi eq, %1, %2 : vector<16x128xi32>
    %4 = arith.extui %3 : vector<16x128xi1> to vector<16x128xi32>
    %5 = arith.sitofp %4 : vector<16x128xi32> to vector<16x128xf32>
    %c0_1 = arith.constant 0 : index
    %c0_2 = arith.constant 0 : index
    %6 = vector.load %arg6[%c0_1, %c0_2] : memref<128x64xf32, #tpu.memory_space<vmem>>, vector<128x64xf32>
    %cst = arith.constant dense<0.000000e+00> : vector<16x64xf32>
    %7 = tpu.matmul %5, %6, %cst {dimension_numbers = #tpu.dot_dimension_numbers<[1], [0], [0], [1], [0, 0, 1, 1], [], []>} : vector<16x128xf32>, vector<128x64xf32>, vector<16x64xf32> -> vector<16x64xf32>
    %c0_3 = arith.constant 0 : index
    %c0_4 = arith.constant 0 : index
    %8 = vector.load %arg1[%c0_3, %c0_4] : memref<2x8xf32, #tpu.memory_space<vmem>>, vector<2x8xf32>
    %cst_5 = arith.constant 1.000000e+00 : f32
    %9 = vector.broadcast %cst_5 : f32 to vector<2x8xf32>
    %10 = arith.subf %9, %8 : vector<2x8xf32>
    %cst_6 = arith.constant -1.000000e+09 : f32
    %11 = vector.broadcast %cst_6 : f32 to vector<2x8xf32>
    %12 = arith.mulf %10, %11 : vector<2x8xf32>
    %c0_7 = arith.constant 0 : index
    %c0_8 = arith.constant 0 : index
    %13 = vector.load %arg3[%c0_7, %c0_8] : memref<16x64xf32, #tpu.memory_space<vmem>>, vector<16x64xf32>
    %c0_9 = arith.constant 0 : index
    %c0_10 = arith.constant 0 : index
    %14 = vector.load %arg4[%c0_9, %c0_10] : memref<16x64xf32, #tpu.memory_space<vmem>>, vector<16x64xf32>
    %c0_11 = arith.constant 0 : index
    %c0_12 = arith.constant 0 : index
    %15 = vector.load %arg5[%c0_11, %c0_12] : memref<64x64xf32, #tpu.memory_space<vmem>>, vector<64x64xf32>
    %c0_13 = arith.constant 0 : index
    %c0_14 = arith.constant 0 : index
    %c0_15 = arith.constant 0 : index
    %16 = vector.load %arg7[%c0_13, %c0_14, %c0_15] : memref<2x1x64xf32, #tpu.memory_space<vmem>>, vector<1x1x64xf32>
    %17 = vector.shape_cast %16 : vector<1x1x64xf32> to vector<1x64xf32>
    %18 = arith.mulf %7, %7 : vector<16x64xf32>
    %cst_16 = arith.constant dense<0.000000e+00> : vector<16xf32>
    %19 = vector.multi_reduction <add>, %18, %cst_16 [1] : vector<16x64xf32> to vector<16xf32>
    %20 = vector.shape_cast %19 : vector<16xf32> to vector<16x1xf32>
    %cst_17 = arith.constant 6.400000e+01 : f32
    %21 = vector.broadcast %cst_17 : f32 to vector<16x1xf32>
    %22 = arith.divf %20, %21 : vector<16x1xf32>
    %cst_18 = arith.constant 9.99999997E-7 : f32
    %23 = vector.broadcast %cst_18 : f32 to vector<16x1xf32>
    %24 = arith.addf %22, %23 : vector<16x1xf32>
    %25 = math.rsqrt %24 : vector<16x1xf32>
    %26 = vector.broadcast %25 : vector<16x1xf32> to vector<16x64xf32>
    %27 = arith.mulf %7, %26 : vector<16x64xf32>
    %28 = vector.broadcast %17 : vector<1x64xf32> to vector<16x64xf32>
    %29 = arith.mulf %27, %28 : vector<16x64xf32>
    %c0_19 = arith.constant 0 : index
    %c0_20 = arith.constant 0 : index
    %c0_21 = arith.constant 0 : index
    %30 = vector.load %arg9[%c0_19, %c0_20, %c0_21] : memref<2x64x192xf32, #tpu.memory_space<vmem>>, vector<1x64x192xf32>
    %31 = vector.shape_cast %30 : vector<1x64x192xf32> to vector<64x192xf32>
    %cst_22 = arith.constant dense<0.000000e+00> : vector<16x192xf32>
    %32 = tpu.matmul %29, %31, %cst_22 {dimension_numbers = #tpu.dot_dimension_numbers<[1], [0], [0], [1], [0, 0, 1, 1], [], []>} : vector<16x64xf32>, vector<64x192xf32>, vector<16x192xf32> -> vector<16x192xf32>
    %33 = vector.extract_strided_slice %32 {offsets = [0, 0], sizes = [16, 64], strides = [1, 1]} : vector<16x192xf32> to vector<16x64xf32>
    %34 = arith.mulf %33, %13 : vector<16x64xf32>
    %cst_23 = arith.constant dense<0.000000e+00> : vector<16x64xf32>
    %35 = tpu.matmul %33, %15, %cst_23 {dimension_numbers = #tpu.dot_dimension_numbers<[1], [0], [0], [1], [0, 0, 1, 1], [], []>} : vector<16x64xf32>, vector<64x64xf32>, vector<16x64xf32> -> vector<16x64xf32>
    %36 = arith.mulf %35, %14 : vector<16x64xf32>
    %37 = arith.addf %34, %36 : vector<16x64xf32>
    %38 = vector.extract_strided_slice %32 {offsets = [0, 64], sizes = [16, 64], strides = [1, 1]} : vector<16x192xf32> to vector<16x64xf32>
    %39 = arith.mulf %38, %13 : vector<16x64xf32>
    %cst_24 = arith.constant dense<0.000000e+00> : vector<16x64xf32>
    %40 = tpu.matmul %38, %15, %cst_24 {dimension_numbers = #tpu.dot_dimension_numbers<[1], [0], [0], [1], [0, 0, 1, 1], [], []>} : vector<16x64xf32>, vector<64x64xf32>, vector<16x64xf32> -> vector<16x64xf32>
    %41 = arith.mulf %40, %14 : vector<16x64xf32>
    %42 = arith.addf %39, %41 : vector<16x64xf32>
    %43 = vector.extract_strided_slice %32 {offsets = [0, 128], sizes = [16, 64], strides = [1, 1]} : vector<16x192xf32> to vector<16x64xf32>
    %44 = vector.extract_strided_slice %37 {offsets = [0, 0], sizes = [8, 16], strides = [1, 1]} : vector<16x64xf32> to vector<8x16xf32>
    %45 = vector.extract_strided_slice %42 {offsets = [0, 0], sizes = [8, 16], strides = [1, 1]} : vector<16x64xf32> to vector<8x16xf32>
    %46 = vector.extract_strided_slice %43 {offsets = [0, 0], sizes = [8, 16], strides = [1, 1]} : vector<16x64xf32> to vector<8x16xf32>
    %cst_25 = arith.constant dense<0.000000e+00> : vector<8x8xf32>
    %47 = tpu.matmul %44, %45, %cst_25 {dimension_numbers = #tpu.dot_dimension_numbers<[1], [1], [0], [0], [0, 0, 1, 0], [], []>} : vector<8x16xf32>, vector<8x16xf32>, vector<8x8xf32> -> vector<8x8xf32>
    %cst_26 = arith.constant 2.500000e-01 : f32
    %48 = vector.broadcast %cst_26 : f32 to vector<8x8xf32>
    %49 = arith.mulf %47, %48 : vector<8x8xf32>
    %50 = vector.extract_strided_slice %12 {offsets = [0, 0], sizes = [1, 8], strides = [1, 1]} : vector<2x8xf32> to vector<1x8xf32>
    %51 = vector.broadcast %50 : vector<1x8xf32> to vector<8x8xf32>
    %52 = arith.addf %49, %51 : vector<8x8xf32>
    %cst_27 = arith.constant dense<0xFF800000> : vector<8xf32>
    %53 = vector.multi_reduction <maximumf>, %52, %cst_27 [1] : vector<8x8xf32> to vector<8xf32>
    %54 = vector.shape_cast %53 : vector<8xf32> to vector<8x1xf32>
    %55 = vector.broadcast %54 : vector<8x1xf32> to vector<8x8xf32>
    %56 = arith.subf %52, %55 : vector<8x8xf32>
    %57 = math.exp %56 : vector<8x8xf32>
    %cst_28 = arith.constant dense<0.000000e+00> : vector<8xf32>
    %58 = vector.multi_reduction <add>, %57, %cst_28 [1] : vector<8x8xf32> to vector<8xf32>
    %59 = vector.shape_cast %58 : vector<8xf32> to vector<8x1xf32>
    %60 = tpu.reciprocal %59 {approx = true} : vector<8x1xf32> -> vector<8x1xf32>
    %61 = vector.broadcast %60 : vector<8x1xf32> to vector<8x8xf32>
    %62 = arith.mulf %57, %61 : vector<8x8xf32>
    %cst_29 = arith.constant dense<0.000000e+00> : vector<8x16xf32>
    %63 = tpu.matmul %62, %46, %cst_29 {dimension_numbers = #tpu.dot_dimension_numbers<[1], [0], [0], [1], [0, 0, 1, 1], [], []>} : vector<8x8xf32>, vector<8x16xf32>, vector<8x16xf32> -> vector<8x16xf32>
    %64 = vector.extract_strided_slice %37 {offsets = [8, 0], sizes = [8, 16], strides = [1, 1]} : vector<16x64xf32> to vector<8x16xf32>
    %65 = vector.extract_strided_slice %42 {offsets = [8, 0], sizes = [8, 16], strides = [1, 1]} : vector<16x64xf32> to vector<8x16xf32>
    %66 = vector.extract_strided_slice %43 {offsets = [8, 0], sizes = [8, 16], strides = [1, 1]} : vector<16x64xf32> to vector<8x16xf32>
    %cst_30 = arith.constant dense<0.000000e+00> : vector<8x8xf32>
    %67 = tpu.matmul %64, %65, %cst_30 {dimension_numbers = #tpu.dot_dimension_numbers<[1], [1], [0], [0], [0, 0, 1, 0], [], []>} : vector<8x16xf32>, vector<8x16xf32>, vector<8x8xf32> -> vector<8x8xf32>
    %cst_31 = arith.constant 2.500000e-01 : f32
    %68 = vector.broadcast %cst_31 : f32 to vector<8x8xf32>
    %69 = arith.mulf %67, %68 : vector<8x8xf32>
    %70 = vector.extract_strided_slice %12 {offsets = [1, 0], sizes = [1, 8], strides = [1, 1]} : vector<2x8xf32> to vector<1x8xf32>
    %71 = vector.broadcast %70 : vector<1x8xf32> to vector<8x8xf32>
    %72 = arith.addf %69, %71 : vector<8x8xf32>
    %cst_32 = arith.constant dense<0xFF800000> : vector<8xf32>
    %73 = vector.multi_reduction <maximumf>, %72, %cst_32 [1] : vector<8x8xf32> to vector<8xf32>
    %74 = vector.shape_cast %73 : vector<8xf32> to vector<8x1xf32>
    %75 = vector.broadcast %74 : vector<8x1xf32> to vector<8x8xf32>
    %76 = arith.subf %72, %75 : vector<8x8xf32>
    %77 = math.exp %76 : vector<8x8xf32>
    %cst_33 = arith.constant dense<0.000000e+00> : vector<8xf32>
    %78 = vector.multi_reduction <add>, %77, %cst_33 [1] : vector<8x8xf32> to vector<8xf32>
    %79 = vector.shape_cast %78 : vector<8xf32> to vector<8x1xf32>
    %80 = tpu.reciprocal %79 {approx = true} : vector<8x1xf32> -> vector<8x1xf32>
    %81 = vector.broadcast %80 : vector<8x1xf32> to vector<8x8xf32>
    %82 = arith.mulf %77, %81 : vector<8x8xf32>
    %cst_34 = arith.constant dense<0.000000e+00> : vector<8x16xf32>
    %83 = tpu.matmul %82, %66, %cst_34 {dimension_numbers = #tpu.dot_dimension_numbers<[1], [0], [0], [1], [0, 0, 1, 1], [], []>} : vector<8x8xf32>, vector<8x16xf32>, vector<8x16xf32> -> vector<8x16xf32>
    %84 = tpu.concatenate %63, %83 in 0 : vector<8x16xf32>, vector<8x16xf32> -> vector<16x16xf32>
    %85 = vector.extract_strided_slice %37 {offsets = [0, 16], sizes = [8, 16], strides = [1, 1]} : vector<16x64xf32> to vector<8x16xf32>
    %86 = vector.extract_strided_slice %42 {offsets = [0, 16], sizes = [8, 16], strides = [1, 1]} : vector<16x64xf32> to vector<8x16xf32>
    %87 = vector.extract_strided_slice %43 {offsets = [0, 16], sizes = [8, 16], strides = [1, 1]} : vector<16x64xf32> to vector<8x16xf32>
    %cst_35 = arith.constant dense<0.000000e+00> : vector<8x8xf32>
    %88 = tpu.matmul %85, %86, %cst_35 {dimension_numbers = #tpu.dot_dimension_numbers<[1], [1], [0], [0], [0, 0, 1, 0], [], []>} : vector<8x16xf32>, vector<8x16xf32>, vector<8x8xf32> -> vector<8x8xf32>
    %cst_36 = arith.constant 2.500000e-01 : f32
    %89 = vector.broadcast %cst_36 : f32 to vector<8x8xf32>
    %90 = arith.mulf %88, %89 : vector<8x8xf32>
    %91 = vector.extract_strided_slice %12 {offsets = [0, 0], sizes = [1, 8], strides = [1, 1]} : vector<2x8xf32> to vector<1x8xf32>
    %92 = vector.broadcast %91 : vector<1x8xf32> to vector<8x8xf32>
    %93 = arith.addf %90, %92 : vector<8x8xf32>
    %cst_37 = arith.constant dense<0xFF800000> : vector<8xf32>
    %94 = vector.multi_reduction <maximumf>, %93, %cst_37 [1] : vector<8x8xf32> to vector<8xf32>
    %95 = vector.shape_cast %94 : vector<8xf32> to vector<8x1xf32>
    %96 = vector.broadcast %95 : vector<8x1xf32> to vector<8x8xf32>
    %97 = arith.subf %93, %96 : vector<8x8xf32>
    %98 = math.exp %97 : vector<8x8xf32>
    %cst_38 = arith.constant dense<0.000000e+00> : vector<8xf32>
    %99 = vector.multi_reduction <add>, %98, %cst_38 [1] : vector<8x8xf32> to vector<8xf32>
    %100 = vector.shape_cast %99 : vector<8xf32> to vector<8x1xf32>
    %101 = tpu.reciprocal %100 {approx = true} : vector<8x1xf32> -> vector<8x1xf32>
    %102 = vector.broadcast %101 : vector<8x1xf32> to vector<8x8xf32>
    %103 = arith.mulf %98, %102 : vector<8x8xf32>
    %cst_39 = arith.constant dense<0.000000e+00> : vector<8x16xf32>
    %104 = tpu.matmul %103, %87, %cst_39 {dimension_numbers = #tpu.dot_dimension_numbers<[1], [0], [0], [1], [0, 0, 1, 1], [], []>} : vector<8x8xf32>, vector<8x16xf32>, vector<8x16xf32> -> vector<8x16xf32>
    %105 = vector.extract_strided_slice %37 {offsets = [8, 16], sizes = [8, 16], strides = [1, 1]} : vector<16x64xf32> to vector<8x16xf32>
    %106 = vector.extract_strided_slice %42 {offsets = [8, 16], sizes = [8, 16], strides = [1, 1]} : vector<16x64xf32> to vector<8x16xf32>
    %107 = vector.extract_strided_slice %43 {offsets = [8, 16], sizes = [8, 16], strides = [1, 1]} : vector<16x64xf32> to vector<8x16xf32>
    %cst_40 = arith.constant dense<0.000000e+00> : vector<8x8xf32>
    %108 = tpu.matmul %105, %106, %cst_40 {dimension_numbers = #tpu.dot_dimension_numbers<[1], [1], [0], [0], [0, 0, 1, 0], [], []>} : vector<8x16xf32>, vector<8x16xf32>, vector<8x8xf32> -> vector<8x8xf32>
    %cst_41 = arith.constant 2.500000e-01 : f32
    %109 = vector.broadcast %cst_41 : f32 to vector<8x8xf32>
    %110 = arith.mulf %108, %109 : vector<8x8xf32>
    %111 = vector.extract_strided_slice %12 {offsets = [1, 0], sizes = [1, 8], strides = [1, 1]} : vector<2x8xf32> to vector<1x8xf32>
    %112 = vector.broadcast %111 : vector<1x8xf32> to vector<8x8xf32>
    %113 = arith.addf %110, %112 : vector<8x8xf32>
    %cst_42 = arith.constant dense<0xFF800000> : vector<8xf32>
    %114 = vector.multi_reduction <maximumf>, %113, %cst_42 [1] : vector<8x8xf32> to vector<8xf32>
    %115 = vector.shape_cast %114 : vector<8xf32> to vector<8x1xf32>
    %116 = vector.broadcast %115 : vector<8x1xf32> to vector<8x8xf32>
    %117 = arith.subf %113, %116 : vector<8x8xf32>
    %118 = math.exp %117 : vector<8x8xf32>
    %cst_43 = arith.constant dense<0.000000e+00> : vector<8xf32>
    %119 = vector.multi_reduction <add>, %118, %cst_43 [1] : vector<8x8xf32> to vector<8xf32>
    %120 = vector.shape_cast %119 : vector<8xf32> to vector<8x1xf32>
    %121 = tpu.reciprocal %120 {approx = true} : vector<8x1xf32> -> vector<8x1xf32>
    %122 = vector.broadcast %121 : vector<8x1xf32> to vector<8x8xf32>
    %123 = arith.mulf %118, %122 : vector<8x8xf32>
    %cst_44 = arith.constant dense<0.000000e+00> : vector<8x16xf32>
    %124 = tpu.matmul %123, %107, %cst_44 {dimension_numbers = #tpu.dot_dimension_numbers<[1], [0], [0], [1], [0, 0, 1, 1], [], []>} : vector<8x8xf32>, vector<8x16xf32>, vector<8x16xf32> -> vector<8x16xf32>
    %125 = tpu.concatenate %104, %124 in 0 : vector<8x16xf32>, vector<8x16xf32> -> vector<16x16xf32>
    %126 = vector.extract_strided_slice %37 {offsets = [0, 32], sizes = [8, 16], strides = [1, 1]} : vector<16x64xf32> to vector<8x16xf32>
    %127 = vector.extract_strided_slice %42 {offsets = [0, 32], sizes = [8, 16], strides = [1, 1]} : vector<16x64xf32> to vector<8x16xf32>
    %128 = vector.extract_strided_slice %43 {offsets = [0, 32], sizes = [8, 16], strides = [1, 1]} : vector<16x64xf32> to vector<8x16xf32>
    %cst_45 = arith.constant dense<0.000000e+00> : vector<8x8xf32>
    %129 = tpu.matmul %126, %127, %cst_45 {dimension_numbers = #tpu.dot_dimension_numbers<[1], [1], [0], [0], [0, 0, 1, 0], [], []>} : vector<8x16xf32>, vector<8x16xf32>, vector<8x8xf32> -> vector<8x8xf32>
    %cst_46 = arith.constant 2.500000e-01 : f32
    %130 = vector.broadcast %cst_46 : f32 to vector<8x8xf32>
    %131 = arith.mulf %129, %130 : vector<8x8xf32>
    %132 = vector.extract_strided_slice %12 {offsets = [0, 0], sizes = [1, 8], strides = [1, 1]} : vector<2x8xf32> to vector<1x8xf32>
    %133 = vector.broadcast %132 : vector<1x8xf32> to vector<8x8xf32>
    %134 = arith.addf %131, %133 : vector<8x8xf32>
    %cst_47 = arith.constant dense<0xFF800000> : vector<8xf32>
    %135 = vector.multi_reduction <maximumf>, %134, %cst_47 [1] : vector<8x8xf32> to vector<8xf32>
    %136 = vector.shape_cast %135 : vector<8xf32> to vector<8x1xf32>
    %137 = vector.broadcast %136 : vector<8x1xf32> to vector<8x8xf32>
    %138 = arith.subf %134, %137 : vector<8x8xf32>
    %139 = math.exp %138 : vector<8x8xf32>
    %cst_48 = arith.constant dense<0.000000e+00> : vector<8xf32>
    %140 = vector.multi_reduction <add>, %139, %cst_48 [1] : vector<8x8xf32> to vector<8xf32>
    %141 = vector.shape_cast %140 : vector<8xf32> to vector<8x1xf32>
    %142 = tpu.reciprocal %141 {approx = true} : vector<8x1xf32> -> vector<8x1xf32>
    %143 = vector.broadcast %142 : vector<8x1xf32> to vector<8x8xf32>
    %144 = arith.mulf %139, %143 : vector<8x8xf32>
    %cst_49 = arith.constant dense<0.000000e+00> : vector<8x16xf32>
    %145 = tpu.matmul %144, %128, %cst_49 {dimension_numbers = #tpu.dot_dimension_numbers<[1], [0], [0], [1], [0, 0, 1, 1], [], []>} : vector<8x8xf32>, vector<8x16xf32>, vector<8x16xf32> -> vector<8x16xf32>
    %146 = vector.extract_strided_slice %37 {offsets = [8, 32], sizes = [8, 16], strides = [1, 1]} : vector<16x64xf32> to vector<8x16xf32>
    %147 = vector.extract_strided_slice %42 {offsets = [8, 32], sizes = [8, 16], strides = [1, 1]} : vector<16x64xf32> to vector<8x16xf32>
    %148 = vector.extract_strided_slice %43 {offsets = [8, 32], sizes = [8, 16], strides = [1, 1]} : vector<16x64xf32> to vector<8x16xf32>
    %cst_50 = arith.constant dense<0.000000e+00> : vector<8x8xf32>
    %149 = tpu.matmul %146, %147, %cst_50 {dimension_numbers = #tpu.dot_dimension_numbers<[1], [1], [0], [0], [0, 0, 1, 0], [], []>} : vector<8x16xf32>, vector<8x16xf32>, vector<8x8xf32> -> vector<8x8xf32>
    %cst_51 = arith.constant 2.500000e-01 : f32
    %150 = vector.broadcast %cst_51 : f32 to vector<8x8xf32>
    %151 = arith.mulf %149, %150 : vector<8x8xf32>
    %152 = vector.extract_strided_slice %12 {offsets = [1, 0], sizes = [1, 8], strides = [1, 1]} : vector<2x8xf32> to vector<1x8xf32>
    %153 = vector.broadcast %152 : vector<1x8xf32> to vector<8x8xf32>
    %154 = arith.addf %151, %153 : vector<8x8xf32>
    %cst_52 = arith.constant dense<0xFF800000> : vector<8xf32>
    %155 = vector.multi_reduction <maximumf>, %154, %cst_52 [1] : vector<8x8xf32> to vector<8xf32>
    %156 = vector.shape_cast %155 : vector<8xf32> to vector<8x1xf32>
    %157 = vector.broadcast %156 : vector<8x1xf32> to vector<8x8xf32>
    %158 = arith.subf %154, %157 : vector<8x8xf32>
    %159 = math.exp %158 : vector<8x8xf32>
    %cst_53 = arith.constant dense<0.000000e+00> : vector<8xf32>
    %160 = vector.multi_reduction <add>, %159, %cst_53 [1] : vector<8x8xf32> to vector<8xf32>
    %161 = vector.shape_cast %160 : vector<8xf32> to vector<8x1xf32>
    %162 = tpu.reciprocal %161 {approx = true} : vector<8x1xf32> -> vector<8x1xf32>
    %163 = vector.broadcast %162 : vector<8x1xf32> to vector<8x8xf32>
    %164 = arith.mulf %159, %163 : vector<8x8xf32>
    %cst_54 = arith.constant dense<0.000000e+00> : vector<8x16xf32>
    %165 = tpu.matmul %164, %148, %cst_54 {dimension_numbers = #tpu.dot_dimension_numbers<[1], [0], [0], [1], [0, 0, 1, 1], [], []>} : vector<8x8xf32>, vector<8x16xf32>, vector<8x16xf32> -> vector<8x16xf32>
    %166 = tpu.concatenate %145, %165 in 0 : vector<8x16xf32>, vector<8x16xf32> -> vector<16x16xf32>
    %167 = vector.extract_strided_slice %37 {offsets = [0, 48], sizes = [8, 16], strides = [1, 1]} : vector<16x64xf32> to vector<8x16xf32>
    %168 = vector.extract_strided_slice %42 {offsets = [0, 48], sizes = [8, 16], strides = [1, 1]} : vector<16x64xf32> to vector<8x16xf32>
    %169 = vector.extract_strided_slice %43 {offsets = [0, 48], sizes = [8, 16], strides = [1, 1]} : vector<16x64xf32> to vector<8x16xf32>
    %cst_55 = arith.constant dense<0.000000e+00> : vector<8x8xf32>
    %170 = tpu.matmul %167, %168, %cst_55 {dimension_numbers = #tpu.dot_dimension_numbers<[1], [1], [0], [0], [0, 0, 1, 0], [], []>} : vector<8x16xf32>, vector<8x16xf32>, vector<8x8xf32> -> vector<8x8xf32>
    %cst_56 = arith.constant 2.500000e-01 : f32
    %171 = vector.broadcast %cst_56 : f32 to vector<8x8xf32>
    %172 = arith.mulf %170, %171 : vector<8x8xf32>
    %173 = vector.extract_strided_slice %12 {offsets = [0, 0], sizes = [1, 8], strides = [1, 1]} : vector<2x8xf32> to vector<1x8xf32>
    %174 = vector.broadcast %173 : vector<1x8xf32> to vector<8x8xf32>
    %175 = arith.addf %172, %174 : vector<8x8xf32>
    %cst_57 = arith.constant dense<0xFF800000> : vector<8xf32>
    %176 = vector.multi_reduction <maximumf>, %175, %cst_57 [1] : vector<8x8xf32> to vector<8xf32>
    %177 = vector.shape_cast %176 : vector<8xf32> to vector<8x1xf32>
    %178 = vector.broadcast %177 : vector<8x1xf32> to vector<8x8xf32>
    %179 = arith.subf %175, %178 : vector<8x8xf32>
    %180 = math.exp %179 : vector<8x8xf32>
    %cst_58 = arith.constant dense<0.000000e+00> : vector<8xf32>
    %181 = vector.multi_reduction <add>, %180, %cst_58 [1] : vector<8x8xf32> to vector<8xf32>
    %182 = vector.shape_cast %181 : vector<8xf32> to vector<8x1xf32>
    %183 = tpu.reciprocal %182 {approx = true} : vector<8x1xf32> -> vector<8x1xf32>
    %184 = vector.broadcast %183 : vector<8x1xf32> to vector<8x8xf32>
    %185 = arith.mulf %180, %184 : vector<8x8xf32>
    %cst_59 = arith.constant dense<0.000000e+00> : vector<8x16xf32>
    %186 = tpu.matmul %185, %169, %cst_59 {dimension_numbers = #tpu.dot_dimension_numbers<[1], [0], [0], [1], [0, 0, 1, 1], [], []>} : vector<8x8xf32>, vector<8x16xf32>, vector<8x16xf32> -> vector<8x16xf32>
    %187 = vector.extract_strided_slice %37 {offsets = [8, 48], sizes = [8, 16], strides = [1, 1]} : vector<16x64xf32> to vector<8x16xf32>
    %188 = vector.extract_strided_slice %42 {offsets = [8, 48], sizes = [8, 16], strides = [1, 1]} : vector<16x64xf32> to vector<8x16xf32>
    %189 = vector.extract_strided_slice %43 {offsets = [8, 48], sizes = [8, 16], strides = [1, 1]} : vector<16x64xf32> to vector<8x16xf32>
    %cst_60 = arith.constant dense<0.000000e+00> : vector<8x8xf32>
    %190 = tpu.matmul %187, %188, %cst_60 {dimension_numbers = #tpu.dot_dimension_numbers<[1], [1], [0], [0], [0, 0, 1, 0], [], []>} : vector<8x16xf32>, vector<8x16xf32>, vector<8x8xf32> -> vector<8x8xf32>
    %cst_61 = arith.constant 2.500000e-01 : f32
    %191 = vector.broadcast %cst_61 : f32 to vector<8x8xf32>
    %192 = arith.mulf %190, %191 : vector<8x8xf32>
    %193 = vector.extract_strided_slice %12 {offsets = [1, 0], sizes = [1, 8], strides = [1, 1]} : vector<2x8xf32> to vector<1x8xf32>
    %194 = vector.broadcast %193 : vector<1x8xf32> to vector<8x8xf32>
    %195 = arith.addf %192, %194 : vector<8x8xf32>
    %cst_62 = arith.constant dense<0xFF800000> : vector<8xf32>
    %196 = vector.multi_reduction <maximumf>, %195, %cst_62 [1] : vector<8x8xf32> to vector<8xf32>
    %197 = vector.shape_cast %196 : vector<8xf32> to vector<8x1xf32>
    %198 = vector.broadcast %197 : vector<8x1xf32> to vector<8x8xf32>
    %199 = arith.subf %195, %198 : vector<8x8xf32>
    %200 = math.exp %199 : vector<8x8xf32>
    %cst_63 = arith.constant dense<0.000000e+00> : vector<8xf32>
    %201 = vector.multi_reduction <add>, %200, %cst_63 [1] : vector<8x8xf32> to vector<8xf32>
    %202 = vector.shape_cast %201 : vector<8xf32> to vector<8x1xf32>
    %203 = tpu.reciprocal %202 {approx = true} : vector<8x1xf32> -> vector<8x1xf32>
    %204 = vector.broadcast %203 : vector<8x1xf32> to vector<8x8xf32>
    %205 = arith.mulf %200, %204 : vector<8x8xf32>
    %cst_64 = arith.constant dense<0.000000e+00> : vector<8x16xf32>
    %206 = tpu.matmul %205, %189, %cst_64 {dimension_numbers = #tpu.dot_dimension_numbers<[1], [0], [0], [1], [0, 0, 1, 1], [], []>} : vector<8x8xf32>, vector<8x16xf32>, vector<8x16xf32> -> vector<8x16xf32>
    %207 = tpu.concatenate %186, %206 in 0 : vector<8x16xf32>, vector<8x16xf32> -> vector<16x16xf32>
    %208 = tpu.concatenate %84, %125, %166, %207 in 1 : vector<16x16xf32>, vector<16x16xf32>, vector<16x16xf32>, vector<16x16xf32> -> vector<16x64xf32>
    %c0_65 = arith.constant 0 : index
    %c0_66 = arith.constant 0 : index
    %c0_67 = arith.constant 0 : index
    %209 = vector.load %arg10[%c0_65, %c0_66, %c0_67] : memref<2x64x64xf32, #tpu.memory_space<vmem>>, vector<1x64x64xf32>
    %210 = vector.shape_cast %209 : vector<1x64x64xf32> to vector<64x64xf32>
    %cst_68 = arith.constant dense<0.000000e+00> : vector<16x64xf32>
    %211 = tpu.matmul %208, %210, %cst_68 {dimension_numbers = #tpu.dot_dimension_numbers<[1], [0], [0], [1], [0, 0, 1, 1], [], []>} : vector<16x64xf32>, vector<64x64xf32>, vector<16x64xf32> -> vector<16x64xf32>
    %212 = arith.addf %7, %211 : vector<16x64xf32>
    %c0_69 = arith.constant 0 : index
    %c0_70 = arith.constant 0 : index
    %c0_71 = arith.constant 0 : index
    %213 = vector.load %arg8[%c0_69, %c0_70, %c0_71] : memref<2x1x64xf32, #tpu.memory_space<vmem>>, vector<1x1x64xf32>
    %214 = vector.shape_cast %213 : vector<1x1x64xf32> to vector<1x64xf32>
    %215 = arith.mulf %212, %212 : vector<16x64xf32>
    %cst_72 = arith.constant dense<0.000000e+00> : vector<16xf32>
    %216 = vector.multi_reduction <add>, %215, %cst_72 [1] : vector<16x64xf32> to vector<16xf32>
    %217 = vector.shape_cast %216 : vector<16xf32> to vector<16x1xf32>
    %cst_73 = arith.constant 6.400000e+01 : f32
    %218 = vector.broadcast %cst_73 : f32 to vector<16x1xf32>
    %219 = arith.divf %217, %218 : vector<16x1xf32>
    %cst_74 = arith.constant 9.99999997E-7 : f32
    %220 = vector.broadcast %cst_74 : f32 to vector<16x1xf32>
    %221 = arith.addf %219, %220 : vector<16x1xf32>
    %222 = math.rsqrt %221 : vector<16x1xf32>
    %223 = vector.broadcast %222 : vector<16x1xf32> to vector<16x64xf32>
    %224 = arith.mulf %212, %223 : vector<16x64xf32>
    %225 = vector.broadcast %214 : vector<1x64xf32> to vector<16x64xf32>
    %226 = arith.mulf %224, %225 : vector<16x64xf32>
    %c0_75 = arith.constant 0 : index
    %c0_76 = arith.constant 0 : index
    %c0_77 = arith.constant 0 : index
    %227 = vector.load %arg11[%c0_75, %c0_76, %c0_77] : memref<2x64x256xf32, #tpu.memory_space<vmem>>, vector<1x64x256xf32>
    %228 = vector.shape_cast %227 : vector<1x64x256xf32> to vector<64x256xf32>
    %cst_78 = arith.constant dense<0.000000e+00> : vector<16x256xf32>
    %229 = tpu.matmul %226, %228, %cst_78 {dimension_numbers = #tpu.dot_dimension_numbers<[1], [0], [0], [1], [0, 0, 1, 1], [], []>} : vector<16x64xf32>, vector<64x256xf32>, vector<16x256xf32> -> vector<16x256xf32>
    %230 = arith.negf %229 : vector<16x256xf32>
    %231 = math.exp %230 : vector<16x256xf32>
    %cst_79 = arith.constant 1.000000e+00 : f32
    %232 = vector.broadcast %cst_79 : f32 to vector<16x256xf32>
    %233 = arith.addf %232, %231 : vector<16x256xf32>
    %234 = arith.divf %232, %233 : vector<16x256xf32>
    %235 = arith.mulf %229, %234 : vector<16x256xf32>
    %c0_80 = arith.constant 0 : index
    %c0_81 = arith.constant 0 : index
    %c0_82 = arith.constant 0 : index
    %236 = vector.load %arg12[%c0_80, %c0_81, %c0_82] : memref<2x256x64xf32, #tpu.memory_space<vmem>>, vector<1x256x64xf32>
    %237 = vector.shape_cast %236 : vector<1x256x64xf32> to vector<256x64xf32>
    %cst_83 = arith.constant dense<0.000000e+00> : vector<16x64xf32>
    %238 = tpu.matmul %235, %237, %cst_83 {dimension_numbers = #tpu.dot_dimension_numbers<[1], [0], [0], [1], [0, 0, 1, 1], [], []>} : vector<16x256xf32>, vector<256x64xf32>, vector<16x64xf32> -> vector<16x64xf32>
    %239 = arith.addf %212, %238 : vector<16x64xf32>
    %c1 = arith.constant 1 : index
    %c0_84 = arith.constant 0 : index
    %c0_85 = arith.constant 0 : index
    %240 = vector.load %arg7[%c1, %c0_84, %c0_85] : memref<2x1x64xf32, #tpu.memory_space<vmem>>, vector<1x1x64xf32>
    %241 = vector.shape_cast %240 : vector<1x1x64xf32> to vector<1x64xf32>
    %242 = arith.mulf %239, %239 : vector<16x64xf32>
    %cst_86 = arith.constant dense<0.000000e+00> : vector<16xf32>
    %243 = vector.multi_reduction <add>, %242, %cst_86 [1] : vector<16x64xf32> to vector<16xf32>
    %244 = vector.shape_cast %243 : vector<16xf32> to vector<16x1xf32>
    %cst_87 = arith.constant 6.400000e+01 : f32
    %245 = vector.broadcast %cst_87 : f32 to vector<16x1xf32>
    %246 = arith.divf %244, %245 : vector<16x1xf32>
    %cst_88 = arith.constant 9.99999997E-7 : f32
    %247 = vector.broadcast %cst_88 : f32 to vector<16x1xf32>
    %248 = arith.addf %246, %247 : vector<16x1xf32>
    %249 = math.rsqrt %248 : vector<16x1xf32>
    %250 = vector.broadcast %249 : vector<16x1xf32> to vector<16x64xf32>
    %251 = arith.mulf %239, %250 : vector<16x64xf32>
    %252 = vector.broadcast %241 : vector<1x64xf32> to vector<16x64xf32>
    %253 = arith.mulf %251, %252 : vector<16x64xf32>
    %c1_89 = arith.constant 1 : index
    %c0_90 = arith.constant 0 : index
    %c0_91 = arith.constant 0 : index
    %254 = vector.load %arg9[%c1_89, %c0_90, %c0_91] : memref<2x64x192xf32, #tpu.memory_space<vmem>>, vector<1x64x192xf32>
    %255 = vector.shape_cast %254 : vector<1x64x192xf32> to vector<64x192xf32>
    %cst_92 = arith.constant dense<0.000000e+00> : vector<16x192xf32>
    %256 = tpu.matmul %253, %255, %cst_92 {dimension_numbers = #tpu.dot_dimension_numbers<[1], [0], [0], [1], [0, 0, 1, 1], [], []>} : vector<16x64xf32>, vector<64x192xf32>, vector<16x192xf32> -> vector<16x192xf32>
    %257 = vector.extract_strided_slice %256 {offsets = [0, 0], sizes = [16, 64], strides = [1, 1]} : vector<16x192xf32> to vector<16x64xf32>
    %258 = arith.mulf %257, %13 : vector<16x64xf32>
    %cst_93 = arith.constant dense<0.000000e+00> : vector<16x64xf32>
    %259 = tpu.matmul %257, %15, %cst_93 {dimension_numbers = #tpu.dot_dimension_numbers<[1], [0], [0], [1], [0, 0, 1, 1], [], []>} : vector<16x64xf32>, vector<64x64xf32>, vector<16x64xf32> -> vector<16x64xf32>
    %260 = arith.mulf %259, %14 : vector<16x64xf32>
    %261 = arith.addf %258, %260 : vector<16x64xf32>
    %262 = vector.extract_strided_slice %256 {offsets = [0, 64], sizes = [16, 64], strides = [1, 1]} : vector<16x192xf32> to vector<16x64xf32>
    %263 = arith.mulf %262, %13 : vector<16x64xf32>
    %cst_94 = arith.constant dense<0.000000e+00> : vector<16x64xf32>
    %264 = tpu.matmul %262, %15, %cst_94 {dimension_numbers = #tpu.dot_dimension_numbers<[1], [0], [0], [1], [0, 0, 1, 1], [], []>} : vector<16x64xf32>, vector<64x64xf32>, vector<16x64xf32> -> vector<16x64xf32>
    %265 = arith.mulf %264, %14 : vector<16x64xf32>
    %266 = arith.addf %263, %265 : vector<16x64xf32>
    %267 = vector.extract_strided_slice %256 {offsets = [0, 128], sizes = [16, 64], strides = [1, 1]} : vector<16x192xf32> to vector<16x64xf32>
    %268 = vector.extract_strided_slice %261 {offsets = [0, 0], sizes = [8, 16], strides = [1, 1]} : vector<16x64xf32> to vector<8x16xf32>
    %269 = vector.extract_strided_slice %266 {offsets = [0, 0], sizes = [8, 16], strides = [1, 1]} : vector<16x64xf32> to vector<8x16xf32>
    %270 = vector.extract_strided_slice %267 {offsets = [0, 0], sizes = [8, 16], strides = [1, 1]} : vector<16x64xf32> to vector<8x16xf32>
    %cst_95 = arith.constant dense<0.000000e+00> : vector<8x8xf32>
    %271 = tpu.matmul %268, %269, %cst_95 {dimension_numbers = #tpu.dot_dimension_numbers<[1], [1], [0], [0], [0, 0, 1, 0], [], []>} : vector<8x16xf32>, vector<8x16xf32>, vector<8x8xf32> -> vector<8x8xf32>
    %cst_96 = arith.constant 2.500000e-01 : f32
    %272 = vector.broadcast %cst_96 : f32 to vector<8x8xf32>
    %273 = arith.mulf %271, %272 : vector<8x8xf32>
    %274 = vector.extract_strided_slice %12 {offsets = [0, 0], sizes = [1, 8], strides = [1, 1]} : vector<2x8xf32> to vector<1x8xf32>
    %275 = vector.broadcast %274 : vector<1x8xf32> to vector<8x8xf32>
    %276 = arith.addf %273, %275 : vector<8x8xf32>
    %cst_97 = arith.constant dense<0xFF800000> : vector<8xf32>
    %277 = vector.multi_reduction <maximumf>, %276, %cst_97 [1] : vector<8x8xf32> to vector<8xf32>
    %278 = vector.shape_cast %277 : vector<8xf32> to vector<8x1xf32>
    %279 = vector.broadcast %278 : vector<8x1xf32> to vector<8x8xf32>
    %280 = arith.subf %276, %279 : vector<8x8xf32>
    %281 = math.exp %280 : vector<8x8xf32>
    %cst_98 = arith.constant dense<0.000000e+00> : vector<8xf32>
    %282 = vector.multi_reduction <add>, %281, %cst_98 [1] : vector<8x8xf32> to vector<8xf32>
    %283 = vector.shape_cast %282 : vector<8xf32> to vector<8x1xf32>
    %284 = tpu.reciprocal %283 {approx = true} : vector<8x1xf32> -> vector<8x1xf32>
    %285 = vector.broadcast %284 : vector<8x1xf32> to vector<8x8xf32>
    %286 = arith.mulf %281, %285 : vector<8x8xf32>
    %cst_99 = arith.constant dense<0.000000e+00> : vector<8x16xf32>
    %287 = tpu.matmul %286, %270, %cst_99 {dimension_numbers = #tpu.dot_dimension_numbers<[1], [0], [0], [1], [0, 0, 1, 1], [], []>} : vector<8x8xf32>, vector<8x16xf32>, vector<8x16xf32> -> vector<8x16xf32>
    %288 = vector.extract_strided_slice %261 {offsets = [8, 0], sizes = [8, 16], strides = [1, 1]} : vector<16x64xf32> to vector<8x16xf32>
    %289 = vector.extract_strided_slice %266 {offsets = [8, 0], sizes = [8, 16], strides = [1, 1]} : vector<16x64xf32> to vector<8x16xf32>
    %290 = vector.extract_strided_slice %267 {offsets = [8, 0], sizes = [8, 16], strides = [1, 1]} : vector<16x64xf32> to vector<8x16xf32>
    %cst_100 = arith.constant dense<0.000000e+00> : vector<8x8xf32>
    %291 = tpu.matmul %288, %289, %cst_100 {dimension_numbers = #tpu.dot_dimension_numbers<[1], [1], [0], [0], [0, 0, 1, 0], [], []>} : vector<8x16xf32>, vector<8x16xf32>, vector<8x8xf32> -> vector<8x8xf32>
    %cst_101 = arith.constant 2.500000e-01 : f32
    %292 = vector.broadcast %cst_101 : f32 to vector<8x8xf32>
    %293 = arith.mulf %291, %292 : vector<8x8xf32>
    %294 = vector.extract_strided_slice %12 {offsets = [1, 0], sizes = [1, 8], strides = [1, 1]} : vector<2x8xf32> to vector<1x8xf32>
    %295 = vector.broadcast %294 : vector<1x8xf32> to vector<8x8xf32>
    %296 = arith.addf %293, %295 : vector<8x8xf32>
    %cst_102 = arith.constant dense<0xFF800000> : vector<8xf32>
    %297 = vector.multi_reduction <maximumf>, %296, %cst_102 [1] : vector<8x8xf32> to vector<8xf32>
    %298 = vector.shape_cast %297 : vector<8xf32> to vector<8x1xf32>
    %299 = vector.broadcast %298 : vector<8x1xf32> to vector<8x8xf32>
    %300 = arith.subf %296, %299 : vector<8x8xf32>
    %301 = math.exp %300 : vector<8x8xf32>
    %cst_103 = arith.constant dense<0.000000e+00> : vector<8xf32>
    %302 = vector.multi_reduction <add>, %301, %cst_103 [1] : vector<8x8xf32> to vector<8xf32>
    %303 = vector.shape_cast %302 : vector<8xf32> to vector<8x1xf32>
    %304 = tpu.reciprocal %303 {approx = true} : vector<8x1xf32> -> vector<8x1xf32>
    %305 = vector.broadcast %304 : vector<8x1xf32> to vector<8x8xf32>
    %306 = arith.mulf %301, %305 : vector<8x8xf32>
    %cst_104 = arith.constant dense<0.000000e+00> : vector<8x16xf32>
    %307 = tpu.matmul %306, %290, %cst_104 {dimension_numbers = #tpu.dot_dimension_numbers<[1], [0], [0], [1], [0, 0, 1, 1], [], []>} : vector<8x8xf32>, vector<8x16xf32>, vector<8x16xf32> -> vector<8x16xf32>
    %308 = tpu.concatenate %287, %307 in 0 : vector<8x16xf32>, vector<8x16xf32> -> vector<16x16xf32>
    %309 = vector.extract_strided_slice %261 {offsets = [0, 16], sizes = [8, 16], strides = [1, 1]} : vector<16x64xf32> to vector<8x16xf32>
    %310 = vector.extract_strided_slice %266 {offsets = [0, 16], sizes = [8, 16], strides = [1, 1]} : vector<16x64xf32> to vector<8x16xf32>
    %311 = vector.extract_strided_slice %267 {offsets = [0, 16], sizes = [8, 16], strides = [1, 1]} : vector<16x64xf32> to vector<8x16xf32>
    %cst_105 = arith.constant dense<0.000000e+00> : vector<8x8xf32>
    %312 = tpu.matmul %309, %310, %cst_105 {dimension_numbers = #tpu.dot_dimension_numbers<[1], [1], [0], [0], [0, 0, 1, 0], [], []>} : vector<8x16xf32>, vector<8x16xf32>, vector<8x8xf32> -> vector<8x8xf32>
    %cst_106 = arith.constant 2.500000e-01 : f32
    %313 = vector.broadcast %cst_106 : f32 to vector<8x8xf32>
    %314 = arith.mulf %312, %313 : vector<8x8xf32>
    %315 = vector.extract_strided_slice %12 {offsets = [0, 0], sizes = [1, 8], strides = [1, 1]} : vector<2x8xf32> to vector<1x8xf32>
    %316 = vector.broadcast %315 : vector<1x8xf32> to vector<8x8xf32>
    %317 = arith.addf %314, %316 : vector<8x8xf32>
    %cst_107 = arith.constant dense<0xFF800000> : vector<8xf32>
    %318 = vector.multi_reduction <maximumf>, %317, %cst_107 [1] : vector<8x8xf32> to vector<8xf32>
    %319 = vector.shape_cast %318 : vector<8xf32> to vector<8x1xf32>
    %320 = vector.broadcast %319 : vector<8x1xf32> to vector<8x8xf32>
    %321 = arith.subf %317, %320 : vector<8x8xf32>
    %322 = math.exp %321 : vector<8x8xf32>
    %cst_108 = arith.constant dense<0.000000e+00> : vector<8xf32>
    %323 = vector.multi_reduction <add>, %322, %cst_108 [1] : vector<8x8xf32> to vector<8xf32>
    %324 = vector.shape_cast %323 : vector<8xf32> to vector<8x1xf32>
    %325 = tpu.reciprocal %324 {approx = true} : vector<8x1xf32> -> vector<8x1xf32>
    %326 = vector.broadcast %325 : vector<8x1xf32> to vector<8x8xf32>
    %327 = arith.mulf %322, %326 : vector<8x8xf32>
    %cst_109 = arith.constant dense<0.000000e+00> : vector<8x16xf32>
    %328 = tpu.matmul %327, %311, %cst_109 {dimension_numbers = #tpu.dot_dimension_numbers<[1], [0], [0], [1], [0, 0, 1, 1], [], []>} : vector<8x8xf32>, vector<8x16xf32>, vector<8x16xf32> -> vector<8x16xf32>
    %329 = vector.extract_strided_slice %261 {offsets = [8, 16], sizes = [8, 16], strides = [1, 1]} : vector<16x64xf32> to vector<8x16xf32>
    %330 = vector.extract_strided_slice %266 {offsets = [8, 16], sizes = [8, 16], strides = [1, 1]} : vector<16x64xf32> to vector<8x16xf32>
    %331 = vector.extract_strided_slice %267 {offsets = [8, 16], sizes = [8, 16], strides = [1, 1]} : vector<16x64xf32> to vector<8x16xf32>
    %cst_110 = arith.constant dense<0.000000e+00> : vector<8x8xf32>
    %332 = tpu.matmul %329, %330, %cst_110 {dimension_numbers = #tpu.dot_dimension_numbers<[1], [1], [0], [0], [0, 0, 1, 0], [], []>} : vector<8x16xf32>, vector<8x16xf32>, vector<8x8xf32> -> vector<8x8xf32>
    %cst_111 = arith.constant 2.500000e-01 : f32
    %333 = vector.broadcast %cst_111 : f32 to vector<8x8xf32>
    %334 = arith.mulf %332, %333 : vector<8x8xf32>
    %335 = vector.extract_strided_slice %12 {offsets = [1, 0], sizes = [1, 8], strides = [1, 1]} : vector<2x8xf32> to vector<1x8xf32>
    %336 = vector.broadcast %335 : vector<1x8xf32> to vector<8x8xf32>
    %337 = arith.addf %334, %336 : vector<8x8xf32>
    %cst_112 = arith.constant dense<0xFF800000> : vector<8xf32>
    %338 = vector.multi_reduction <maximumf>, %337, %cst_112 [1] : vector<8x8xf32> to vector<8xf32>
    %339 = vector.shape_cast %338 : vector<8xf32> to vector<8x1xf32>
    %340 = vector.broadcast %339 : vector<8x1xf32> to vector<8x8xf32>
    %341 = arith.subf %337, %340 : vector<8x8xf32>
    %342 = math.exp %341 : vector<8x8xf32>
    %cst_113 = arith.constant dense<0.000000e+00> : vector<8xf32>
    %343 = vector.multi_reduction <add>, %342, %cst_113 [1] : vector<8x8xf32> to vector<8xf32>
    %344 = vector.shape_cast %343 : vector<8xf32> to vector<8x1xf32>
    %345 = tpu.reciprocal %344 {approx = true} : vector<8x1xf32> -> vector<8x1xf32>
    %346 = vector.broadcast %345 : vector<8x1xf32> to vector<8x8xf32>
    %347 = arith.mulf %342, %346 : vector<8x8xf32>
    %cst_114 = arith.constant dense<0.000000e+00> : vector<8x16xf32>
    %348 = tpu.matmul %347, %331, %cst_114 {dimension_numbers = #tpu.dot_dimension_numbers<[1], [0], [0], [1], [0, 0, 1, 1], [], []>} : vector<8x8xf32>, vector<8x16xf32>, vector<8x16xf32> -> vector<8x16xf32>
    %349 = tpu.concatenate %328, %348 in 0 : vector<8x16xf32>, vector<8x16xf32> -> vector<16x16xf32>
    %350 = vector.extract_strided_slice %261 {offsets = [0, 32], sizes = [8, 16], strides = [1, 1]} : vector<16x64xf32> to vector<8x16xf32>
    %351 = vector.extract_strided_slice %266 {offsets = [0, 32], sizes = [8, 16], strides = [1, 1]} : vector<16x64xf32> to vector<8x16xf32>
    %352 = vector.extract_strided_slice %267 {offsets = [0, 32], sizes = [8, 16], strides = [1, 1]} : vector<16x64xf32> to vector<8x16xf32>
    %cst_115 = arith.constant dense<0.000000e+00> : vector<8x8xf32>
    %353 = tpu.matmul %350, %351, %cst_115 {dimension_numbers = #tpu.dot_dimension_numbers<[1], [1], [0], [0], [0, 0, 1, 0], [], []>} : vector<8x16xf32>, vector<8x16xf32>, vector<8x8xf32> -> vector<8x8xf32>
    %cst_116 = arith.constant 2.500000e-01 : f32
    %354 = vector.broadcast %cst_116 : f32 to vector<8x8xf32>
    %355 = arith.mulf %353, %354 : vector<8x8xf32>
    %356 = vector.extract_strided_slice %12 {offsets = [0, 0], sizes = [1, 8], strides = [1, 1]} : vector<2x8xf32> to vector<1x8xf32>
    %357 = vector.broadcast %356 : vector<1x8xf32> to vector<8x8xf32>
    %358 = arith.addf %355, %357 : vector<8x8xf32>
    %cst_117 = arith.constant dense<0xFF800000> : vector<8xf32>
    %359 = vector.multi_reduction <maximumf>, %358, %cst_117 [1] : vector<8x8xf32> to vector<8xf32>
    %360 = vector.shape_cast %359 : vector<8xf32> to vector<8x1xf32>
    %361 = vector.broadcast %360 : vector<8x1xf32> to vector<8x8xf32>
    %362 = arith.subf %358, %361 : vector<8x8xf32>
    %363 = math.exp %362 : vector<8x8xf32>
    %cst_118 = arith.constant dense<0.000000e+00> : vector<8xf32>
    %364 = vector.multi_reduction <add>, %363, %cst_118 [1] : vector<8x8xf32> to vector<8xf32>
    %365 = vector.shape_cast %364 : vector<8xf32> to vector<8x1xf32>
    %366 = tpu.reciprocal %365 {approx = true} : vector<8x1xf32> -> vector<8x1xf32>
    %367 = vector.broadcast %366 : vector<8x1xf32> to vector<8x8xf32>
    %368 = arith.mulf %363, %367 : vector<8x8xf32>
    %cst_119 = arith.constant dense<0.000000e+00> : vector<8x16xf32>
    %369 = tpu.matmul %368, %352, %cst_119 {dimension_numbers = #tpu.dot_dimension_numbers<[1], [0], [0], [1], [0, 0, 1, 1], [], []>} : vector<8x8xf32>, vector<8x16xf32>, vector<8x16xf32> -> vector<8x16xf32>
    %370 = vector.extract_strided_slice %261 {offsets = [8, 32], sizes = [8, 16], strides = [1, 1]} : vector<16x64xf32> to vector<8x16xf32>
    %371 = vector.extract_strided_slice %266 {offsets = [8, 32], sizes = [8, 16], strides = [1, 1]} : vector<16x64xf32> to vector<8x16xf32>
    %372 = vector.extract_strided_slice %267 {offsets = [8, 32], sizes = [8, 16], strides = [1, 1]} : vector<16x64xf32> to vector<8x16xf32>
    %cst_120 = arith.constant dense<0.000000e+00> : vector<8x8xf32>
    %373 = tpu.matmul %370, %371, %cst_120 {dimension_numbers = #tpu.dot_dimension_numbers<[1], [1], [0], [0], [0, 0, 1, 0], [], []>} : vector<8x16xf32>, vector<8x16xf32>, vector<8x8xf32> -> vector<8x8xf32>
    %cst_121 = arith.constant 2.500000e-01 : f32
    %374 = vector.broadcast %cst_121 : f32 to vector<8x8xf32>
    %375 = arith.mulf %373, %374 : vector<8x8xf32>
    %376 = vector.extract_strided_slice %12 {offsets = [1, 0], sizes = [1, 8], strides = [1, 1]} : vector<2x8xf32> to vector<1x8xf32>
    %377 = vector.broadcast %376 : vector<1x8xf32> to vector<8x8xf32>
    %378 = arith.addf %375, %377 : vector<8x8xf32>
    %cst_122 = arith.constant dense<0xFF800000> : vector<8xf32>
    %379 = vector.multi_reduction <maximumf>, %378, %cst_122 [1] : vector<8x8xf32> to vector<8xf32>
    %380 = vector.shape_cast %379 : vector<8xf32> to vector<8x1xf32>
    %381 = vector.broadcast %380 : vector<8x1xf32> to vector<8x8xf32>
    %382 = arith.subf %378, %381 : vector<8x8xf32>
    %383 = math.exp %382 : vector<8x8xf32>
    %cst_123 = arith.constant dense<0.000000e+00> : vector<8xf32>
    %384 = vector.multi_reduction <add>, %383, %cst_123 [1] : vector<8x8xf32> to vector<8xf32>
    %385 = vector.shape_cast %384 : vector<8xf32> to vector<8x1xf32>
    %386 = tpu.reciprocal %385 {approx = true} : vector<8x1xf32> -> vector<8x1xf32>
    %387 = vector.broadcast %386 : vector<8x1xf32> to vector<8x8xf32>
    %388 = arith.mulf %383, %387 : vector<8x8xf32>
    %cst_124 = arith.constant dense<0.000000e+00> : vector<8x16xf32>
    %389 = tpu.matmul %388, %372, %cst_124 {dimension_numbers = #tpu.dot_dimension_numbers<[1], [0], [0], [1], [0, 0, 1, 1], [], []>} : vector<8x8xf32>, vector<8x16xf32>, vector<8x16xf32> -> vector<8x16xf32>
    %390 = tpu.concatenate %369, %389 in 0 : vector<8x16xf32>, vector<8x16xf32> -> vector<16x16xf32>
    %391 = vector.extract_strided_slice %261 {offsets = [0, 48], sizes = [8, 16], strides = [1, 1]} : vector<16x64xf32> to vector<8x16xf32>
    %392 = vector.extract_strided_slice %266 {offsets = [0, 48], sizes = [8, 16], strides = [1, 1]} : vector<16x64xf32> to vector<8x16xf32>
    %393 = vector.extract_strided_slice %267 {offsets = [0, 48], sizes = [8, 16], strides = [1, 1]} : vector<16x64xf32> to vector<8x16xf32>
    %cst_125 = arith.constant dense<0.000000e+00> : vector<8x8xf32>
    %394 = tpu.matmul %391, %392, %cst_125 {dimension_numbers = #tpu.dot_dimension_numbers<[1], [1], [0], [0], [0, 0, 1, 0], [], []>} : vector<8x16xf32>, vector<8x16xf32>, vector<8x8xf32> -> vector<8x8xf32>
    %cst_126 = arith.constant 2.500000e-01 : f32
    %395 = vector.broadcast %cst_126 : f32 to vector<8x8xf32>
    %396 = arith.mulf %394, %395 : vector<8x8xf32>
    %397 = vector.extract_strided_slice %12 {offsets = [0, 0], sizes = [1, 8], strides = [1, 1]} : vector<2x8xf32> to vector<1x8xf32>
    %398 = vector.broadcast %397 : vector<1x8xf32> to vector<8x8xf32>
    %399 = arith.addf %396, %398 : vector<8x8xf32>
    %cst_127 = arith.constant dense<0xFF800000> : vector<8xf32>
    %400 = vector.multi_reduction <maximumf>, %399, %cst_127 [1] : vector<8x8xf32> to vector<8xf32>
    %401 = vector.shape_cast %400 : vector<8xf32> to vector<8x1xf32>
    %402 = vector.broadcast %401 : vector<8x1xf32> to vector<8x8xf32>
    %403 = arith.subf %399, %402 : vector<8x8xf32>
    %404 = math.exp %403 : vector<8x8xf32>
    %cst_128 = arith.constant dense<0.000000e+00> : vector<8xf32>
    %405 = vector.multi_reduction <add>, %404, %cst_128 [1] : vector<8x8xf32> to vector<8xf32>
    %406 = vector.shape_cast %405 : vector<8xf32> to vector<8x1xf32>
    %407 = tpu.reciprocal %406 {approx = true} : vector<8x1xf32> -> vector<8x1xf32>
    %408 = vector.broadcast %407 : vector<8x1xf32> to vector<8x8xf32>
    %409 = arith.mulf %404, %408 : vector<8x8xf32>
    %cst_129 = arith.constant dense<0.000000e+00> : vector<8x16xf32>
    %410 = tpu.matmul %409, %393, %cst_129 {dimension_numbers = #tpu.dot_dimension_numbers<[1], [0], [0], [1], [0, 0, 1, 1], [], []>} : vector<8x8xf32>, vector<8x16xf32>, vector<8x16xf32> -> vector<8x16xf32>
    %411 = vector.extract_strided_slice %261 {offsets = [8, 48], sizes = [8, 16], strides = [1, 1]} : vector<16x64xf32> to vector<8x16xf32>
    %412 = vector.extract_strided_slice %266 {offsets = [8, 48], sizes = [8, 16], strides = [1, 1]} : vector<16x64xf32> to vector<8x16xf32>
    %413 = vector.extract_strided_slice %267 {offsets = [8, 48], sizes = [8, 16], strides = [1, 1]} : vector<16x64xf32> to vector<8x16xf32>
    %cst_130 = arith.constant dense<0.000000e+00> : vector<8x8xf32>
    %414 = tpu.matmul %411, %412, %cst_130 {dimension_numbers = #tpu.dot_dimension_numbers<[1], [1], [0], [0], [0, 0, 1, 0], [], []>} : vector<8x16xf32>, vector<8x16xf32>, vector<8x8xf32> -> vector<8x8xf32>
    %cst_131 = arith.constant 2.500000e-01 : f32
    %415 = vector.broadcast %cst_131 : f32 to vector<8x8xf32>
    %416 = arith.mulf %414, %415 : vector<8x8xf32>
    %417 = vector.extract_strided_slice %12 {offsets = [1, 0], sizes = [1, 8], strides = [1, 1]} : vector<2x8xf32> to vector<1x8xf32>
    %418 = vector.broadcast %417 : vector<1x8xf32> to vector<8x8xf32>
    %419 = arith.addf %416, %418 : vector<8x8xf32>
    %cst_132 = arith.constant dense<0xFF800000> : vector<8xf32>
    %420 = vector.multi_reduction <maximumf>, %419, %cst_132 [1] : vector<8x8xf32> to vector<8xf32>
    %421 = vector.shape_cast %420 : vector<8xf32> to vector<8x1xf32>
    %422 = vector.broadcast %421 : vector<8x1xf32> to vector<8x8xf32>
    %423 = arith.subf %419, %422 : vector<8x8xf32>
    %424 = math.exp %423 : vector<8x8xf32>
    %cst_133 = arith.constant dense<0.000000e+00> : vector<8xf32>
    %425 = vector.multi_reduction <add>, %424, %cst_133 [1] : vector<8x8xf32> to vector<8xf32>
    %426 = vector.shape_cast %425 : vector<8xf32> to vector<8x1xf32>
    %427 = tpu.reciprocal %426 {approx = true} : vector<8x1xf32> -> vector<8x1xf32>
    %428 = vector.broadcast %427 : vector<8x1xf32> to vector<8x8xf32>
    %429 = arith.mulf %424, %428 : vector<8x8xf32>
    %cst_134 = arith.constant dense<0.000000e+00> : vector<8x16xf32>
    %430 = tpu.matmul %429, %413, %cst_134 {dimension_numbers = #tpu.dot_dimension_numbers<[1], [0], [0], [1], [0, 0, 1, 1], [], []>} : vector<8x8xf32>, vector<8x16xf32>, vector<8x16xf32> -> vector<8x16xf32>
    %431 = tpu.concatenate %410, %430 in 0 : vector<8x16xf32>, vector<8x16xf32> -> vector<16x16xf32>
    %432 = tpu.concatenate %308, %349, %390, %431 in 1 : vector<16x16xf32>, vector<16x16xf32>, vector<16x16xf32>, vector<16x16xf32> -> vector<16x64xf32>
    %c1_135 = arith.constant 1 : index
    %c0_136 = arith.constant 0 : index
    %c0_137 = arith.constant 0 : index
    %433 = vector.load %arg10[%c1_135, %c0_136, %c0_137] : memref<2x64x64xf32, #tpu.memory_space<vmem>>, vector<1x64x64xf32>
    %434 = vector.shape_cast %433 : vector<1x64x64xf32> to vector<64x64xf32>
    %cst_138 = arith.constant dense<0.000000e+00> : vector<16x64xf32>
    %435 = tpu.matmul %432, %434, %cst_138 {dimension_numbers = #tpu.dot_dimension_numbers<[1], [0], [0], [1], [0, 0, 1, 1], [], []>} : vector<16x64xf32>, vector<64x64xf32>, vector<16x64xf32> -> vector<16x64xf32>
    %436 = arith.addf %239, %435 : vector<16x64xf32>
    %c1_139 = arith.constant 1 : index
    %c0_140 = arith.constant 0 : index
    %c0_141 = arith.constant 0 : index
    %437 = vector.load %arg8[%c1_139, %c0_140, %c0_141] : memref<2x1x64xf32, #tpu.memory_space<vmem>>, vector<1x1x64xf32>
    %438 = vector.shape_cast %437 : vector<1x1x64xf32> to vector<1x64xf32>
    %439 = arith.mulf %436, %436 : vector<16x64xf32>
    %cst_142 = arith.constant dense<0.000000e+00> : vector<16xf32>
    %440 = vector.multi_reduction <add>, %439, %cst_142 [1] : vector<16x64xf32> to vector<16xf32>
    %441 = vector.shape_cast %440 : vector<16xf32> to vector<16x1xf32>
    %cst_143 = arith.constant 6.400000e+01 : f32
    %442 = vector.broadcast %cst_143 : f32 to vector<16x1xf32>
    %443 = arith.divf %441, %442 : vector<16x1xf32>
    %cst_144 = arith.constant 9.99999997E-7 : f32
    %444 = vector.broadcast %cst_144 : f32 to vector<16x1xf32>
    %445 = arith.addf %443, %444 : vector<16x1xf32>
    %446 = math.rsqrt %445 : vector<16x1xf32>
    %447 = vector.broadcast %446 : vector<16x1xf32> to vector<16x64xf32>
    %448 = arith.mulf %436, %447 : vector<16x64xf32>
    %449 = vector.broadcast %438 : vector<1x64xf32> to vector<16x64xf32>
    %450 = arith.mulf %448, %449 : vector<16x64xf32>
    %c1_145 = arith.constant 1 : index
    %c0_146 = arith.constant 0 : index
    %c0_147 = arith.constant 0 : index
    %451 = vector.load %arg11[%c1_145, %c0_146, %c0_147] : memref<2x64x256xf32, #tpu.memory_space<vmem>>, vector<1x64x256xf32>
    %452 = vector.shape_cast %451 : vector<1x64x256xf32> to vector<64x256xf32>
    %cst_148 = arith.constant dense<0.000000e+00> : vector<16x256xf32>
    %453 = tpu.matmul %450, %452, %cst_148 {dimension_numbers = #tpu.dot_dimension_numbers<[1], [0], [0], [1], [0, 0, 1, 1], [], []>} : vector<16x64xf32>, vector<64x256xf32>, vector<16x256xf32> -> vector<16x256xf32>
    %454 = arith.negf %453 : vector<16x256xf32>
    %455 = math.exp %454 : vector<16x256xf32>
    %cst_149 = arith.constant 1.000000e+00 : f32
    %456 = vector.broadcast %cst_149 : f32 to vector<16x256xf32>
    %457 = arith.addf %456, %455 : vector<16x256xf32>
    %458 = arith.divf %456, %457 : vector<16x256xf32>
    %459 = arith.mulf %453, %458 : vector<16x256xf32>
    %c1_150 = arith.constant 1 : index
    %c0_151 = arith.constant 0 : index
    %c0_152 = arith.constant 0 : index
    %460 = vector.load %arg12[%c1_150, %c0_151, %c0_152] : memref<2x256x64xf32, #tpu.memory_space<vmem>>, vector<1x256x64xf32>
    %461 = vector.shape_cast %460 : vector<1x256x64xf32> to vector<256x64xf32>
    %cst_153 = arith.constant dense<0.000000e+00> : vector<16x64xf32>
    %462 = tpu.matmul %459, %461, %cst_153 {dimension_numbers = #tpu.dot_dimension_numbers<[1], [0], [0], [1], [0, 0, 1, 1], [], []>} : vector<16x256xf32>, vector<256x64xf32>, vector<16x64xf32> -> vector<16x64xf32>
    %463 = arith.addf %436, %462 : vector<16x64xf32>
    %c0_154 = arith.constant 0 : index
    %c0_155 = arith.constant 0 : index
    %464 = vector.load %arg13[%c0_154, %c0_155] : memref<1x64xf32, #tpu.memory_space<vmem>>, vector<1x64xf32>
    %465 = arith.mulf %463, %463 : vector<16x64xf32>
    %cst_156 = arith.constant dense<0.000000e+00> : vector<16xf32>
    %466 = vector.multi_reduction <add>, %465, %cst_156 [1] : vector<16x64xf32> to vector<16xf32>
    %467 = vector.shape_cast %466 : vector<16xf32> to vector<16x1xf32>
    %cst_157 = arith.constant 6.400000e+01 : f32
    %468 = vector.broadcast %cst_157 : f32 to vector<16x1xf32>
    %469 = arith.divf %467, %468 : vector<16x1xf32>
    %cst_158 = arith.constant 9.99999997E-7 : f32
    %470 = vector.broadcast %cst_158 : f32 to vector<16x1xf32>
    %471 = arith.addf %469, %470 : vector<16x1xf32>
    %472 = math.rsqrt %471 : vector<16x1xf32>
    %473 = vector.broadcast %472 : vector<16x1xf32> to vector<16x64xf32>
    %474 = arith.mulf %463, %473 : vector<16x64xf32>
    %475 = vector.broadcast %464 : vector<1x64xf32> to vector<16x64xf32>
    %476 = arith.mulf %474, %475 : vector<16x64xf32>
    %c0_159 = arith.constant 0 : index
    %c0_160 = arith.constant 0 : index
    %477 = vector.load %arg2[%c0_159, %c0_160] : memref<2x16xf32, #tpu.memory_space<vmem>>, vector<2x16xf32>
    %cst_161 = arith.constant dense<0.000000e+00> : vector<2x64xf32>
    %478 = tpu.matmul %477, %476, %cst_161 {dimension_numbers = #tpu.dot_dimension_numbers<[1], [0], [0], [1], [0, 0, 1, 1], [], []>} : vector<2x16xf32>, vector<16x64xf32>, vector<2x64xf32> -> vector<2x64xf32>
    %cst_162 = arith.constant dense<0.000000e+00> : vector<2xf32>
    %479 = vector.multi_reduction <add>, %477, %cst_162 [1] : vector<2x16xf32> to vector<2xf32>
    %480 = vector.shape_cast %479 : vector<2xf32> to vector<2x1xf32>
    %cst_163 = arith.constant 9.99999971E-10 : f32
    %481 = vector.broadcast %cst_163 : f32 to vector<2x1xf32>
    %482 = arith.maximumf %480, %481 : vector<2x1xf32>
    %483 = tpu.reciprocal %482 {approx = true} : vector<2x1xf32> -> vector<2x1xf32>
    %484 = vector.broadcast %483 : vector<2x1xf32> to vector<2x64xf32>
    %485 = arith.mulf %478, %484 : vector<2x64xf32>
    %c0_164 = arith.constant 0 : index
    %c0_165 = arith.constant 0 : index
    %486 = vector.load %arg14[%c0_164, %c0_165] : memref<64x128xf32, #tpu.memory_space<vmem>>, vector<64x128xf32>
    %cst_166 = arith.constant dense<0.000000e+00> : vector<2x128xf32>
    %487 = tpu.matmul %485, %486, %cst_166 {dimension_numbers = #tpu.dot_dimension_numbers<[1], [0], [0], [1], [0, 0, 1, 1], [], []>} : vector<2x64xf32>, vector<64x128xf32>, vector<2x128xf32> -> vector<2x128xf32>
    %c0_167 = arith.constant 0 : index
    %c0_168 = arith.constant 0 : index
    %488 = vector.load %arg15[%c0_167, %c0_168] : memref<1x128xf32, #tpu.memory_space<vmem>>, vector<1x128xf32>
    %489 = vector.broadcast %488 : vector<1x128xf32> to vector<2x128xf32>
    %490 = arith.addf %487, %489 : vector<2x128xf32>
    %c0_169 = arith.constant 0 : index
    %c0_170 = arith.constant 0 : index
    %491 = vector.load %arg16[%c0_169, %c0_170] : memref<2x128xf32, #tpu.memory_space<vmem>>, vector<2x128xf32>
    tpu.vector_store %arg16[%c0_169, %c0_170], %490 {strides = array<i32>} : memref<2x128xf32, #tpu.memory_space<vmem>>, vector<2x128xf32>,
    return
  }
}

</mosaic_0001>

<llo_original>
// kernel: mul.29
$region0: #{mul.29}
  %s0 = inlined_call_operand.vmem [shape: f32[2,8], index: 0, kind: input, shape index: {}]
  %s1 = inlined_call_operand.vmem [shape: f32[16], index: 1, kind: output, shape index: {}]
  $region1: #{mul.29} parent=0
    #allocation0 [shape = 'u8[4096]{0}', space=vmem, size = 0x1000, scoped, tag = 'scoped mem for output reshape']
    #allocation1 [shape = 'u8[4096]{0}', space=vmem, size = 0x1000, scoped, tag = 'scoped mem for input reshape']
    %s3 = sshllo.u32 0, 2
    %v4 = vld [vmem:[%s0] sm:%s3]
    %5 = vst [vmem:[#allocation1] sm:%s3] %v4
    %v6 = vld [vmem:[#allocation1] sm:$0x1]
    %vm7 = vcmask 64512
    %8 = vst.msk [vmem:[#allocation0] sm:$0x1] %vm7, %v6
    %s9 = scalar_lea.vmem [#allocation1], 1
    %v10 = vld [vmem:[%s9] sm:$0x1]
    %11 = vrot.lane.b32.xlu0 %v10, 8
    %v12 = vpop.permute.xlu0 %11
    %vm13 = vcmask 130112
    %14 = vst.msk [vmem:[#allocation0] sm:$0x1] %vm13, %v12
    %s16 = sshllo.u32 0, 1
    %v18 = vld [vmem:[#allocation0] sm:%s16]
    %s19 = sshllo.u32 0, 1
    %20 = vst [vmem:[%s1] sm:%s19] %v18

// kernel: tile.23
$region0: #{tile.23}
  #allocation0 [shape = 's32[1]{0}', space=sflag, size = 0x4, scoped, tag = 'scoped memory for tile.23']
  %s0 = inlined_call_operand.vmem [shape: f32[2], index: 0, kind: input, shape index: {}]
  %s1 = inlined_call_operand.vmem [shape: f32[8,2], index: 1, kind: output, shape index: {}]
  // Predicated region
  $region2: #{tile.23} parent=0 // pred_check
    _
  $region3: #{tile.23} parent=0 // pred_check_branch
    %3 = sbr.rel (0) target = $region5
  $region4: #{tile.23} parent=0 // pred_region
    _
  $region5: #{tile.23} parent=0 // pred_fallthru
    _
  %v4 = vld [vmem:[%s0] ss:$0 sm:$0xff]
  %5 = vst [vmem:[%s1] sm:$0xff] %v4

// kernel: classifier_forward.1
$region0: #{classifier_forward.1}
  #allocation0 [shape = 'u32[]', space=smem, size = 0x4, offset = 0x4, fixed_abs, tag = 'smem constant byte address 0x4 - core index']
  #allocation1 [shape = 'u32[144,128]{1,0:T(1,128)}', space=vmem, size = 0x12000, scoped, tag = 'internal scratch']
  %s0 = inlined_call_operand.vmem [shape: s32[16,1], index: 0, kind: input, shape index: {}]
  %s1 = inlined_call_operand.vmem [shape: f32[2,8], index: 1, kind: input, shape index: {}]
  %s2 = inlined_call_operand.vmem [shape: f32[2,16], index: 2, kind: input, shape index: {}]
  %s3 = inlined_call_operand.vmem [shape: f32[16,64], index: 3, kind: input, shape index: {}]
  %s4 = inlined_call_operand.vmem [shape: f32[16,64], index: 4, kind: input, shape index: {}]
  %s5 = inlined_call_operand.vmem [shape: f32[64,64], index: 5, kind: input, shape index: {}]
  %s6 = inlined_call_operand.vmem [shape: f32[128,64], index: 6, kind: input, shape index: {}]
  %s7 = inlined_call_operand.vmem [shape: f32[2,1,64], index: 7, kind: input, shape index: {}]
  %s8 = inlined_call_operand.vmem [shape: f32[2,1,64], index: 8, kind: input, shape index: {}]
  %s9 = inlined_call_operand.vmem [shape: f32[2,64,192], index: 9, kind: input, shape index: {}]
  %s10 = inlined_call_operand.vmem [shape: f32[2,64,64], index: 10, kind: input, shape index: {}]
  %s11 = inlined_call_operand.vmem [shape: f32[2,64,256], index: 11, kind: input, shape index: {}]
  %s12 = inlined_call_operand.vmem [shape: f32[2,256,64], index: 12, kind: input, shape index: {}]
  %s13 = inlined_call_operand.vmem [shape: f32[1,64], index: 13, kind: input, shape index: {}]
  %s14 = inlined_call_operand.vmem [shape: f32[64,128], index: 14, kind: input, shape index: {}]
  %s15 = inlined_call_operand.vmem [shape: f32[1,128], index: 15, kind: input, shape index: {}]
  %s16 = inlined_call_operand.hbm [shape: f32[2,128], index: 16, kind: output, shape index: {}]
  %s17 = sld [smem:[#allocation0]]
  $region74: #{classifier_forward.1} parent=0
    _
  %s19 = ssub.s32 1, %s17
  %s20 = scalar_select 0, %s19, %s17
  $region1: #{classifier_forward.1} parent=0
    #allocation2 [shape = 'u8[1024]{0}', space=vmem, size = 0x400, scoped, tag = 'output window, operand 0, single buffered']
    #allocation3 [shape = 's32[1]{0}', space=sflag, size = 0x4, scoped, tag = 'scoped memory for classifier_forward.1']
    %21 = vsyncpa [#allocation3], 0
    // Predicated region
    $region2: #{classifier_forward.1} parent=1 // pred_check
      _
    $region3: #{classifier_forward.1} parent=1 // pred_check_branch
      %23 = sbr.rel (0) target = $region5
    $region4: #{classifier_forward.1} parent=1 // pred_region
      _
    $region5: #{classifier_forward.1} parent=1 // pred_fallthru
      _
    // Predicated region
    $region6: #{classifier_forward.1} parent=1 // pred_check
      _
    $region7: #{classifier_forward.1} parent=1 // pred_check_branch
      %25 = sbr.rel (0) target = $region9
    $region8: #{classifier_forward.1} parent=1 // pred_region
      _
    $region9: #{classifier_forward.1} parent=1 // pred_fallthru
      _
    // Predicated region
    $region10: #{classifier_forward.1} parent=1 // pred_check
      _
    $region11: #{classifier_forward.1} parent=1 // pred_check_branch
      %27 = sbr.rel (0) target = $region13
    $region12: #{classifier_forward.1} parent=1 // pred_region
      _
    $region13: #{classifier_forward.1} parent=1 // pred_fallthru
      _
    // Predicated region
    $region14: #{classifier_forward.1} parent=1 // pred_check
      _
    $region15: #{classifier_forward.1} parent=1 // pred_check_branch
      %29 = sbr.rel (0) target = $region17
    $region16: #{classifier_forward.1} parent=1 // pred_region
      _
    $region17: #{classifier_forward.1} parent=1 // pred_fallthru
      _
    // Predicated region
    $region18: #{classifier_forward.1} parent=1 // pred_check
      _
    $region19: #{classifier_forward.1} parent=1 // pred_check_branch
      %31 = sbr.rel (0) target = $region21
    $region20: #{classifier_forward.1} parent=1 // pred_region
      _
    $region21: #{classifier_forward.1} parent=1 // pred_fallthru
      _
    // Predicated region
    $region22: #{classifier_forward.1} parent=1 // pred_check
      _
    $region23: #{classifier_forward.1} parent=1 // pred_check_branch
      %33 = sbr.rel (0) target = $region25
    $region24: #{classifier_forward.1} parent=1 // pred_region
      _
    $region25: #{classifier_forward.1} parent=1 // pred_fallthru
      _
    // Predicated region
    $region26: #{classifier_forward.1} parent=1 // pred_check
      _
    $region27: #{classifier_forward.1} parent=1 // pred_check_branch
      %35 = sbr.rel (0) target = $region29
    $region28: #{classifier_forward.1} parent=1 // pred_region
      _
    $region29: #{classifier_forward.1} parent=1 // pred_fallthru
      _
    // Predicated region
    $region30: #{classifier_forward.1} parent=1 // pred_check
      _
    $region31: #{classifier_forward.1} parent=1 // pred_check_branch
      %37 = sbr.rel (0) target = $region33
    $region32: #{classifier_forward.1} parent=1 // pred_region
      _
    $region33: #{classifier_forward.1} parent=1 // pred_fallthru
      _
    // Predicated region
    $region34: #{classifier_forward.1} parent=1 // pred_check
      _
    $region35: #{classifier_forward.1} parent=1 // pred_check_branch
      %39 = sbr.rel (0) target = $region37
    $region36: #{classifier_forward.1} parent=1 // pred_region
      _
    $region37: #{classifier_forward.1} parent=1 // pred_fallthru
      _
    // Predicated region
    $region38: #{classifier_forward.1} parent=1 // pred_check
      _
    $region39: #{classifier_forward.1} parent=1 // pred_check_branch
      %41 = sbr.rel (0) target = $region41
    $region40: #{classifier_forward.1} parent=1 // pred_region
      _
    $region41: #{classifier_forward.1} parent=1 // pred_fallthru
      _
    // Predicated region
    $region42: #{classifier_forward.1} parent=1 // pred_check
      _
    $region43: #{classifier_forward.1} parent=1 // pred_check_branch
      %43 = sbr.rel (0) target = $region45
    $region44: #{classifier_forward.1} parent=1 // pred_region
      _
    $region45: #{classifier_forward.1} parent=1 // pred_fallthru
      _
    // Predicated region
    $region46: #{classifier_forward.1} parent=1 // pred_check
      _
    $region47: #{classifier_forward.1} parent=1 // pred_check_branch
      %45 = sbr.rel (0) target = $region49
    $region48: #{classifier_forward.1} parent=1 // pred_region
      _
    $region49: #{classifier_forward.1} parent=1 // pred_fallthru
      _
    // Predicated region
    $region50: #{classifier_forward.1} parent=1 // pred_check
      _
    $region51: #{classifier_forward.1} parent=1 // pred_check_branch
      %47 = sbr.rel (0) target = $region53
    $region52: #{classifier_forward.1} parent=1 // pred_region
      _
    $region53: #{classifier_forward.1} parent=1 // pred_fallthru
      _
    // Predicated region
    $region54: #{classifier_forward.1} parent=1 // pred_check
      _
    $region55: #{classifier_forward.1} parent=1 // pred_check_branch
      %49 = sbr.rel (0) target = $region57
    $region56: #{classifier_forward.1} parent=1 // pred_region
      _
    $region57: #{classifier_forward.1} parent=1 // pred_fallthru
      _
    // Predicated region
    $region58: #{classifier_forward.1} parent=1 // pred_check
      _
    $region59: #{classifier_forward.1} parent=1 // pred_check_branch
      %51 = sbr.rel (0) target = $region61
    $region60: #{classifier_forward.1} parent=1 // pred_region
      _
    $region61: #{classifier_forward.1} parent=1 // pred_fallthru
      _
    // Predicated region
    $region62: #{classifier_forward.1} parent=1 // pred_check
      _
    $region63: #{classifier_forward.1} parent=1 // pred_check_branch
      %53 = sbr.rel (0) target = $region65
    $region64: #{classifier_forward.1} parent=1 // pred_region
      _
    $region65: #{classifier_forward.1} parent=1 // pred_fallthru
      _
    %v54 = vld [vmem:[%s0] sm:$0xff]
    %v55 = vld [vmem:[%s0 + $0x8] sm:$0xff]
    %v56 = vlaneseq
    %v57 = vand.u32 %v56, 127
    %58 = vset.pattern.permute.xlu0 0
    %59 = vperm.xlu0 %58, %v54
    %v60 = vpop.permute.xlu0 %59
    %61 = vset.pattern.permute.xlu0 0
    %62 = vperm.xlu0 %61, %v55
    %v63 = vpop.permute.xlu0 %62
    %vm64 = vcmp.eq.s32.totalorder %v57, %v60
    %vm65 = vcmp.eq.s32.totalorder %v57, %v63
    %v66 = vsel %vm64, 1, 0
    %v67 = vsel %vm65, 1, 0
    %v68 = vcvt.s32.f32 %v66
    %v69 = vcvt.s32.f32 %v67
    %v70 = vld [vmem:[%s6] sm:$0xff]
    %v71 = vld [vmem:[%s6 + $0x8] sm:$0xff]
    %v72 = vld [vmem:[%s6 + $0x10] sm:$0xff]
    %v73 = vld [vmem:[%s6 + $0x18] sm:$0xff]
    %v74 = vld [vmem:[%s6 + $0x20] sm:$0xff]
    %v75 = vld [vmem:[%s6 + $0x28] sm:$0xff]
    %v76 = vld [vmem:[%s6 + $0x30] sm:$0xff]
    %v77 = vld [vmem:[%s6 + $0x38] sm:$0xff]
    %v78 = vld [vmem:[%s6 + $0x40] sm:$0xff]
    %v79 = vld [vmem:[%s6 + $0x48] sm:$0xff]
    %v80 = vld [vmem:[%s6 + $0x50] sm:$0xff]
    %v81 = vld [vmem:[%s6 + $0x58] sm:$0xff]
    %v82 = vld [vmem:[%s6 + $0x60] sm:$0xff]
    %v83 = vld [vmem:[%s6 + $0x68] sm:$0xff]
    %v84 = vld [vmem:[%s6 + $0x70] sm:$0xff]
    %v85 = vld [vmem:[%s6 + $0x78] sm:$0xff]
    %86 = vmatprep.subr.mxu0 0.0
    %87 = vmatpush1.msra.mxu0 %v70
    %88 = vmatprep.subr.mxu0 0.0
    %89 = vmatpush1.msra.mxu0 %v71
    %90 = vmatprep.subr.mxu0 0.0
    %91 = vmatpush1.msra.mxu0 %v72
    %92 = vmatprep.subr.mxu0 0.0
    %93 = vmatpush1.msra.mxu0 %v73
    %94 = vmatprep.subr.mxu0 0.0
    %95 = vmatpush1.msra.mxu0 %v74
    %96 = vmatprep.subr.mxu0 0.0
    %97 = vmatpush1.msra.mxu0 %v75
    %98 = vmatprep.subr.mxu0 0.0
    %99 = vmatpush1.msra.mxu0 %v76
    %100 = vmatprep.subr.mxu0 0.0
    %101 = vmatpush1.msra.mxu0 %v77
    %102 = vmatprep.subr.mxu0 0.0
    %103 = vmatpush1.msra.mxu0 %v78
    %104 = vmatprep.subr.mxu0 0.0
    %105 = vmatpush1.msra.mxu0 %v79
    %106 = vmatprep.subr.mxu0 0.0
    %107 = vmatpush1.msra.mxu0 %v80
    %108 = vmatprep.subr.mxu0 0.0
    %109 = vmatpush1.msra.mxu0 %v81
    %110 = vmatprep.subr.mxu0 0.0
    %111 = vmatpush1.msra.mxu0 %v82
    %112 = vmatprep.subr.mxu0 0.0
    %113 = vmatpush1.msra.mxu0 %v83
    %114 = vmatprep.subr.mxu0 0.0
    %115 = vmatpush1.msra.mxu0 %v84
    %116 = vmatprep.subr.mxu0 0.0
    %117 = vmatpush1.msra.mxu0 %v85
    %118 = vmatprep.subr.mxu0 0.0
    %119 = vmatpush1.msra.mxu0 0.0
    %120 = vmatprep.subr.mxu0 0.0
    %121 = vmatpush1.msra.mxu0 0.0
    %122 = vmatprep.subr.mxu0 0.0
    %123 = vmatpush1.msra.mxu0 0.0
    %124 = vmatprep.subr.mxu0 0.0
    %125 = vmatpush1.msra.mxu0 0.0
    %126 = vmatprep.subr.mxu0 0.0
    %127 = vmatpush1.msra.mxu0 0.0
    %128 = vmatprep.subr.mxu0 0.0
    %129 = vmatpush1.msra.mxu0 0.0
    %130 = vmatprep.subr.mxu0 0.0
    %131 = vmatpush1.msra.mxu0 0.0
    %132 = vmatprep.subr.mxu0 0.0
    %133 = vmatpush1.msra.mxu0 0.0
    %134 = vmatprep.subr.mxu0 0.0
    %135 = vmatpush1.msra.mxu0 0.0
    %136 = vmatprep.subr.mxu0 0.0
    %137 = vmatpush1.msra.mxu0 0.0
    %138 = vmatprep.subr.mxu0 0.0
    %139 = vmatpush1.msra.mxu0 0.0
    %140 = vmatprep.subr.mxu0 0.0
    %141 = vmatpush1.msra.mxu0 0.0
    %142 = vmatprep.subr.mxu0 0.0
    %143 = vmatpush1.msra.mxu0 0.0
    %144 = vmatprep.subr.mxu0 0.0
    %145 = vmatpush1.msra.mxu0 0.0
    %146 = vmatprep.subr.mxu0 0.0
    %147 = vmatpush1.msra.mxu0 0.0
    %148 = vmatprep.subr.mxu0 0.0
    %149 = vmatpush1.msra.mxu0 0.0
    %150 = vmatprep.mubr.f32.mxu0 0.0
    %151 = vmatmul.mubr.f32.gmra.mrb[0].mxu0 %v68
    %v152 = vpop.f32.mrb[0].mxu0
    %v153 = vadd.f32 0.0, %v152
    %v154 = vpop.f32.mrb[0].mxu0
    %155 = vmatprep.mubr.f32.mxu0 0.0
    %156 = vmatmul.mubr.f32.gmra.mrb[0].mxu0 %v69
    %v157 = vpop.f32.mrb[0].mxu0
    %v158 = vadd.f32 0.0, %v157
    %v159 = vpop.f32.mrb[0].mxu0
    %160 = vdwg.mxu0
    %v161 = vld [vmem:[%s1] sm:$0x3]
    %v162 = vsub.f32 1.0, %v161
    %v163 = vmul.f32 %v162, -1e+09
    %v164 = vld [vmem:[%s3] sm:$0xff]
    %v165 = vld [vmem:[%s3 + $0x8] sm:$0xff]
    %v166 = vld [vmem:[%s4] sm:$0xff]
    %v167 = vld [vmem:[%s4 + $0x8] sm:$0xff]
    %v168 = vld [vmem:[%s5] sm:$0xff]
    %v169 = vld [vmem:[%s5 + $0x8] sm:$0xff]
    %v170 = vld [vmem:[%s5 + $0x10] sm:$0xff]
    %v171 = vld [vmem:[%s5 + $0x18] sm:$0xff]
    %v172 = vld [vmem:[%s5 + $0x20] sm:$0xff]
    %v173 = vld [vmem:[%s5 + $0x28] sm:$0xff]
    %v174 = vld [vmem:[%s5 + $0x30] sm:$0xff]
    %v175 = vld [vmem:[%s5 + $0x38] sm:$0xff]
    %v176 = vld [vmem:[%s7] sm:$0x1]
    %v177 = vmul.f32 %v153, %v153
    %v178 = vmul.f32 %v158, %v158
    %vm179 = vcmask 523264
    %v180 = vsel %vm179, %v177, 0.0
    %181 = vadd.xlane.f32.xlu0 %v180
    %v182 = vpop.xlane.xlu0 %181
    %v183 = vsel %vm179, %v178, 0.0
    %184 = vadd.xlane.f32.xlu0 %v183
    %v185 = vpop.xlane.xlu0 %184
    %v186 = vrcp.pop 64.0
    %v187 = vmul.f32 %v182, %v186
    %v188 = vmul.f32 %v185, %v186
    %v189 = vadd.f32 %v187, 1e-06
    %v190 = vadd.f32 %v188, 1e-06
    %v191 = vrsqrt.pop %v189
    %v192 = vrsqrt.pop %v190
    %v193 = vmul.f32 %v153, %v191
    %v194 = vmul.f32 %v158, %v192
    %v196 = vlaneseq
    %v197 = vshrl.u32 %v196, 7
    %v198 = vsub.s32 0, %v197
    %v199 = vrot.slane %v176, %v198
    %v201 = vmul.f32 %v193, %v199
    %v202 = vmul.f32 %v194, %v199
    %v203 = vld [vmem:[%s9] sm:$0xff]
    %v204 = vld [vmem:[%s9 + $0x8] sm:$0xff]
    %v205 = vld [vmem:[%s9 + $0x10] sm:$0xff]
    %v206 = vld [vmem:[%s9 + $0x18] sm:$0xff]
    %v207 = vld [vmem:[%s9 + $0x20] sm:$0xff]
    %v208 = vld [vmem:[%s9 + $0x28] sm:$0xff]
    %v209 = vld [vmem:[%s9 + $0x30] sm:$0xff]
    %v210 = vld [vmem:[%s9 + $0x38] sm:$0xff]
    %v211 = vld [vmem:[%s9 + $0x40] sm:$0xff]
    %v212 = vld [vmem:[%s9 + $0x48] sm:$0xff]
    %v213 = vld [vmem:[%s9 + $0x50] sm:$0xff]
    %v214 = vld [vmem:[%s9 + $0x58] sm:$0xff]
    %v215 = vld [vmem:[%s9 + $0x60] sm:$0xff]
    %v216 = vld [vmem:[%s9 + $0x68] sm:$0xff]
    %v217 = vld [vmem:[%s9 + $0x70] sm:$0xff]
    %v218 = vld [vmem:[%s9 + $0x78] sm:$0xff]
    %v220 = vsel %vm179, %v201, 0
    %v223 = vsel %vm179, %v202, 0
    %225 = vmatprep.subr.mxu0 %v204
    %226 = vmatpush1.msra.mxu0 %v203
    %227 = vmatprep.subr.mxu0 %v206
    %228 = vmatpush1.msra.mxu0 %v205
    %229 = vmatprep.subr.mxu0 %v208
    %230 = vmatpush1.msra.mxu0 %v207
    %231 = vmatprep.subr.mxu0 %v210
    %232 = vmatpush1.msra.mxu0 %v209
    %233 = vmatprep.subr.mxu0 %v212
    %234 = vmatpush1.msra.mxu0 %v211
    %235 = vmatprep.subr.mxu0 %v214
    %236 = vmatpush1.msra.mxu0 %v213
    %237 = vmatprep.subr.mxu0 %v216
    %238 = vmatpush1.msra.mxu0 %v215
    %239 = vmatprep.subr.mxu0 %v218
    %240 = vmatpush1.msra.mxu0 %v217
    %241 = vmatprep.subr.mxu0 0.0
    %242 = vmatpush1.msra.mxu0 0.0
    %243 = vmatprep.subr.mxu0 0.0
    %244 = vmatpush1.msra.mxu0 0.0
    %245 = vmatprep.subr.mxu0 0.0
    %246 = vmatpush1.msra.mxu0 0.0
    %247 = vmatprep.subr.mxu0 0.0
    %248 = vmatpush1.msra.mxu0 0.0
    %249 = vmatprep.subr.mxu0 0.0
    %250 = vmatpush1.msra.mxu0 0.0
    %251 = vmatprep.subr.mxu0 0.0
    %252 = vmatpush1.msra.mxu0 0.0
    %253 = vmatprep.subr.mxu0 0.0
    %254 = vmatpush1.msra.mxu0 0.0
    %255 = vmatprep.subr.mxu0 0.0
    %256 = vmatpush1.msra.mxu0 0.0
    %257 = vmatprep.subr.mxu0 0.0
    %258 = vmatpush1.msra.mxu0 0.0
    %259 = vmatprep.subr.mxu0 0.0
    %260 = vmatpush1.msra.mxu0 0.0
    %261 = vmatprep.subr.mxu0 0.0
    %262 = vmatpush1.msra.mxu0 0.0
    %263 = vmatprep.subr.mxu0 0.0
    %264 = vmatpush1.msra.mxu0 0.0
    %265 = vmatprep.subr.mxu0 0.0
    %266 = vmatpush1.msra.mxu0 0.0
    %267 = vmatprep.subr.mxu0 0.0
    %268 = vmatpush1.msra.mxu0 0.0
    %269 = vmatprep.subr.mxu0 0.0
    %270 = vmatpush1.msra.mxu0 0.0
    %271 = vmatprep.subr.mxu0 0.0
    %272 = vmatpush1.msra.mxu0 0.0
    %273 = vmatprep.subr.mxu0 0.0
    %274 = vmatpush1.msra.mxu0 0.0
    %275 = vmatprep.subr.mxu0 0.0
    %276 = vmatpush1.msra.mxu0 0.0
    %277 = vmatprep.subr.mxu0 0.0
    %278 = vmatpush1.msra.mxu0 0.0
    %279 = vmatprep.subr.mxu0 0.0
    %280 = vmatpush1.msra.mxu0 0.0
    %281 = vmatprep.subr.mxu0 0.0
    %282 = vmatpush1.msra.mxu0 0.0
    %283 = vmatprep.subr.mxu0 0.0
    %284 = vmatpush1.msra.mxu0 0.0
    %285 = vmatprep.subr.mxu0 0.0
    %286 = vmatpush1.msra.mxu0 0.0
    %287 = vmatprep.subr.mxu0 0.0
    %288 = vmatpush1.msra.mxu0 0.0
    %289 = vmatprep.mubr.f32.mxu0 0.0
    %290 = vmatmul.mubr.f32.gmra.mrb[0].mxu0 %v220
    %v291 = vpop.f32.mrb[0].mxu0
    %v292 = vadd.f32 0.0, %v291
    %v293 = vpop.f32.mrb[0].mxu0
    %v294 = vadd.f32 0.0, %v293
    %295 = vmatprep.mubr.f32.mxu0 0.0
    %296 = vmatmul.mubr.f32.gmra.mrb[0].mxu0 %v223
    %v297 = vpop.f32.mrb[0].mxu0
    %v298 = vadd.f32 0.0, %v297
    %v299 = vpop.f32.mrb[0].mxu0
    %v300 = vadd.f32 0.0, %v299
    %301 = vdwg.mxu0
    %v302 = vmul.f32 %v292, %v164
    %v303 = vmul.f32 %v298, %v165
    %v305 = vsel %vm179, %v292, 0
    %v308 = vsel %vm179, %v298, 0
    %310 = vmatprep.subr.mxu0 0.0
    %311 = vmatpush1.msra.mxu0 %v168
    %312 = vmatprep.subr.mxu0 0.0
    %313 = vmatpush1.msra.mxu0 %v169
    %314 = vmatprep.subr.mxu0 0.0
    %315 = vmatpush1.msra.mxu0 %v170
    %316 = vmatprep.subr.mxu0 0.0
    %317 = vmatpush1.msra.mxu0 %v171
    %318 = vmatprep.subr.mxu0 0.0
    %319 = vmatpush1.msra.mxu0 %v172
    %320 = vmatprep.subr.mxu0 0.0
    %321 = vmatpush1.msra.mxu0 %v173
    %322 = vmatprep.subr.mxu0 0.0
    %323 = vmatpush1.msra.mxu0 %v174
    %324 = vmatprep.subr.mxu0 0.0
    %325 = vmatpush1.msra.mxu0 %v175
    %326 = vmatprep.subr.mxu0 0.0
    %327 = vmatpush1.msra.mxu0 0.0
    %328 = vmatprep.subr.mxu0 0.0
    %329 = vmatpush1.msra.mxu0 0.0
    %330 = vmatprep.subr.mxu0 0.0
    %331 = vmatpush1.msra.mxu0 0.0
    %332 = vmatprep.subr.mxu0 0.0
    %333 = vmatpush1.msra.mxu0 0.0
    %334 = vmatprep.subr.mxu0 0.0
    %335 = vmatpush1.msra.mxu0 0.0
    %336 = vmatprep.subr.mxu0 0.0
    %337 = vmatpush1.msra.mxu0 0.0
    %338 = vmatprep.subr.mxu0 0.0
    %339 = vmatpush1.msra.mxu0 0.0
    %340 = vmatprep.subr.mxu0 0.0
    %341 = vmatpush1.msra.mxu0 0.0
    %342 = vmatprep.subr.mxu0 0.0
    %343 = vmatpush1.msra.mxu0 0.0
    %344 = vmatprep.subr.mxu0 0.0
    %345 = vmatpush1.msra.mxu0 0.0
    %346 = vmatprep.subr.mxu0 0.0
    %347 = vmatpush1.msra.mxu0 0.0
    %348 = vmatprep.subr.mxu0 0.0
    %349 = vmatpush1.msra.mxu0 0.0
    %350 = vmatprep.subr.mxu0 0.0
    %351 = vmatpush1.msra.mxu0 0.0
    %352 = vmatprep.subr.mxu0 0.0
    %353 = vmatpush1.msra.mxu0 0.0
    %354 = vmatprep.subr.mxu0 0.0
    %355 = vmatpush1.msra.mxu0 0.0
    %356 = vmatprep.subr.mxu0 0.0
    %357 = vmatpush1.msra.mxu0 0.0
    %358 = vmatprep.subr.mxu0 0.0
    %359 = vmatpush1.msra.mxu0 0.0
    %360 = vmatprep.subr.mxu0 0.0
    %361 = vmatpush1.msra.mxu0 0.0
    %362 = vmatprep.subr.mxu0 0.0
    %363 = vmatpush1.msra.mxu0 0.0
    %364 = vmatprep.subr.mxu0 0.0
    %365 = vmatpush1.msra.mxu0 0.0
    %366 = vmatprep.subr.mxu0 0.0
    %367 = vmatpush1.msra.mxu0 0.0
    %368 = vmatprep.subr.mxu0 0.0
    %369 = vmatpush1.msra.mxu0 0.0
    %370 = vmatprep.subr.mxu0 0.0
    %371 = vmatpush1.msra.mxu0 0.0
    %372 = vmatprep.subr.mxu0 0.0
    %373 = vmatpush1.msra.mxu0 0.0
    %374 = vmatprep.mubr.f32.mxu0 0.0
    %375 = vmatmul.mubr.f32.gmra.mrb[0].mxu0 %v305
    %v376 = vpop.f32.mrb[0].mxu0
    %v377 = vadd.f32 0.0, %v376
    %v378 = vpop.f32.mrb[0].mxu0
    %379 = vmatprep.mubr.f32.mxu0 0.0
    %380 = vmatmul.mubr.f32.gmra.mrb[0].mxu0 %v308
    %v381 = vpop.f32.mrb[0].mxu0
    %v382 = vadd.f32 0.0, %v381
    %v383 = vpop.f32.mrb[0].mxu0
    %384 = vdwg.mxu0
    %v385 = vmul.f32 %v377, %v166
    %v386 = vmul.f32 %v382, %v167
    %v387 = vadd.f32 %v302, %v385
    %v388 = vadd.f32 %v303, %v386
    %391 = vrot.lane.b32.xlu0 %v164, 64
    %v392 = vpop.permute.xlu0 %391
    %393 = vrot.lane.b32.xlu0 %v165, 64
    %v394 = vpop.permute.xlu0 %393
    %v397 = vmul.f32 %v292, %v392
    %v398 = vmul.f32 %v298, %v394
    %399 = vrot.lane.b32.xlu0 %v292, 64
    %v400 = vpop.permute.xlu0 %399
    %401 = vrot.lane.b32.xlu0 %v298, 64
    %v402 = vpop.permute.xlu0 %401
    %v403 = vsel %vm179, %v400, 0
    %v405 = vsel %vm179, %v402, 0
    %407 = vmatprep.subr.mxu0 0.0
    %408 = vmatpush1.msra.mxu0 %v168
    %409 = vmatprep.subr.mxu0 0.0
    %410 = vmatpush1.msra.mxu0 %v169
    %411 = vmatprep.subr.mxu0 0.0
    %412 = vmatpush1.msra.mxu0 %v170
    %413 = vmatprep.subr.mxu0 0.0
    %414 = vmatpush1.msra.mxu0 %v171
    %415 = vmatprep.subr.mxu0 0.0
    %416 = vmatpush1.msra.mxu0 %v172
    %417 = vmatprep.subr.mxu0 0.0
    %418 = vmatpush1.msra.mxu0 %v173
    %419 = vmatprep.subr.mxu0 0.0
    %420 = vmatpush1.msra.mxu0 %v174
    %421 = vmatprep.subr.mxu0 0.0
    %422 = vmatpush1.msra.mxu0 %v175
    %423 = vmatprep.subr.mxu0 0.0
    %424 = vmatpush1.msra.mxu0 0.0
    %425 = vmatprep.subr.mxu0 0.0
    %426 = vmatpush1.msra.mxu0 0.0
    %427 = vmatprep.subr.mxu0 0.0
    %428 = vmatpush1.msra.mxu0 0.0
    %429 = vmatprep.subr.mxu0 0.0
    %430 = vmatpush1.msra.mxu0 0.0
    %431 = vmatprep.subr.mxu0 0.0
    %432 = vmatpush1.msra.mxu0 0.0
    %433 = vmatprep.subr.mxu0 0.0
    %434 = vmatpush1.msra.mxu0 0.0
    %435 = vmatprep.subr.mxu0 0.0
    %436 = vmatpush1.msra.mxu0 0.0
    %437 = vmatprep.subr.mxu0 0.0
    %438 = vmatpush1.msra.mxu0 0.0
    %439 = vmatprep.subr.mxu0 0.0
    %440 = vmatpush1.msra.mxu0 0.0
    %441 = vmatprep.subr.mxu0 0.0
    %442 = vmatpush1.msra.mxu0 0.0
    %443 = vmatprep.subr.mxu0 0.0
    %444 = vmatpush1.msra.mxu0 0.0
    %445 = vmatprep.subr.mxu0 0.0
    %446 = vmatpush1.msra.mxu0 0.0
    %447 = vmatprep.subr.mxu0 0.0
    %448 = vmatpush1.msra.mxu0 0.0
    %449 = vmatprep.subr.mxu0 0.0
    %450 = vmatpush1.msra.mxu0 0.0
    %451 = vmatprep.subr.mxu0 0.0
    %452 = vmatpush1.msra.mxu0 0.0
    %453 = vmatprep.subr.mxu0 0.0
    %454 = vmatpush1.msra.mxu0 0.0
    %455 = vmatprep.subr.mxu0 0.0
    %456 = vmatpush1.msra.mxu0 0.0
    %457 = vmatprep.subr.mxu0 0.0
    %458 = vmatpush1.msra.mxu0 0.0
    %459 = vmatprep.subr.mxu0 0.0
    %460 = vmatpush1.msra.mxu0 0.0
    %461 = vmatprep.subr.mxu0 0.0
    %462 = vmatpush1.msra.mxu0 0.0
    %463 = vmatprep.subr.mxu0 0.0
    %464 = vmatpush1.msra.mxu0 0.0
    %465 = vmatprep.subr.mxu0 0.0
    %466 = vmatpush1.msra.mxu0 0.0
    %467 = vmatprep.subr.mxu0 0.0
    %468 = vmatpush1.msra.mxu0 0.0
    %469 = vmatprep.subr.mxu0 0.0
    %470 = vmatpush1.msra.mxu0 0.0
    %471 = vmatprep.mubr.f32.mxu0 0.0
    %472 = vmatmul.mubr.f32.gmra.mrb[0].mxu0 %v403
    %v473 = vpop.f32.mrb[0].mxu0
    %v474 = vadd.f32 0.0, %v473
    %v475 = vpop.f32.mrb[0].mxu0
    %476 = vmatprep.mubr.f32.mxu0 0.0
    %477 = vmatmul.mubr.f32.gmra.mrb[0].mxu0 %v405
    %v478 = vpop.f32.mrb[0].mxu0
    %v479 = vadd.f32 0.0, %v478
    %v480 = vpop.f32.mrb[0].mxu0
    %481 = vdwg.mxu0
    %v482 = vmul.f32 %v474, %v166
    %v483 = vmul.f32 %v479, %v167
    %486 = vrot.lane.b32.xlu0 %v482, 64
    %v487 = vpop.permute.xlu0 %486
    %488 = vrot.lane.b32.xlu0 %v483, 64
    %v489 = vpop.permute.xlu0 %488
    %v492 = vadd.f32 %v397, %v487
    %v493 = vadd.f32 %v398, %v489
    %495 = vrot.lane.b32.xlu0 %v492, 64
    %v496 = vpop.permute.xlu0 %495
    %vm497 = vcmask 130048
    %v499 = vsel %vm497, %v387, 0
    %v501 = vsel %vm497, %v496, 0
    %503 = vmatprep.subr.mxu0 0.0
    %504 = vmatpush1.xpose.msra.mxu0 %v501
    %505 = vmatprep.subr.mxu0 0.0
    %506 = vmatpush1.xpose.msra.mxu0 0.0
    %507 = vmatprep.subr.mxu0 0.0
    %508 = vmatpush1.xpose.msra.mxu0 0.0
    %509 = vmatprep.subr.mxu0 0.0
    %510 = vmatpush1.xpose.msra.mxu0 0.0
    %511 = vmatprep.subr.mxu0 0.0
    %512 = vmatpush1.xpose.msra.mxu0 0.0
    %513 = vmatprep.subr.mxu0 0.0
    %514 = vmatpush1.xpose.msra.mxu0 0.0
    %515 = vmatprep.subr.mxu0 0.0
    %516 = vmatpush1.xpose.msra.mxu0 0.0
    %517 = vmatprep.subr.mxu0 0.0
    %518 = vmatpush1.xpose.msra.mxu0 0.0
    %519 = vmatprep.subr.mxu0 0.0
    %520 = vmatpush1.xpose.msra.mxu0 0.0
    %521 = vmatprep.subr.mxu0 0.0
    %522 = vmatpush1.xpose.msra.mxu0 0.0
    %523 = vmatprep.subr.mxu0 0.0
    %524 = vmatpush1.xpose.msra.mxu0 0.0
    %525 = vmatprep.subr.mxu0 0.0
    %526 = vmatpush1.xpose.msra.mxu0 0.0
    %527 = vmatprep.subr.mxu0 0.0
    %528 = vmatpush1.xpose.msra.mxu0 0.0
    %529 = vmatprep.subr.mxu0 0.0
    %530 = vmatpush1.xpose.msra.mxu0 0.0
    %531 = vmatprep.subr.mxu0 0.0
    %532 = vmatpush1.xpose.msra.mxu0 0.0
    %533 = vmatprep.subr.mxu0 0.0
    %534 = vmatpush1.xpose.msra.mxu0 0.0
    %535 = vmatprep.subr.mxu0 0.0
    %536 = vmatpush1.xpose.msra.mxu0 0.0
    %537 = vmatprep.subr.mxu0 0.0
    %538 = vmatpush1.xpose.msra.mxu0 0.0
    %539 = vmatprep.subr.mxu0 0.0
    %540 = vmatpush1.xpose.msra.mxu0 0.0
    %541 = vmatprep.subr.mxu0 0.0
    %542 = vmatpush1.xpose.msra.mxu0 0.0
    %543 = vmatprep.subr.mxu0 0.0
    %544 = vmatpush1.xpose.msra.mxu0 0.0
    %545 = vmatprep.subr.mxu0 0.0
    %546 = vmatpush1.xpose.msra.mxu0 0.0
    %547 = vmatprep.subr.mxu0 0.0
    %548 = vmatpush1.xpose.msra.mxu0 0.0
    %549 = vmatprep.subr.mxu0 0.0
    %550 = vmatpush1.xpose.msra.mxu0 0.0
    %551 = vmatprep.subr.mxu0 0.0
    %552 = vmatpush1.xpose.msra.mxu0 0.0
    %553 = vmatprep.subr.mxu0 0.0
    %554 = vmatpush1.xpose.msra.mxu0 0.0
    %555 = vmatprep.subr.mxu0 0.0
    %556 = vmatpush1.xpose.msra.mxu0 0.0
    %557 = vmatprep.subr.mxu0 0.0
    %558 = vmatpush1.xpose.msra.mxu0 0.0
    %559 = vmatprep.subr.mxu0 0.0
    %560 = vmatpush1.xpose.msra.mxu0 0.0
    %561 = vmatprep.subr.mxu0 0.0
    %562 = vmatpush1.xpose.msra.mxu0 0.0
    %563 = vmatprep.subr.mxu0 0.0
    %564 = vmatpush1.xpose.msra.mxu0 0.0
    %565 = vmatprep.subr.mxu0 0.0
    %566 = vmatpush1.xpose.msra.mxu0 0.0
    %567 = vmatprep.mubr.f32.mxu0 0.0
    %568 = vmatmul.mubr.f32.gmra.mrb[0].mxu0 %v499
    %v569 = vpop.f32.mrb[0].mxu0
    %v570 = vadd.f32 0.0, %v569
    %v571 = vpop.f32.mrb[0].mxu0
    %572 = vdwg.mxu0
    %v573 = vmul.f32 %v570, 0.25
    %v574 = vlaneseq
    %v575 = vshrl.u32 %v574, 7
    %v576 = vsub.s32 0, %v575
    %v577 = vrot.slane %v163, %v576
    %v578 = vadd.f32 %v573, %v577
    %vm579 = vcmask 64512
    %v580 = vsel %vm579, %v578, -inf
    %581 = vmax.xlane.f32.xlu0 %v580
    %v582 = vpop.xlane.xlu0 %581
    %v583 = vsub.f32 %v578, %v582
    %v584 = vmul.f32 %v583, 1.442695
    %v585 = vpow.pop %v584
    %v586 = vsel %vm579, %v585, 0.0
    %587 = vadd.xlane.f32.xlu0 %v586
    %v588 = vpop.xlane.xlu0 %587
    %v589 = vrcp.pop %v588
    %v590 = vmul.f32 %v585, %v589
    %v592 = vsel %vm579, %v590, 0
    %594 = vmatprep.subr.mxu0 0.0
    %595 = vmatpush1.msra.mxu0 %v294
    %596 = vmatprep.subr.mxu0 0.0
    %597 = vmatpush1.msra.mxu0 0.0
    %598 = vmatprep.subr.mxu0 0.0
    %599 = vmatpush1.msra.mxu0 0.0
    %600 = vmatprep.subr.mxu0 0.0
    %601 = vmatpush1.msra.mxu0 0.0
    %602 = vmatprep.subr.mxu0 0.0
    %603 = vmatpush1.msra.mxu0 0.0
    %604 = vmatprep.subr.mxu0 0.0
    %605 = vmatpush1.msra.mxu0 0.0
    %606 = vmatprep.subr.mxu0 0.0
    %607 = vmatpush1.msra.mxu0 0.0
    %608 = vmatprep.subr.mxu0 0.0
    %609 = vmatpush1.msra.mxu0 0.0
    %610 = vmatprep.subr.mxu0 0.0
    %611 = vmatpush1.msra.mxu0 0.0
    %612 = vmatprep.subr.mxu0 0.0
    %613 = vmatpush1.msra.mxu0 0.0
    %614 = vmatprep.subr.mxu0 0.0
    %615 = vmatpush1.msra.mxu0 0.0
    %616 = vmatprep.subr.mxu0 0.0
    %617 = vmatpush1.msra.mxu0 0.0
    %618 = vmatprep.subr.mxu0 0.0
    %619 = vmatpush1.msra.mxu0 0.0
    %620 = vmatprep.subr.mxu0 0.0
    %621 = vmatpush1.msra.mxu0 0.0
    %622 = vmatprep.subr.mxu0 0.0
    %623 = vmatpush1.msra.mxu0 0.0
    %624 = vmatprep.subr.mxu0 0.0
    %625 = vmatpush1.msra.mxu0 0.0
    %626 = vmatprep.subr.mxu0 0.0
    %627 = vmatpush1.msra.mxu0 0.0
    %628 = vmatprep.subr.mxu0 0.0
    %629 = vmatpush1.msra.mxu0 0.0
    %630 = vmatprep.subr.mxu0 0.0
    %631 = vmatpush1.msra.mxu0 0.0
    %632 = vmatprep.subr.mxu0 0.0
    %633 = vmatpush1.msra.mxu0 0.0
    %634 = vmatprep.subr.mxu0 0.0
    %635 = vmatpush1.msra.mxu0 0.0
    %636 = vmatprep.subr.mxu0 0.0
    %637 = vmatpush1.msra.mxu0 0.0
    %638 = vmatprep.subr.mxu0 0.0
    %639 = vmatpush1.msra.mxu0 0.0
    %640 = vmatprep.subr.mxu0 0.0
    %641 = vmatpush1.msra.mxu0 0.0
    %642 = vmatprep.subr.mxu0 0.0
    %643 = vmatpush1.msra.mxu0 0.0
    %644 = vmatprep.subr.mxu0 0.0
    %645 = vmatpush1.msra.mxu0 0.0
    %646 = vmatprep.subr.mxu0 0.0
    %647 = vmatpush1.msra.mxu0 0.0
    %648 = vmatprep.subr.mxu0 0.0
    %649 = vmatpush1.msra.mxu0 0.0
    %650 = vmatprep.subr.mxu0 0.0
    %651 = vmatpush1.msra.mxu0 0.0
    %652 = vmatprep.subr.mxu0 0.0
    %653 = vmatpush1.msra.mxu0 0.0
    %654 = vmatprep.subr.mxu0 0.0
    %655 = vmatpush1.msra.mxu0 0.0
    %656 = vmatprep.subr.mxu0 0.0
    %657 = vmatpush1.msra.mxu0 0.0
    %658 = vmatprep.mubr.f32.mxu0 0.0
    %659 = vmatmul.mubr.f32.gmra.mrb[0].mxu0 %v592
    %v660 = vpop.f32.mrb[0].mxu0
    %v661 = vadd.f32 0.0, %v660
    %v662 = vpop.f32.mrb[0].mxu0
    %663 = vdwg.mxu0
    %665 = vrot.lane.b32.xlu0 %v493, 64
    %v666 = vpop.permute.xlu0 %665
    %v668 = vsel %vm497, %v388, 0
    %v670 = vsel %vm497, %v666, 0
    %672 = vmatprep.subr.mxu0 0.0
    %673 = vmatpush1.xpose.msra.mxu0 %v670
    %674 = vmatprep.subr.mxu0 0.0
    %675 = vmatpush1.xpose.msra.mxu0 0.0
    %676 = vmatprep.subr.mxu0 0.0
    %677 = vmatpush1.xpose.msra.mxu0 0.0
    %678 = vmatprep.subr.mxu0 0.0
    %679 = vmatpush1.xpose.msra.mxu0 0.0
    %680 = vmatprep.subr.mxu0 0.0
    %681 = vmatpush1.xpose.msra.mxu0 0.0
    %682 = vmatprep.subr.mxu0 0.0
    %683 = vmatpush1.xpose.msra.mxu0 0.0
    %684 = vmatprep.subr.mxu0 0.0
    %685 = vmatpush1.xpose.msra.mxu0 0.0
    %686 = vmatprep.subr.mxu0 0.0
    %687 = vmatpush1.xpose.msra.mxu0 0.0
    %688 = vmatprep.subr.mxu0 0.0
    %689 = vmatpush1.xpose.msra.mxu0 0.0
    %690 = vmatprep.subr.mxu0 0.0
    %691 = vmatpush1.xpose.msra.mxu0 0.0
    %692 = vmatprep.subr.mxu0 0.0
    %693 = vmatpush1.xpose.msra.mxu0 0.0
    %694 = vmatprep.subr.mxu0 0.0
    %695 = vmatpush1.xpose.msra.mxu0 0.0
    %696 = vmatprep.subr.mxu0 0.0
    %697 = vmatpush1.xpose.msra.mxu0 0.0
    %698 = vmatprep.subr.mxu0 0.0
    %699 = vmatpush1.xpose.msra.mxu0 0.0
    %700 = vmatprep.subr.mxu0 0.0
    %701 = vmatpush1.xpose.msra.mxu0 0.0
    %702 = vmatprep.subr.mxu0 0.0
    %703 = vmatpush1.xpose.msra.mxu0 0.0
    %704 = vmatprep.subr.mxu0 0.0
    %705 = vmatpush1.xpose.msra.mxu0 0.0
    %706 = vmatprep.subr.mxu0 0.0
    %707 = vmatpush1.xpose.msra.mxu0 0.0
    %708 = vmatprep.subr.mxu0 0.0
    %709 = vmatpush1.xpose.msra.mxu0 0.0
    %710 = vmatprep.subr.mxu0 0.0
    %711 = vmatpush1.xpose.msra.mxu0 0.0
    %712 = vmatprep.subr.mxu0 0.0
    %713 = vmatpush1.xpose.msra.mxu0 0.0
    %714 = vmatprep.subr.mxu0 0.0
    %715 = vmatpush1.xpose.msra.mxu0 0.0
    %716 = vmatprep.subr.mxu0 0.0
    %717 = vmatpush1.xpose.msra.mxu0 0.0
    %718 = vmatprep.subr.mxu0 0.0
    %719 = vmatpush1.xpose.msra.mxu0 0.0
    %720 = vmatprep.subr.mxu0 0.0
    %721 = vmatpush1.xpose.msra.mxu0 0.0
    %722 = vmatprep.subr.mxu0 0.0
    %723 = vmatpush1.xpose.msra.mxu0 0.0
    %724 = vmatprep.subr.mxu0 0.0
    %725 = vmatpush1.xpose.msra.mxu0 0.0
    %726 = vmatprep.subr.mxu0 0.0
    %727 = vmatpush1.xpose.msra.mxu0 0.0
    %728 = vmatprep.subr.mxu0 0.0
    %729 = vmatpush1.xpose.msra.mxu0 0.0
    %730 = vmatprep.subr.mxu0 0.0
    %731 = vmatpush1.xpose.msra.mxu0 0.0
    %732 = vmatprep.subr.mxu0 0.0
    %733 = vmatpush1.xpose.msra.mxu0 0.0
    %734 = vmatprep.subr.mxu0 0.0
    %735 = vmatpush1.xpose.msra.mxu0 0.0
    %736 = vmatprep.mubr.f32.mxu0 0.0
    %737 = vmatmul.mubr.f32.gmra.mrb[0].mxu0 %v668
    %v738 = vpop.f32.mrb[0].mxu0
    %v739 = vadd.f32 0.0, %v738
    %v740 = vpop.f32.mrb[0].mxu0
    %741 = vdwg.mxu0
    %v742 = vmul.f32 %v739, 0.25
    %v743 = vlaneseq
    %v744 = vshrl.u32 %v743, 7
    %v745 = vsub.s32 1, %v744
    %v746 = vrot.slane %v163, %v745
    %v747 = vadd.f32 %v742, %v746
    %v748 = vsel %vm579, %v747, -inf
    %749 = vmax.xlane.f32.xlu0 %v748
    %v750 = vpop.xlane.xlu0 %749
    %v751 = vsub.f32 %v747, %v750
    %v752 = vmul.f32 %v751, 1.442695
    %v753 = vpow.pop %v752
    %v754 = vsel %vm579, %v753, 0.0
    %755 = vadd.xlane.f32.xlu0 %v754
    %v756 = vpop.xlane.xlu0 %755
    %v757 = vrcp.pop %v756
    %v758 = vmul.f32 %v753, %v757
    %v760 = vsel %vm579, %v758, 0
    %762 = vmatprep.subr.mxu0 0.0
    %763 = vmatpush1.msra.mxu0 %v300
    %764 = vmatprep.subr.mxu0 0.0
    %765 = vmatpush1.msra.mxu0 0.0
    %766 = vmatprep.subr.mxu0 0.0
    %767 = vmatpush1.msra.mxu0 0.0
    %768 = vmatprep.subr.mxu0 0.0
    %769 = vmatpush1.msra.mxu0 0.0
    %770 = vmatprep.subr.mxu0 0.0
    %771 = vmatpush1.msra.mxu0 0.0
    %772 = vmatprep.subr.mxu0 0.0
    %773 = vmatpush1.msra.mxu0 0.0
    %774 = vmatprep.subr.mxu0 0.0
    %775 = vmatpush1.msra.mxu0 0.0
    %776 = vmatprep.subr.mxu0 0.0
    %777 = vmatpush1.msra.mxu0 0.0
    %778 = vmatprep.subr.mxu0 0.0
    %779 = vmatpush1.msra.mxu0 0.0
    %780 = vmatprep.subr.mxu0 0.0
    %781 = vmatpush1.msra.mxu0 0.0
    %782 = vmatprep.subr.mxu0 0.0
    %783 = vmatpush1.msra.mxu0 0.0
    %784 = vmatprep.subr.mxu0 0.0
    %785 = vmatpush1.msra.mxu0 0.0
    %786 = vmatprep.subr.mxu0 0.0
    %787 = vmatpush1.msra.mxu0 0.0
    %788 = vmatprep.subr.mxu0 0.0
    %789 = vmatpush1.msra.mxu0 0.0
    %790 = vmatprep.subr.mxu0 0.0
    %791 = vmatpush1.msra.mxu0 0.0
    %792 = vmatprep.subr.mxu0 0.0
    %793 = vmatpush1.msra.mxu0 0.0
    %794 = vmatprep.subr.mxu0 0.0
    %795 = vmatpush1.msra.mxu0 0.0
    %796 = vmatprep.subr.mxu0 0.0
    %797 = vmatpush1.msra.mxu0 0.0
    %798 = vmatprep.subr.mxu0 0.0
    %799 = vmatpush1.msra.mxu0 0.0
    %800 = vmatprep.subr.mxu0 0.0
    %801 = vmatpush1.msra.mxu0 0.0
    %802 = vmatprep.subr.mxu0 0.0
    %803 = vmatpush1.msra.mxu0 0.0
    %804 = vmatprep.subr.mxu0 0.0
    %805 = vmatpush1.msra.mxu0 0.0
    %806 = vmatprep.subr.mxu0 0.0
    %807 = vmatpush1.msra.mxu0 0.0
    %808 = vmatprep.subr.mxu0 0.0
    %809 = vmatpush1.msra.mxu0 0.0
    %810 = vmatprep.subr.mxu0 0.0
    %811 = vmatpush1.msra.mxu0 0.0
    %812 = vmatprep.subr.mxu0 0.0
    %813 = vmatpush1.msra.mxu0 0.0
    %814 = vmatprep.subr.mxu0 0.0
    %815 = vmatpush1.msra.mxu0 0.0
    %816 = vmatprep.subr.mxu0 0.0
    %817 = vmatpush1.msra.mxu0 0.0
    %818 = vmatprep.subr.mxu0 0.0
    %819 = vmatpush1.msra.mxu0 0.0
    %820 = vmatprep.subr.mxu0 0.0
    %821 = vmatpush1.msra.mxu0 0.0
    %822 = vmatprep.subr.mxu0 0.0
    %823 = vmatpush1.msra.mxu0 0.0
    %824 = vmatprep.subr.mxu0 0.0
    %825 = vmatpush1.msra.mxu0 0.0
    %826 = vmatprep.mubr.f32.mxu0 0.0
    %827 = vmatmul.mubr.f32.gmra.mrb[0].mxu0 %v760
    %v828 = vpop.f32.mrb[0].mxu0
    %v829 = vadd.f32 0.0, %v828
    %v830 = vpop.f32.mrb[0].mxu0
    %831 = vdwg.mxu0
    %832 = vrot.lane.b32.xlu0 %v387, 112
    %v833 = vpop.permute.xlu0 %832
    %834 = vrot.lane.b32.xlu0 %v492, 48
    %v835 = vpop.permute.xlu0 %834
    %v836 = vsel %vm497, %v833, 0
    %v838 = vsel %vm497, %v835, 0
    %840 = vmatprep.subr.mxu0 0.0
    %841 = vmatpush1.xpose.msra.mxu0 %v838
    %842 = vmatprep.subr.mxu0 0.0
    %843 = vmatpush1.xpose.msra.mxu0 0.0
    %844 = vmatprep.subr.mxu0 0.0
    %845 = vmatpush1.xpose.msra.mxu0 0.0
    %846 = vmatprep.subr.mxu0 0.0
    %847 = vmatpush1.xpose.msra.mxu0 0.0
    %848 = vmatprep.subr.mxu0 0.0
    %849 = vmatpush1.xpose.msra.mxu0 0.0
    %850 = vmatprep.subr.mxu0 0.0
    %851 = vmatpush1.xpose.msra.mxu0 0.0
    %852 = vmatprep.subr.mxu0 0.0
    %853 = vmatpush1.xpose.msra.mxu0 0.0
    %854 = vmatprep.subr.mxu0 0.0
    %855 = vmatpush1.xpose.msra.mxu0 0.0
    %856 = vmatprep.subr.mxu0 0.0
    %857 = vmatpush1.xpose.msra.mxu0 0.0
    %858 = vmatprep.subr.mxu0 0.0
    %859 = vmatpush1.xpose.msra.mxu0 0.0
    %860 = vmatprep.subr.mxu0 0.0
    %861 = vmatpush1.xpose.msra.mxu0 0.0
    %862 = vmatprep.subr.mxu0 0.0
    %863 = vmatpush1.xpose.msra.mxu0 0.0
    %864 = vmatprep.subr.mxu0 0.0
    %865 = vmatpush1.xpose.msra.mxu0 0.0
    %866 = vmatprep.subr.mxu0 0.0
    %867 = vmatpush1.xpose.msra.mxu0 0.0
    %868 = vmatprep.subr.mxu0 0.0
    %869 = vmatpush1.xpose.msra.mxu0 0.0
    %870 = vmatprep.subr.mxu0 0.0
    %871 = vmatpush1.xpose.msra.mxu0 0.0
    %872 = vmatprep.subr.mxu0 0.0
    %873 = vmatpush1.xpose.msra.mxu0 0.0
    %874 = vmatprep.subr.mxu0 0.0
    %875 = vmatpush1.xpose.msra.mxu0 0.0
    %876 = vmatprep.subr.mxu0 0.0
    %877 = vmatpush1.xpose.msra.mxu0 0.0
    %878 = vmatprep.subr.mxu0 0.0
    %879 = vmatpush1.xpose.msra.mxu0 0.0
    %880 = vmatprep.subr.mxu0 0.0
    %881 = vmatpush1.xpose.msra.mxu0 0.0
    %882 = vmatprep.subr.mxu0 0.0
    %883 = vmatpush1.xpose.msra.mxu0 0.0
    %884 = vmatprep.subr.mxu0 0.0
    %885 = vmatpush1.xpose.msra.mxu0 0.0
    %886 = vmatprep.subr.mxu0 0.0
    %887 = vmatpush1.xpose.msra.mxu0 0.0
    %888 = vmatprep.subr.mxu0 0.0
    %889 = vmatpush1.xpose.msra.mxu0 0.0
    %890 = vmatprep.subr.mxu0 0.0
    %891 = vmatpush1.xpose.msra.mxu0 0.0
    %892 = vmatprep.subr.mxu0 0.0
    %893 = vmatpush1.xpose.msra.mxu0 0.0
    %894 = vmatprep.subr.mxu0 0.0
    %895 = vmatpush1.xpose.msra.mxu0 0.0
    %896 = vmatprep.subr.mxu0 0.0
    %897 = vmatpush1.xpose.msra.mxu0 0.0
    %898 = vmatprep.subr.mxu0 0.0
    %899 = vmatpush1.xpose.msra.mxu0 0.0
    %900 = vmatprep.subr.mxu0 0.0
    %901 = vmatpush1.xpose.msra.mxu0 0.0
    %902 = vmatprep.subr.mxu0 0.0
    %903 = vmatpush1.xpose.msra.mxu0 0.0
    %904 = vmatprep.mubr.f32.mxu0 0.0
    %905 = vmatmul.mubr.f32.gmra.mrb[0].mxu0 %v836
    %v906 = vpop.f32.mrb[0].mxu0
    %v907 = vadd.f32 0.0, %v906
    %v908 = vpop.f32.mrb[0].mxu0
    %909 = vdwg.mxu0
    %v910 = vmul.f32 %v907, 0.25
    %v911 = vadd.f32 %v910, %v577
    %v912 = vsel %vm579, %v911, -inf
    %913 = vmax.xlane.f32.xlu0 %v912
    %v914 = vpop.xlane.xlu0 %913
    %v915 = vsub.f32 %v911, %v914
    %v916 = vmul.f32 %v915, 1.442695
    %v917 = vpow.pop %v916
    %v918 = vsel %vm579, %v917, 0.0
    %919 = vadd.xlane.f32.xlu0 %v918
    %v920 = vpop.xlane.xlu0 %919
    %v921 = vrcp.pop %v920
    %v922 = vmul.f32 %v917, %v921
    %924 = vrot.lane.b32.xlu0 %v294, 112
    %v925 = vpop.permute.xlu0 %924
    %v928 = vsel %vm579, %v922, 0
    %930 = vmatprep.subr.mxu0 0.0
    %931 = vmatpush1.msra.mxu0 %v925
    %932 = vmatprep.subr.mxu0 0.0
    %933 = vmatpush1.msra.mxu0 0.0
    %934 = vmatprep.subr.mxu0 0.0
    %935 = vmatpush1.msra.mxu0 0.0
    %936 = vmatprep.subr.mxu0 0.0
    %937 = vmatpush1.msra.mxu0 0.0
    %938 = vmatprep.subr.mxu0 0.0
    %939 = vmatpush1.msra.mxu0 0.0
    %940 = vmatprep.subr.mxu0 0.0
    %941 = vmatpush1.msra.mxu0 0.0
    %942 = vmatprep.subr.mxu0 0.0
    %943 = vmatpush1.msra.mxu0 0.0
    %944 = vmatprep.subr.mxu0 0.0
    %945 = vmatpush1.msra.mxu0 0.0
    %946 = vmatprep.subr.mxu0 0.0
    %947 = vmatpush1.msra.mxu0 0.0
    %948 = vmatprep.subr.mxu0 0.0
    %949 = vmatpush1.msra.mxu0 0.0
    %950 = vmatprep.subr.mxu0 0.0
    %951 = vmatpush1.msra.mxu0 0.0
    %952 = vmatprep.subr.mxu0 0.0
    %953 = vmatpush1.msra.mxu0 0.0
    %954 = vmatprep.subr.mxu0 0.0
    %955 = vmatpush1.msra.mxu0 0.0
    %956 = vmatprep.subr.mxu0 0.0
    %957 = vmatpush1.msra.mxu0 0.0
    %958 = vmatprep.subr.mxu0 0.0
    %959 = vmatpush1.msra.mxu0 0.0
    %960 = vmatprep.subr.mxu0 0.0
    %961 = vmatpush1.msra.mxu0 0.0
    %962 = vmatprep.subr.mxu0 0.0
    %963 = vmatpush1.msra.mxu0 0.0
    %964 = vmatprep.subr.mxu0 0.0
    %965 = vmatpush1.msra.mxu0 0.0
    %966 = vmatprep.subr.mxu0 0.0
    %967 = vmatpush1.msra.mxu0 0.0
    %968 = vmatprep.subr.mxu0 0.0
    %969 = vmatpush1.msra.mxu0 0.0
    %970 = vmatprep.subr.mxu0 0.0
    %971 = vmatpush1.msra.mxu0 0.0
    %972 = vmatprep.subr.mxu0 0.0
    %973 = vmatpush1.msra.mxu0 0.0
    %974 = vmatprep.subr.mxu0 0.0
    %975 = vmatpush1.msra.mxu0 0.0
    %976 = vmatprep.subr.mxu0 0.0
    %977 = vmatpush1.msra.mxu0 0.0
    %978 = vmatprep.subr.mxu0 0.0
    %979 = vmatpush1.msra.mxu0 0.0
    %980 = vmatprep.subr.mxu0 0.0
    %981 = vmatpush1.msra.mxu0 0.0
    %982 = vmatprep.subr.mxu0 0.0
    %983 = vmatpush1.msra.mxu0 0.0
    %984 = vmatprep.subr.mxu0 0.0
    %985 = vmatpush1.msra.mxu0 0.0
    %986 = vmatprep.subr.mxu0 0.0
    %987 = vmatpush1.msra.mxu0 0.0
    %988 = vmatprep.subr.mxu0 0.0
    %989 = vmatpush1.msra.mxu0 0.0
    %990 = vmatprep.subr.mxu0 0.0
    %991 = vmatpush1.msra.mxu0 0.0
    %992 = vmatprep.subr.mxu0 0.0
    %993 = vmatpush1.msra.mxu0 0.0
    %994 = vmatprep.mubr.f32.mxu0 0.0
    %995 = vmatmul.mubr.f32.gmra.mrb[0].mxu0 %v928
    %v996 = vpop.f32.mrb[0].mxu0
    %v997 = vadd.f32 0.0, %v996
    %v998 = vpop.f32.mrb[0].mxu0
    %999 = vdwg.mxu0
    %1000 = vrot.lane.b32.xlu0 %v388, 112
    %v1001 = vpop.permute.xlu0 %1000
    %1002 = vrot.lane.b32.xlu0 %v493, 48
    %v1003 = vpop.permute.xlu0 %1002
    %v1004 = vsel %vm497, %v1001, 0
    %v1006 = vsel %vm497, %v1003, 0
    %1008 = vmatprep.subr.mxu0 0.0
    %1009 = vmatpush1.xpose.msra.mxu0 %v1006
    %1010 = vmatprep.subr.mxu0 0.0
    %1011 = vmatpush1.xpose.msra.mxu0 0.0
    %1012 = vmatprep.subr.mxu0 0.0
    %1013 = vmatpush1.xpose.msra.mxu0 0.0
    %1014 = vmatprep.subr.mxu0 0.0
    %1015 = vmatpush1.xpose.msra.mxu0 0.0
    %1016 = vmatprep.subr.mxu0 0.0
    %1017 = vmatpush1.xpose.msra.mxu0 0.0
    %1018 = vmatprep.subr.mxu0 0.0
    %1019 = vmatpush1.xpose.msra.mxu0 0.0
    %1020 = vmatprep.subr.mxu0 0.0
    %1021 = vmatpush1.xpose.msra.mxu0 0.0
    %1022 = vmatprep.subr.mxu0 0.0
    %1023 = vmatpush1.xpose.msra.mxu0 0.0
    %1024 = vmatprep.subr.mxu0 0.0
    %1025 = vmatpush1.xpose.msra.mxu0 0.0
    %1026 = vmatprep.subr.mxu0 0.0
    %1027 = vmatpush1.xpose.msra.mxu0 0.0
    %1028 = vmatprep.subr.mxu0 0.0
    %1029 = vmatpush1.xpose.msra.mxu0 0.0
    %1030 = vmatprep.subr.mxu0 0.0
    %1031 = vmatpush1.xpose.msra.mxu0 0.0
    %1032 = vmatprep.subr.mxu0 0.0
    %1033 = vmatpush1.xpose.msra.mxu0 0.0
    %1034 = vmatprep.subr.mxu0 0.0
    %1035 = vmatpush1.xpose.msra.mxu0 0.0
    %1036 = vmatprep.subr.mxu0 0.0
    %1037 = vmatpush1.xpose.msra.mxu0 0.0
    %1038 = vmatprep.subr.mxu0 0.0
    %1039 = vmatpush1.xpose.msra.mxu0 0.0
    %1040 = vmatprep.subr.mxu0 0.0
    %1041 = vmatpush1.xpose.msra.mxu0 0.0
    %1042 = vmatprep.subr.mxu0 0.0
    %1043 = vmatpush1.xpose.msra.mxu0 0.0
    %1044 = vmatprep.subr.mxu0 0.0
    %1045 = vmatpush1.xpose.msra.mxu0 0.0
    %1046 = vmatprep.subr.mxu0 0.0
    %1047 = vmatpush1.xpose.msra.mxu0 0.0
    %1048 = vmatprep.subr.mxu0 0.0
    %1049 = vmatpush1.xpose.msra.mxu0 0.0
    %1050 = vmatprep.subr.mxu0 0.0
    %1051 = vmatpush1.xpose.msra.mxu0 0.0
    %1052 = vmatprep.subr.mxu0 0.0
    %1053 = vmatpush1.xpose.msra.mxu0 0.0
    %1054 = vmatprep.subr.mxu0 0.0
    %1055 = vmatpush1.xpose.msra.mxu0 0.0
    %1056 = vmatprep.subr.mxu0 0.0
    %1057 = vmatpush1.xpose.msra.mxu0 0.0
    %1058 = vmatprep.subr.mxu0 0.0
    %1059 = vmatpush1.xpose.msra.mxu0 0.0
    %1060 = vmatprep.subr.mxu0 0.0
    %1061 = vmatpush1.xpose.msra.mxu0 0.0
    %1062 = vmatprep.subr.mxu0 0.0
    %1063 = vmatpush1.xpose.msra.mxu0 0.0
    %1064 = vmatprep.subr.mxu0 0.0
    %1065 = vmatpush1.xpose.msra.mxu0 0.0
    %1066 = vmatprep.subr.mxu0 0.0
    %1067 = vmatpush1.xpose.msra.mxu0 0.0
    %1068 = vmatprep.subr.mxu0 0.0
    %1069 = vmatpush1.xpose.msra.mxu0 0.0
    %1070 = vmatprep.subr.mxu0 0.0
    %1071 = vmatpush1.xpose.msra.mxu0 0.0
    %1072 = vmatprep.mubr.f32.mxu0 0.0
    %1073 = vmatmul.mubr.f32.gmra.mrb[0].mxu0 %v1004
    %v1074 = vpop.f32.mrb[0].mxu0
    %v1075 = vadd.f32 0.0, %v1074
    %v1076 = vpop.f32.mrb[0].mxu0
    %1077 = vdwg.mxu0
    %v1078 = vmul.f32 %v1075, 0.25
    %v1079 = vadd.f32 %v1078, %v746
    %v1080 = vsel %vm579, %v1079, -inf
    %1081 = vmax.xlane.f32.xlu0 %v1080
    %v1082 = vpop.xlane.xlu0 %1081
    %v1083 = vsub.f32 %v1079, %v1082
    %v1084 = vmul.f32 %v1083, 1.442695
    %v1085 = vpow.pop %v1084
    %v1086 = vsel %vm579, %v1085, 0.0
    %1087 = vadd.xlane.f32.xlu0 %v1086
    %v1088 = vpop.xlane.xlu0 %1087
    %v1089 = vrcp.pop %v1088
    %v1090 = vmul.f32 %v1085, %v1089
    %1092 = vrot.lane.b32.xlu0 %v300, 112
    %v1093 = vpop.permute.xlu0 %1092
    %v1096 = vsel %vm579, %v1090, 0
    %1098 = vmatprep.subr.mxu0 0.0
    %1099 = vmatpush1.msra.mxu0 %v1093
    %1100 = vmatprep.subr.mxu0 0.0
    %1101 = vmatpush1.msra.mxu0 0.0
    %1102 = vmatprep.subr.mxu0 0.0
    %1103 = vmatpush1.msra.mxu0 0.0
    %1104 = vmatprep.subr.mxu0 0.0
    %1105 = vmatpush1.msra.mxu0 0.0
    %1106 = vmatprep.subr.mxu0 0.0
    %1107 = vmatpush1.msra.mxu0 0.0
    %1108 = vmatprep.subr.mxu0 0.0
    %1109 = vmatpush1.msra.mxu0 0.0
    %1110 = vmatprep.subr.mxu0 0.0
    %1111 = vmatpush1.msra.mxu0 0.0
    %1112 = vmatprep.subr.mxu0 0.0
    %1113 = vmatpush1.msra.mxu0 0.0
    %1114 = vmatprep.subr.mxu0 0.0
    %1115 = vmatpush1.msra.mxu0 0.0
    %1116 = vmatprep.subr.mxu0 0.0
    %1117 = vmatpush1.msra.mxu0 0.0
    %1118 = vmatprep.subr.mxu0 0.0
    %1119 = vmatpush1.msra.mxu0 0.0
    %1120 = vmatprep.subr.mxu0 0.0
    %1121 = vmatpush1.msra.mxu0 0.0
    %1122 = vmatprep.subr.mxu0 0.0
    %1123 = vmatpush1.msra.mxu0 0.0
    %1124 = vmatprep.subr.mxu0 0.0
    %1125 = vmatpush1.msra.mxu0 0.0
    %1126 = vmatprep.subr.mxu0 0.0
    %1127 = vmatpush1.msra.mxu0 0.0
    %1128 = vmatprep.subr.mxu0 0.0
    %1129 = vmatpush1.msra.mxu0 0.0
    %1130 = vmatprep.subr.mxu0 0.0
    %1131 = vmatpush1.msra.mxu0 0.0
    %1132 = vmatprep.subr.mxu0 0.0
    %1133 = vmatpush1.msra.mxu0 0.0
    %1134 = vmatprep.subr.mxu0 0.0
    %1135 = vmatpush1.msra.mxu0 0.0
    %1136 = vmatprep.subr.mxu0 0.0
    %1137 = vmatpush1.msra.mxu0 0.0
    %1138 = vmatprep.subr.mxu0 0.0
    %1139 = vmatpush1.msra.mxu0 0.0
    %1140 = vmatprep.subr.mxu0 0.0
    %1141 = vmatpush1.msra.mxu0 0.0
    %1142 = vmatprep.subr.mxu0 0.0
    %1143 = vmatpush1.msra.mxu0 0.0
    %1144 = vmatprep.subr.mxu0 0.0
    %1145 = vmatpush1.msra.mxu0 0.0
    %1146 = vmatprep.subr.mxu0 0.0
    %1147 = vmatpush1.msra.mxu0 0.0
    %1148 = vmatprep.subr.mxu0 0.0
    %1149 = vmatpush1.msra.mxu0 0.0
    %1150 = vmatprep.subr.mxu0 0.0
    %1151 = vmatpush1.msra.mxu0 0.0
    %1152 = vmatprep.subr.mxu0 0.0
    %1153 = vmatpush1.msra.mxu0 0.0
    %1154 = vmatprep.subr.mxu0 0.0
    %1155 = vmatpush1.msra.mxu0 0.0
    %1156 = vmatprep.subr.mxu0 0.0
    %1157 = vmatpush1.msra.mxu0 0.0
    %1158 = vmatprep.subr.mxu0 0.0
    %1159 = vmatpush1.msra.mxu0 0.0
    %1160 = vmatprep.subr.mxu0 0.0
    %1161 = vmatpush1.msra.mxu0 0.0
    %1162 = vmatprep.mubr.f32.mxu0 0.0
    %1163 = vmatmul.mubr.f32.gmra.mrb[0].mxu0 %v1096
    %v1164 = vpop.f32.mrb[0].mxu0
    %v1165 = vadd.f32 0.0, %v1164
    %v1166 = vpop.f32.mrb[0].mxu0
    %1167 = vdwg.mxu0
    %1168 = vrot.lane.b32.xlu0 %v387, 96
    %v1169 = vpop.permute.xlu0 %1168
    %1170 = vrot.lane.b32.xlu0 %v492, 32
    %v1171 = vpop.permute.xlu0 %1170
    %v1172 = vsel %vm497, %v1169, 0
    %v1174 = vsel %vm497, %v1171, 0
    %1176 = vmatprep.subr.mxu0 0.0
    %1177 = vmatpush1.xpose.msra.mxu0 %v1174
    %1178 = vmatprep.subr.mxu0 0.0
    %1179 = vmatpush1.xpose.msra.mxu0 0.0
    %1180 = vmatprep.subr.mxu0 0.0
    %1181 = vmatpush1.xpose.msra.mxu0 0.0
    %1182 = vmatprep.subr.mxu0 0.0
    %1183 = vmatpush1.xpose.msra.mxu0 0.0
    %1184 = vmatprep.subr.mxu0 0.0
    %1185 = vmatpush1.xpose.msra.mxu0 0.0
    %1186 = vmatprep.subr.mxu0 0.0
    %1187 = vmatpush1.xpose.msra.mxu0 0.0
    %1188 = vmatprep.subr.mxu0 0.0
    %1189 = vmatpush1.xpose.msra.mxu0 0.0
    %1190 = vmatprep.subr.mxu0 0.0
    %1191 = vmatpush1.xpose.msra.mxu0 0.0
    %1192 = vmatprep.subr.mxu0 0.0
    %1193 = vmatpush1.xpose.msra.mxu0 0.0
    %1194 = vmatprep.subr.mxu0 0.0
    %1195 = vmatpush1.xpose.msra.mxu0 0.0
    %1196 = vmatprep.subr.mxu0 0.0
    %1197 = vmatpush1.xpose.msra.mxu0 0.0
    %1198 = vmatprep.subr.mxu0 0.0
    %1199 = vmatpush1.xpose.msra.mxu0 0.0
    %1200 = vmatprep.subr.mxu0 0.0
    %1201 = vmatpush1.xpose.msra.mxu0 0.0
    %1202 = vmatprep.subr.mxu0 0.0
    %1203 = vmatpush1.xpose.msra.mxu0 0.0
    %1204 = vmatprep.subr.mxu0 0.0
    %1205 = vmatpush1.xpose.msra.mxu0 0.0
    %1206 = vmatprep.subr.mxu0 0.0
    %1207 = vmatpush1.xpose.msra.mxu0 0.0
    %1208 = vmatprep.subr.mxu0 0.0
    %1209 = vmatpush1.xpose.msra.mxu0 0.0
    %1210 = vmatprep.subr.mxu0 0.0
    %1211 = vmatpush1.xpose.msra.mxu0 0.0
    %1212 = vmatprep.subr.mxu0 0.0
    %1213 = vmatpush1.xpose.msra.mxu0 0.0
    %1214 = vmatprep.subr.mxu0 0.0
    %1215 = vmatpush1.xpose.msra.mxu0 0.0
    %1216 = vmatprep.subr.mxu0 0.0
    %1217 = vmatpush1.xpose.msra.mxu0 0.0
    %1218 = vmatprep.subr.mxu0 0.0
    %1219 = vmatpush1.xpose.msra.mxu0 0.0
    %1220 = vmatprep.subr.mxu0 0.0
    %1221 = vmatpush1.xpose.msra.mxu0 0.0
    %1222 = vmatprep.subr.mxu0 0.0
    %1223 = vmatpush1.xpose.msra.mxu0 0.0
    %1224 = vmatprep.subr.mxu0 0.0
    %1225 = vmatpush1.xpose.msra.mxu0 0.0
    %1226 = vmatprep.subr.mxu0 0.0
    %1227 = vmatpush1.xpose.msra.mxu0 0.0
    %1228 = vmatprep.subr.mxu0 0.0
    %1229 = vmatpush1.xpose.msra.mxu0 0.0
    %1230 = vmatprep.subr.mxu0 0.0
    %1231 = vmatpush1.xpose.msra.mxu0 0.0
    %1232 = vmatprep.subr.mxu0 0.0
    %1233 = vmatpush1.xpose.msra.mxu0 0.0
    %1234 = vmatprep.subr.mxu0 0.0
    %1235 = vmatpush1.xpose.msra.mxu0 0.0
    %1236 = vmatprep.subr.mxu0 0.0
    %1237 = vmatpush1.xpose.msra.mxu0 0.0
    %1238 = vmatprep.subr.mxu0 0.0
    %1239 = vmatpush1.xpose.msra.mxu0 0.0
    %1240 = vmatprep.mubr.f32.mxu0 0.0
    %1241 = vmatmul.mubr.f32.gmra.mrb[0].mxu0 %v1172
    %v1242 = vpop.f32.mrb[0].mxu0
    %v1243 = vadd.f32 0.0, %v1242
    %v1244 = vpop.f32.mrb[0].mxu0
    %1245 = vdwg.mxu0
    %v1246 = vmul.f32 %v1243, 0.25
    %v1247 = vadd.f32 %v1246, %v577
    %v1248 = vsel %vm579, %v1247, -inf
    %1249 = vmax.xlane.f32.xlu0 %v1248
    %v1250 = vpop.xlane.xlu0 %1249
    %v1251 = vsub.f32 %v1247, %v1250
    %v1252 = vmul.f32 %v1251, 1.442695
    %v1253 = vpow.pop %v1252
    %v1254 = vsel %vm579, %v1253, 0.0
    %1255 = vadd.xlane.f32.xlu0 %v1254
    %v1256 = vpop.xlane.xlu0 %1255
    %v1257 = vrcp.pop %v1256
    %v1258 = vmul.f32 %v1253, %v1257
    %1259 = vrot.lane.b32.xlu0 %v294, 96
    %v1260 = vpop.permute.xlu0 %1259
    %v1263 = vsel %vm579, %v1258, 0
    %1265 = vmatprep.subr.mxu0 0.0
    %1266 = vmatpush1.msra.mxu0 %v1260
    %1267 = vmatprep.subr.mxu0 0.0
    %1268 = vmatpush1.msra.mxu0 0.0
    %1269 = vmatprep.subr.mxu0 0.0
    %1270 = vmatpush1.msra.mxu0 0.0
    %1271 = vmatprep.subr.mxu0 0.0
    %1272 = vmatpush1.msra.mxu0 0.0
    %1273 = vmatprep.subr.mxu0 0.0
    %1274 = vmatpush1.msra.mxu0 0.0
    %1275 = vmatprep.subr.mxu0 0.0
    %1276 = vmatpush1.msra.mxu0 0.0
    %1277 = vmatprep.subr.mxu0 0.0
    %1278 = vmatpush1.msra.mxu0 0.0
    %1279 = vmatprep.subr.mxu0 0.0
    %1280 = vmatpush1.msra.mxu0 0.0
    %1281 = vmatprep.subr.mxu0 0.0
    %1282 = vmatpush1.msra.mxu0 0.0
    %1283 = vmatprep.subr.mxu0 0.0
    %1284 = vmatpush1.msra.mxu0 0.0
    %1285 = vmatprep.subr.mxu0 0.0
    %1286 = vmatpush1.msra.mxu0 0.0
    %1287 = vmatprep.subr.mxu0 0.0
    %1288 = vmatpush1.msra.mxu0 0.0
    %1289 = vmatprep.subr.mxu0 0.0
    %1290 = vmatpush1.msra.mxu0 0.0
    %1291 = vmatprep.subr.mxu0 0.0
    %1292 = vmatpush1.msra.mxu0 0.0
    %1293 = vmatprep.subr.mxu0 0.0
    %1294 = vmatpush1.msra.mxu0 0.0
    %1295 = vmatprep.subr.mxu0 0.0
    %1296 = vmatpush1.msra.mxu0 0.0
    %1297 = vmatprep.subr.mxu0 0.0
    %1298 = vmatpush1.msra.mxu0 0.0
    %1299 = vmatprep.subr.mxu0 0.0
    %1300 = vmatpush1.msra.mxu0 0.0
    %1301 = vmatprep.subr.mxu0 0.0
    %1302 = vmatpush1.msra.mxu0 0.0
    %1303 = vmatprep.subr.mxu0 0.0
    %1304 = vmatpush1.msra.mxu0 0.0
    %1305 = vmatprep.subr.mxu0 0.0
    %1306 = vmatpush1.msra.mxu0 0.0
    %1307 = vmatprep.subr.mxu0 0.0
    %1308 = vmatpush1.msra.mxu0 0.0
    %1309 = vmatprep.subr.mxu0 0.0
    %1310 = vmatpush1.msra.mxu0 0.0
    %1311 = vmatprep.subr.mxu0 0.0
    %1312 = vmatpush1.msra.mxu0 0.0
    %1313 = vmatprep.subr.mxu0 0.0
    %1314 = vmatpush1.msra.mxu0 0.0
    %1315 = vmatprep.subr.mxu0 0.0
    %1316 = vmatpush1.msra.mxu0 0.0
    %1317 = vmatprep.subr.mxu0 0.0
    %1318 = vmatpush1.msra.mxu0 0.0
    %1319 = vmatprep.subr.mxu0 0.0
    %1320 = vmatpush1.msra.mxu0 0.0
    %1321 = vmatprep.subr.mxu0 0.0
    %1322 = vmatpush1.msra.mxu0 0.0
    %1323 = vmatprep.subr.mxu0 0.0
    %1324 = vmatpush1.msra.mxu0 0.0
    %1325 = vmatprep.subr.mxu0 0.0
    %1326 = vmatpush1.msra.mxu0 0.0
    %1327 = vmatprep.subr.mxu0 0.0
    %1328 = vmatpush1.msra.mxu0 0.0
    %1329 = vmatprep.mubr.f32.mxu0 0.0
    %1330 = vmatmul.mubr.f32.gmra.mrb[0].mxu0 %v1263
    %v1331 = vpop.f32.mrb[0].mxu0
    %v1332 = vadd.f32 0.0, %v1331
    %v1333 = vpop.f32.mrb[0].mxu0
    %1334 = vdwg.mxu0
    %1335 = vrot.lane.b32.xlu0 %v388, 96
    %v1336 = vpop.permute.xlu0 %1335
    %1337 = vrot.lane.b32.xlu0 %v493, 32
    %v1338 = vpop.permute.xlu0 %1337
    %v1339 = vsel %vm497, %v1336, 0
    %v1341 = vsel %vm497, %v1338, 0
    %1343 = vmatprep.subr.mxu0 0.0
    %1344 = vmatpush1.xpose.msra.mxu0 %v1341
    %1345 = vmatprep.subr.mxu0 0.0
    %1346 = vmatpush1.xpose.msra.mxu0 0.0
    %1347 = vmatprep.subr.mxu0 0.0
    %1348 = vmatpush1.xpose.msra.mxu0 0.0
    %1349 = vmatprep.subr.mxu0 0.0
    %1350 = vmatpush1.xpose.msra.mxu0 0.0
    %1351 = vmatprep.subr.mxu0 0.0
    %1352 = vmatpush1.xpose.msra.mxu0 0.0
    %1353 = vmatprep.subr.mxu0 0.0
    %1354 = vmatpush1.xpose.msra.mxu0 0.0
    %1355 = vmatprep.subr.mxu0 0.0
    %1356 = vmatpush1.xpose.msra.mxu0 0.0
    %1357 = vmatprep.subr.mxu0 0.0
    %1358 = vmatpush1.xpose.msra.mxu0 0.0
    %1359 = vmatprep.subr.mxu0 0.0
    %1360 = vmatpush1.xpose.msra.mxu0 0.0
    %1361 = vmatprep.subr.mxu0 0.0
    %1362 = vmatpush1.xpose.msra.mxu0 0.0
    %1363 = vmatprep.subr.mxu0 0.0
    %1364 = vmatpush1.xpose.msra.mxu0 0.0
    %1365 = vmatprep.subr.mxu0 0.0
    %1366 = vmatpush1.xpose.msra.mxu0 0.0
    %1367 = vmatprep.subr.mxu0 0.0
    %1368 = vmatpush1.xpose.msra.mxu0 0.0
    %1369 = vmatprep.subr.mxu0 0.0
    %1370 = vmatpush1.xpose.msra.mxu0 0.0
    %1371 = vmatprep.subr.mxu0 0.0
    %1372 = vmatpush1.xpose.msra.mxu0 0.0
    %1373 = vmatprep.subr.mxu0 0.0
    %1374 = vmatpush1.xpose.msra.mxu0 0.0
    %1375 = vmatprep.subr.mxu0 0.0
    %1376 = vmatpush1.xpose.msra.mxu0 0.0
    %1377 = vmatprep.subr.mxu0 0.0
    %1378 = vmatpush1.xpose.msra.mxu0 0.0
    %1379 = vmatprep.subr.mxu0 0.0
    %1380 = vmatpush1.xpose.msra.mxu0 0.0
    %1381 = vmatprep.subr.mxu0 0.0
    %1382 = vmatpush1.xpose.msra.mxu0 0.0
    %1383 = vmatprep.subr.mxu0 0.0
    %1384 = vmatpush1.xpose.msra.mxu0 0.0
    %1385 = vmatprep.subr.mxu0 0.0
    %1386 = vmatpush1.xpose.msra.mxu0 0.0
    %1387 = vmatprep.subr.mxu0 0.0
    %1388 = vmatpush1.xpose.msra.mxu0 0.0
    %1389 = vmatprep.subr.mxu0 0.0
    %1390 = vmatpush1.xpose.msra.mxu0 0.0
    %1391 = vmatprep.subr.mxu0 0.0
    %1392 = vmatpush1.xpose.msra.mxu0 0.0
    %1393 = vmatprep.subr.mxu0 0.0
    %1394 = vmatpush1.xpose.msra.mxu0 0.0
    %1395 = vmatprep.subr.mxu0 0.0
    %1396 = vmatpush1.xpose.msra.mxu0 0.0
    %1397 = vmatprep.subr.mxu0 0.0
    %1398 = vmatpush1.xpose.msra.mxu0 0.0
    %1399 = vmatprep.subr.mxu0 0.0
    %1400 = vmatpush1.xpose.msra.mxu0 0.0
    %1401 = vmatprep.subr.mxu0 0.0
    %1402 = vmatpush1.xpose.msra.mxu0 0.0
    %1403 = vmatprep.subr.mxu0 0.0
    %1404 = vmatpush1.xpose.msra.mxu0 0.0
    %1405 = vmatprep.subr.mxu0 0.0
    %1406 = vmatpush1.xpose.msra.mxu0 0.0
    %1407 = vmatprep.mubr.f32.mxu0 0.0
    %1408 = vmatmul.mubr.f32.gmra.mrb[0].mxu0 %v1339
    %v1409 = vpop.f32.mrb[0].mxu0
    %v1410 = vadd.f32 0.0, %v1409
    %v1411 = vpop.f32.mrb[0].mxu0
    %1412 = vdwg.mxu0
    %v1413 = vmul.f32 %v1410, 0.25
    %v1414 = vadd.f32 %v1413, %v746
    %v1415 = vsel %vm579, %v1414, -inf
    %1416 = vmax.xlane.f32.xlu0 %v1415
    %v1417 = vpop.xlane.xlu0 %1416
    %v1418 = vsub.f32 %v1414, %v1417
    %v1419 = vmul.f32 %v1418, 1.442695
    %v1420 = vpow.pop %v1419
    %v1421 = vsel %vm579, %v1420, 0.0
    %1422 = vadd.xlane.f32.xlu0 %v1421
    %v1423 = vpop.xlane.xlu0 %1422
    %v1424 = vrcp.pop %v1423
    %v1425 = vmul.f32 %v1420, %v1424
    %1426 = vrot.lane.b32.xlu0 %v300, 96
    %v1427 = vpop.permute.xlu0 %1426
    %v1430 = vsel %vm579, %v1425, 0
    %1432 = vmatprep.subr.mxu0 0.0
    %1433 = vmatpush1.msra.mxu0 %v1427
    %1434 = vmatprep.subr.mxu0 0.0
    %1435 = vmatpush1.msra.mxu0 0.0
    %1436 = vmatprep.subr.mxu0 0.0
    %1437 = vmatpush1.msra.mxu0 0.0
    %1438 = vmatprep.subr.mxu0 0.0
    %1439 = vmatpush1.msra.mxu0 0.0
    %1440 = vmatprep.subr.mxu0 0.0
    %1441 = vmatpush1.msra.mxu0 0.0
    %1442 = vmatprep.subr.mxu0 0.0
    %1443 = vmatpush1.msra.mxu0 0.0
    %1444 = vmatprep.subr.mxu0 0.0
    %1445 = vmatpush1.msra.mxu0 0.0
    %1446 = vmatprep.subr.mxu0 0.0
    %1447 = vmatpush1.msra.mxu0 0.0
    %1448 = vmatprep.subr.mxu0 0.0
    %1449 = vmatpush1.msra.mxu0 0.0
    %1450 = vmatprep.subr.mxu0 0.0
    %1451 = vmatpush1.msra.mxu0 0.0
    %1452 = vmatprep.subr.mxu0 0.0
    %1453 = vmatpush1.msra.mxu0 0.0
    %1454 = vmatprep.subr.mxu0 0.0
    %1455 = vmatpush1.msra.mxu0 0.0
    %1456 = vmatprep.subr.mxu0 0.0
    %1457 = vmatpush1.msra.mxu0 0.0
    %1458 = vmatprep.subr.mxu0 0.0
    %1459 = vmatpush1.msra.mxu0 0.0
    %1460 = vmatprep.subr.mxu0 0.0
    %1461 = vmatpush1.msra.mxu0 0.0
    %1462 = vmatprep.subr.mxu0 0.0
    %1463 = vmatpush1.msra.mxu0 0.0
    %1464 = vmatprep.subr.mxu0 0.0
    %1465 = vmatpush1.msra.mxu0 0.0
    %1466 = vmatprep.subr.mxu0 0.0
    %1467 = vmatpush1.msra.mxu0 0.0
    %1468 = vmatprep.subr.mxu0 0.0
    %1469 = vmatpush1.msra.mxu0 0.0
    %1470 = vmatprep.subr.mxu0 0.0
    %1471 = vmatpush1.msra.mxu0 0.0
    %1472 = vmatprep.subr.mxu0 0.0
    %1473 = vmatpush1.msra.mxu0 0.0
    %1474 = vmatprep.subr.mxu0 0.0
    %1475 = vmatpush1.msra.mxu0 0.0
    %1476 = vmatprep.subr.mxu0 0.0
    %1477 = vmatpush1.msra.mxu0 0.0
    %1478 = vmatprep.subr.mxu0 0.0
    %1479 = vmatpush1.msra.mxu0 0.0
    %1480 = vmatprep.subr.mxu0 0.0
    %1481 = vmatpush1.msra.mxu0 0.0
    %1482 = vmatprep.subr.mxu0 0.0
    %1483 = vmatpush1.msra.mxu0 0.0
    %1484 = vmatprep.subr.mxu0 0.0
    %1485 = vmatpush1.msra.mxu0 0.0
    %1486 = vmatprep.subr.mxu0 0.0
    %1487 = vmatpush1.msra.mxu0 0.0
    %1488 = vmatprep.subr.mxu0 0.0
    %1489 = vmatpush1.msra.mxu0 0.0
    %1490 = vmatprep.subr.mxu0 0.0
    %1491 = vmatpush1.msra.mxu0 0.0
    %1492 = vmatprep.subr.mxu0 0.0
    %1493 = vmatpush1.msra.mxu0 0.0
    %1494 = vmatprep.subr.mxu0 0.0
    %1495 = vmatpush1.msra.mxu0 0.0
    %1496 = vmatprep.mubr.f32.mxu0 0.0
    %1497 = vmatmul.mubr.f32.gmra.mrb[0].mxu0 %v1430
    %v1498 = vpop.f32.mrb[0].mxu0
    %v1499 = vadd.f32 0.0, %v1498
    %v1500 = vpop.f32.mrb[0].mxu0
    %1501 = vdwg.mxu0
    %1502 = vrot.lane.b32.xlu0 %v387, 80
    %v1503 = vpop.permute.xlu0 %1502
    %1504 = vrot.lane.b32.xlu0 %v492, 16
    %v1505 = vpop.permute.xlu0 %1504
    %v1506 = vsel %vm497, %v1503, 0
    %v1508 = vsel %vm497, %v1505, 0
    %1510 = vmatprep.subr.mxu0 0.0
    %1511 = vmatpush1.xpose.msra.mxu0 %v1508
    %1512 = vmatprep.subr.mxu0 0.0
    %1513 = vmatpush1.xpose.msra.mxu0 0.0
    %1514 = vmatprep.subr.mxu0 0.0
    %1515 = vmatpush1.xpose.msra.mxu0 0.0
    %1516 = vmatprep.subr.mxu0 0.0
    %1517 = vmatpush1.xpose.msra.mxu0 0.0
    %1518 = vmatprep.subr.mxu0 0.0
    %1519 = vmatpush1.xpose.msra.mxu0 0.0
    %1520 = vmatprep.subr.mxu0 0.0
    %1521 = vmatpush1.xpose.msra.mxu0 0.0
    %1522 = vmatprep.subr.mxu0 0.0
    %1523 = vmatpush1.xpose.msra.mxu0 0.0
    %1524 = vmatprep.subr.mxu0 0.0
    %1525 = vmatpush1.xpose.msra.mxu0 0.0
    %1526 = vmatprep.subr.mxu0 0.0
    %1527 = vmatpush1.xpose.msra.mxu0 0.0
    %1528 = vmatprep.subr.mxu0 0.0
    %1529 = vmatpush1.xpose.msra.mxu0 0.0
    %1530 = vmatprep.subr.mxu0 0.0
    %1531 = vmatpush1.xpose.msra.mxu0 0.0
    %1532 = vmatprep.subr.mxu0 0.0
    %1533 = vmatpush1.xpose.msra.mxu0 0.0
    %1534 = vmatprep.subr.mxu0 0.0
    %1535 = vmatpush1.xpose.msra.mxu0 0.0
    %1536 = vmatprep.subr.mxu0 0.0
    %1537 = vmatpush1.xpose.msra.mxu0 0.0
    %1538 = vmatprep.subr.mxu0 0.0
    %1539 = vmatpush1.xpose.msra.mxu0 0.0
    %1540 = vmatprep.subr.mxu0 0.0
    %1541 = vmatpush1.xpose.msra.mxu0 0.0
    %1542 = vmatprep.subr.mxu0 0.0
    %1543 = vmatpush1.xpose.msra.mxu0 0.0
    %1544 = vmatprep.subr.mxu0 0.0
    %1545 = vmatpush1.xpose.msra.mxu0 0.0
    %1546 = vmatprep.subr.mxu0 0.0
    %1547 = vmatpush1.xpose.msra.mxu0 0.0
    %1548 = vmatprep.subr.mxu0 0.0
    %1549 = vmatpush1.xpose.msra.mxu0 0.0
    %1550 = vmatprep.subr.mxu0 0.0
    %1551 = vmatpush1.xpose.msra.mxu0 0.0
    %1552 = vmatprep.subr.mxu0 0.0
    %1553 = vmatpush1.xpose.msra.mxu0 0.0
    %1554 = vmatprep.subr.mxu0 0.0
    %1555 = vmatpush1.xpose.msra.mxu0 0.0
    %1556 = vmatprep.subr.mxu0 0.0
    %1557 = vmatpush1.xpose.msra.mxu0 0.0
    %1558 = vmatprep.subr.mxu0 0.0
    %1559 = vmatpush1.xpose.msra.mxu0 0.0
    %1560 = vmatprep.subr.mxu0 0.0
    %1561 = vmatpush1.xpose.msra.mxu0 0.0
    %1562 = vmatprep.subr.mxu0 0.0
    %1563 = vmatpush1.xpose.msra.mxu0 0.0
    %1564 = vmatprep.subr.mxu0 0.0
    %1565 = vmatpush1.xpose.msra.mxu0 0.0
    %1566 = vmatprep.subr.mxu0 0.0
    %1567 = vmatpush1.xpose.msra.mxu0 0.0
    %1568 = vmatprep.subr.mxu0 0.0
    %1569 = vmatpush1.xpose.msra.mxu0 0.0
    %1570 = vmatprep.subr.mxu0 0.0
    %1571 = vmatpush1.xpose.msra.mxu0 0.0
    %1572 = vmatprep.subr.mxu0 0.0
    %1573 = vmatpush1.xpose.msra.mxu0 0.0
    %1574 = vmatprep.mubr.f32.mxu0 0.0
    %1575 = vmatmul.mubr.f32.gmra.mrb[0].mxu0 %v1506
    %v1576 = vpop.f32.mrb[0].mxu0
    %v1577 = vadd.f32 0.0, %v1576
    %v1578 = vpop.f32.mrb[0].mxu0
    %1579 = vdwg.mxu0
    %v1580 = vmul.f32 %v1577, 0.25
    %v1581 = vadd.f32 %v1580, %v577
    %v1582 = vsel %vm579, %v1581, -inf
    %1583 = vmax.xlane.f32.xlu0 %v1582
    %v1584 = vpop.xlane.xlu0 %1583
    %v1585 = vsub.f32 %v1581, %v1584
    %v1586 = vmul.f32 %v1585, 1.442695
    %v1587 = vpow.pop %v1586
    %v1588 = vsel %vm579, %v1587, 0.0
    %1589 = vadd.xlane.f32.xlu0 %v1588
    %v1590 = vpop.xlane.xlu0 %1589
    %v1591 = vrcp.pop %v1590
    %v1592 = vmul.f32 %v1587, %v1591
    %1593 = vrot.lane.b32.xlu0 %v294, 80
    %v1594 = vpop.permute.xlu0 %1593
    %v1597 = vsel %vm579, %v1592, 0
    %1599 = vmatprep.subr.mxu0 0.0
    %1600 = vmatpush1.msra.mxu0 %v1594
    %1601 = vmatprep.subr.mxu0 0.0
    %1602 = vmatpush1.msra.mxu0 0.0
    %1603 = vmatprep.subr.mxu0 0.0
    %1604 = vmatpush1.msra.mxu0 0.0
    %1605 = vmatprep.subr.mxu0 0.0
    %1606 = vmatpush1.msra.mxu0 0.0
    %1607 = vmatprep.subr.mxu0 0.0
    %1608 = vmatpush1.msra.mxu0 0.0
    %1609 = vmatprep.subr.mxu0 0.0
    %1610 = vmatpush1.msra.mxu0 0.0
    %1611 = vmatprep.subr.mxu0 0.0
    %1612 = vmatpush1.msra.mxu0 0.0
    %1613 = vmatprep.subr.mxu0 0.0
    %1614 = vmatpush1.msra.mxu0 0.0
    %1615 = vmatprep.subr.mxu0 0.0
    %1616 = vmatpush1.msra.mxu0 0.0
    %1617 = vmatprep.subr.mxu0 0.0
    %1618 = vmatpush1.msra.mxu0 0.0
    %1619 = vmatprep.subr.mxu0 0.0
    %1620 = vmatpush1.msra.mxu0 0.0
    %1621 = vmatprep.subr.mxu0 0.0
    %1622 = vmatpush1.msra.mxu0 0.0
    %1623 = vmatprep.subr.mxu0 0.0
    %1624 = vmatpush1.msra.mxu0 0.0
    %1625 = vmatprep.subr.mxu0 0.0
    %1626 = vmatpush1.msra.mxu0 0.0
    %1627 = vmatprep.subr.mxu0 0.0
    %1628 = vmatpush1.msra.mxu0 0.0
    %1629 = vmatprep.subr.mxu0 0.0
    %1630 = vmatpush1.msra.mxu0 0.0
    %1631 = vmatprep.subr.mxu0 0.0
    %1632 = vmatpush1.msra.mxu0 0.0
    %1633 = vmatprep.subr.mxu0 0.0
    %1634 = vmatpush1.msra.mxu0 0.0
    %1635 = vmatprep.subr.mxu0 0.0
    %1636 = vmatpush1.msra.mxu0 0.0
    %1637 = vmatprep.subr.mxu0 0.0
    %1638 = vmatpush1.msra.mxu0 0.0
    %1639 = vmatprep.subr.mxu0 0.0
    %1640 = vmatpush1.msra.mxu0 0.0
    %1641 = vmatprep.subr.mxu0 0.0
    %1642 = vmatpush1.msra.mxu0 0.0
    %1643 = vmatprep.subr.mxu0 0.0
    %1644 = vmatpush1.msra.mxu0 0.0
    %1645 = vmatprep.subr.mxu0 0.0
    %1646 = vmatpush1.msra.mxu0 0.0
    %1647 = vmatprep.subr.mxu0 0.0
    %1648 = vmatpush1.msra.mxu0 0.0
    %1649 = vmatprep.subr.mxu0 0.0
    %1650 = vmatpush1.msra.mxu0 0.0
    %1651 = vmatprep.subr.mxu0 0.0
    %1652 = vmatpush1.msra.mxu0 0.0
    %1653 = vmatprep.subr.mxu0 0.0
    %1654 = vmatpush1.msra.mxu0 0.0
    %1655 = vmatprep.subr.mxu0 0.0
    %1656 = vmatpush1.msra.mxu0 0.0
    %1657 = vmatprep.subr.mxu0 0.0
    %1658 = vmatpush1.msra.mxu0 0.0
    %1659 = vmatprep.subr.mxu0 0.0
    %1660 = vmatpush1.msra.mxu0 0.0
    %1661 = vmatprep.subr.mxu0 0.0
    %1662 = vmatpush1.msra.mxu0 0.0
    %1663 = vmatprep.mubr.f32.mxu0 0.0
    %1664 = vmatmul.mubr.f32.gmra.mrb[0].mxu0 %v1597
    %v1665 = vpop.f32.mrb[0].mxu0
    %v1666 = vadd.f32 0.0, %v1665
    %v1667 = vpop.f32.mrb[0].mxu0
    %1668 = vdwg.mxu0
    %1669 = vrot.lane.b32.xlu0 %v388, 80
    %v1670 = vpop.permute.xlu0 %1669
    %1671 = vrot.lane.b32.xlu0 %v493, 16
    %v1672 = vpop.permute.xlu0 %1671
    %v1673 = vsel %vm497, %v1670, 0
    %v1675 = vsel %vm497, %v1672, 0
    %1677 = vmatprep.subr.mxu0 0.0
    %1678 = vmatpush1.xpose.msra.mxu0 %v1675
    %1679 = vmatprep.subr.mxu0 0.0
    %1680 = vmatpush1.xpose.msra.mxu0 0.0
    %1681 = vmatprep.subr.mxu0 0.0
    %1682 = vmatpush1.xpose.msra.mxu0 0.0
    %1683 = vmatprep.subr.mxu0 0.0
    %1684 = vmatpush1.xpose.msra.mxu0 0.0
    %1685 = vmatprep.subr.mxu0 0.0
    %1686 = vmatpush1.xpose.msra.mxu0 0.0
    %1687 = vmatprep.subr.mxu0 0.0
    %1688 = vmatpush1.xpose.msra.mxu0 0.0
    %1689 = vmatprep.subr.mxu0 0.0
    %1690 = vmatpush1.xpose.msra.mxu0 0.0
    %1691 = vmatprep.subr.mxu0 0.0
    %1692 = vmatpush1.xpose.msra.mxu0 0.0
    %1693 = vmatprep.subr.mxu0 0.0
    %1694 = vmatpush1.xpose.msra.mxu0 0.0
    %1695 = vmatprep.subr.mxu0 0.0
    %1696 = vmatpush1.xpose.msra.mxu0 0.0
    %1697 = vmatprep.subr.mxu0 0.0
    %1698 = vmatpush1.xpose.msra.mxu0 0.0
    %1699 = vmatprep.subr.mxu0 0.0
    %1700 = vmatpush1.xpose.msra.mxu0 0.0
    %1701 = vmatprep.subr.mxu0 0.0
    %1702 = vmatpush1.xpose.msra.mxu0 0.0
    %1703 = vmatprep.subr.mxu0 0.0
    %1704 = vmatpush1.xpose.msra.mxu0 0.0
    %1705 = vmatprep.subr.mxu0 0.0
    %1706 = vmatpush1.xpose.msra.mxu0 0.0
    %1707 = vmatprep.subr.mxu0 0.0
    %1708 = vmatpush1.xpose.msra.mxu0 0.0
    %1709 = vmatprep.subr.mxu0 0.0
    %1710 = vmatpush1.xpose.msra.mxu0 0.0
    %1711 = vmatprep.subr.mxu0 0.0
    %1712 = vmatpush1.xpose.msra.mxu0 0.0
    %1713 = vmatprep.subr.mxu0 0.0
    %1714 = vmatpush1.xpose.msra.mxu0 0.0
    %1715 = vmatprep.subr.mxu0 0.0
    %1716 = vmatpush1.xpose.msra.mxu0 0.0
    %1717 = vmatprep.subr.mxu0 0.0
    %1718 = vmatpush1.xpose.msra.mxu0 0.0
    %1719 = vmatprep.subr.mxu0 0.0
    %1720 = vmatpush1.xpose.msra.mxu0 0.0
    %1721 = vmatprep.subr.mxu0 0.0
    %1722 = vmatpush1.xpose.msra.mxu0 0.0
    %1723 = vmatprep.subr.mxu0 0.0
    %1724 = vmatpush1.xpose.msra.mxu0 0.0
    %1725 = vmatprep.subr.mxu0 0.0
    %1726 = vmatpush1.xpose.msra.mxu0 0.0
    %1727 = vmatprep.subr.mxu0 0.0
    %1728 = vmatpush1.xpose.msra.mxu0 0.0
    %1729 = vmatprep.subr.mxu0 0.0
    %1730 = vmatpush1.xpose.msra.mxu0 0.0
    %1731 = vmatprep.subr.mxu0 0.0
    %1732 = vmatpush1.xpose.msra.mxu0 0.0
    %1733 = vmatprep.subr.mxu0 0.0
    %1734 = vmatpush1.xpose.msra.mxu0 0.0
    %1735 = vmatprep.subr.mxu0 0.0
    %1736 = vmatpush1.xpose.msra.mxu0 0.0
    %1737 = vmatprep.subr.mxu0 0.0
    %1738 = vmatpush1.xpose.msra.mxu0 0.0
    %1739 = vmatprep.subr.mxu0 0.0
    %1740 = vmatpush1.xpose.msra.mxu0 0.0
    %1741 = vmatprep.mubr.f32.mxu0 0.0
    %1742 = vmatmul.mubr.f32.gmra.mrb[0].mxu0 %v1673
    %v1743 = vpop.f32.mrb[0].mxu0
    %v1744 = vadd.f32 0.0, %v1743
    %v1745 = vpop.f32.mrb[0].mxu0
    %1746 = vdwg.mxu0
    %v1747 = vmul.f32 %v1744, 0.25
    %v1748 = vadd.f32 %v1747, %v746
    %v1749 = vsel %vm579, %v1748, -inf
    %1750 = vmax.xlane.f32.xlu0 %v1749
    %v1751 = vpop.xlane.xlu0 %1750
    %v1752 = vsub.f32 %v1748, %v1751
    %v1753 = vmul.f32 %v1752, 1.442695
    %v1754 = vpow.pop %v1753
    %v1755 = vsel %vm579, %v1754, 0.0
    %1756 = vadd.xlane.f32.xlu0 %v1755
    %v1757 = vpop.xlane.xlu0 %1756
    %v1758 = vrcp.pop %v1757
    %v1759 = vmul.f32 %v1754, %v1758
    %1760 = vrot.lane.b32.xlu0 %v300, 80
    %v1761 = vpop.permute.xlu0 %1760
    %v1764 = vsel %vm579, %v1759, 0
    %1766 = vmatprep.subr.mxu0 0.0
    %1767 = vmatpush1.msra.mxu0 %v1761
    %1768 = vmatprep.subr.mxu0 0.0
    %1769 = vmatpush1.msra.mxu0 0.0
    %1770 = vmatprep.subr.mxu0 0.0
    %1771 = vmatpush1.msra.mxu0 0.0
    %1772 = vmatprep.subr.mxu0 0.0
    %1773 = vmatpush1.msra.mxu0 0.0
    %1774 = vmatprep.subr.mxu0 0.0
    %1775 = vmatpush1.msra.mxu0 0.0
    %1776 = vmatprep.subr.mxu0 0.0
    %1777 = vmatpush1.msra.mxu0 0.0
    %1778 = vmatprep.subr.mxu0 0.0
    %1779 = vmatpush1.msra.mxu0 0.0
    %1780 = vmatprep.subr.mxu0 0.0
    %1781 = vmatpush1.msra.mxu0 0.0
    %1782 = vmatprep.subr.mxu0 0.0
    %1783 = vmatpush1.msra.mxu0 0.0
    %1784 = vmatprep.subr.mxu0 0.0
    %1785 = vmatpush1.msra.mxu0 0.0
    %1786 = vmatprep.subr.mxu0 0.0
    %1787 = vmatpush1.msra.mxu0 0.0
    %1788 = vmatprep.subr.mxu0 0.0
    %1789 = vmatpush1.msra.mxu0 0.0
    %1790 = vmatprep.subr.mxu0 0.0
    %1791 = vmatpush1.msra.mxu0 0.0
    %1792 = vmatprep.subr.mxu0 0.0
    %1793 = vmatpush1.msra.mxu0 0.0
    %1794 = vmatprep.subr.mxu0 0.0
    %1795 = vmatpush1.msra.mxu0 0.0
    %1796 = vmatprep.subr.mxu0 0.0
    %1797 = vmatpush1.msra.mxu0 0.0
    %1798 = vmatprep.subr.mxu0 0.0
    %1799 = vmatpush1.msra.mxu0 0.0
    %1800 = vmatprep.subr.mxu0 0.0
    %1801 = vmatpush1.msra.mxu0 0.0
    %1802 = vmatprep.subr.mxu0 0.0
    %1803 = vmatpush1.msra.mxu0 0.0
    %1804 = vmatprep.subr.mxu0 0.0
    %1805 = vmatpush1.msra.mxu0 0.0
    %1806 = vmatprep.subr.mxu0 0.0
    %1807 = vmatpush1.msra.mxu0 0.0
    %1808 = vmatprep.subr.mxu0 0.0
    %1809 = vmatpush1.msra.mxu0 0.0
    %1810 = vmatprep.subr.mxu0 0.0
    %1811 = vmatpush1.msra.mxu0 0.0
    %1812 = vmatprep.subr.mxu0 0.0
    %1813 = vmatpush1.msra.mxu0 0.0
    %1814 = vmatprep.subr.mxu0 0.0
    %1815 = vmatpush1.msra.mxu0 0.0
    %1816 = vmatprep.subr.mxu0 0.0
    %1817 = vmatpush1.msra.mxu0 0.0
    %1818 = vmatprep.subr.mxu0 0.0
    %1819 = vmatpush1.msra.mxu0 0.0
    %1820 = vmatprep.subr.mxu0 0.0
    %1821 = vmatpush1.msra.mxu0 0.0
    %1822 = vmatprep.subr.mxu0 0.0
    %1823 = vmatpush1.msra.mxu0 0.0
    %1824 = vmatprep.subr.mxu0 0.0
    %1825 = vmatpush1.msra.mxu0 0.0
    %1826 = vmatprep.subr.mxu0 0.0
    %1827 = vmatpush1.msra.mxu0 0.0
    %1828 = vmatprep.subr.mxu0 0.0
    %1829 = vmatpush1.msra.mxu0 0.0
    %1830 = vmatprep.mubr.f32.mxu0 0.0
    %1831 = vmatmul.mubr.f32.gmra.mrb[0].mxu0 %v1764
    %v1832 = vpop.f32.mrb[0].mxu0
    %v1833 = vadd.f32 0.0, %v1832
    %v1834 = vpop.f32.mrb[0].mxu0
    %1835 = vdwg.mxu0
    %1838 = vrot.lane.b32.xlu0 %v997, 16
    %v1839 = vpop.permute.xlu0 %1838
    %1840 = vrot.lane.b32.xlu0 %v1165, 16
    %v1841 = vpop.permute.xlu0 %1840
    %1846 = vrot.lane.b32.xlu0 %v1332, 32
    %v1847 = vpop.permute.xlu0 %1846
    %1848 = vrot.lane.b32.xlu0 %v1499, 32
    %v1849 = vpop.permute.xlu0 %1848
    %1854 = vrot.lane.b32.xlu0 %v1666, 48
    %v1855 = vpop.permute.xlu0 %1854
    %1856 = vrot.lane.b32.xlu0 %v1833, 48
    %v1857 = vpop.permute.xlu0 %1856
    %v1860 = vsel %vm497, %v661, %v1839
    %v1861 = vsel %vm497, %v829, %v1841
    %vm1862 = vcmask 261120
    %v1863 = vsel %vm1862, %v1860, %v1847
    %v1864 = vsel %vm1862, %v1861, %v1849
    %vm1865 = vcmask 392192
    %v1866 = vsel %vm1865, %v1863, %v1855
    %v1867 = vsel %vm1865, %v1864, %v1857
    %v1868 = vld [vmem:[%s10] sm:$0xff]
    %v1869 = vld [vmem:[%s10 + $0x8] sm:$0xff]
    %v1870 = vld [vmem:[%s10 + $0x10] sm:$0xff]
    %v1871 = vld [vmem:[%s10 + $0x18] sm:$0xff]
    %v1872 = vld [vmem:[%s10 + $0x20] sm:$0xff]
    %v1873 = vld [vmem:[%s10 + $0x28] sm:$0xff]
    %v1874 = vld [vmem:[%s10 + $0x30] sm:$0xff]
    %v1875 = vld [vmem:[%s10 + $0x38] sm:$0xff]
    %v1877 = vsel %vm179, %v1866, 0
    %v1880 = vsel %vm179, %v1867, 0
    %1882 = vmatprep.subr.mxu0 0.0
    %1883 = vmatpush1.msra.mxu0 %v1868
    %1884 = vmatprep.subr.mxu0 0.0
    %1885 = vmatpush1.msra.mxu0 %v1869
    %1886 = vmatprep.subr.mxu0 0.0
    %1887 = vmatpush1.msra.mxu0 %v1870
    %1888 = vmatprep.subr.mxu0 0.0
    %1889 = vmatpush1.msra.mxu0 %v1871
    %1890 = vmatprep.subr.mxu0 0.0
    %1891 = vmatpush1.msra.mxu0 %v1872
    %1892 = vmatprep.subr.mxu0 0.0
    %1893 = vmatpush1.msra.mxu0 %v1873
    %1894 = vmatprep.subr.mxu0 0.0
    %1895 = vmatpush1.msra.mxu0 %v1874
    %1896 = vmatprep.subr.mxu0 0.0
    %1897 = vmatpush1.msra.mxu0 %v1875
    %1898 = vmatprep.subr.mxu0 0.0
    %1899 = vmatpush1.msra.mxu0 0.0
    %1900 = vmatprep.subr.mxu0 0.0
    %1901 = vmatpush1.msra.mxu0 0.0
    %1902 = vmatprep.subr.mxu0 0.0
    %1903 = vmatpush1.msra.mxu0 0.0
    %1904 = vmatprep.subr.mxu0 0.0
    %1905 = vmatpush1.msra.mxu0 0.0
    %1906 = vmatprep.subr.mxu0 0.0
    %1907 = vmatpush1.msra.mxu0 0.0
    %1908 = vmatprep.subr.mxu0 0.0
    %1909 = vmatpush1.msra.mxu0 0.0
    %1910 = vmatprep.subr.mxu0 0.0
    %1911 = vmatpush1.msra.mxu0 0.0
    %1912 = vmatprep.subr.mxu0 0.0
    %1913 = vmatpush1.msra.mxu0 0.0
    %1914 = vmatprep.subr.mxu0 0.0
    %1915 = vmatpush1.msra.mxu0 0.0
    %1916 = vmatprep.subr.mxu0 0.0
    %1917 = vmatpush1.msra.mxu0 0.0
    %1918 = vmatprep.subr.mxu0 0.0
    %1919 = vmatpush1.msra.mxu0 0.0
    %1920 = vmatprep.subr.mxu0 0.0
    %1921 = vmatpush1.msra.mxu0 0.0
    %1922 = vmatprep.subr.mxu0 0.0
    %1923 = vmatpush1.msra.mxu0 0.0
    %1924 = vmatprep.subr.mxu0 0.0
    %1925 = vmatpush1.msra.mxu0 0.0
    %1926 = vmatprep.subr.mxu0 0.0
    %1927 = vmatpush1.msra.mxu0 0.0
    %1928 = vmatprep.subr.mxu0 0.0
    %1929 = vmatpush1.msra.mxu0 0.0
    %1930 = vmatprep.subr.mxu0 0.0
    %1931 = vmatpush1.msra.mxu0 0.0
    %1932 = vmatprep.subr.mxu0 0.0
    %1933 = vmatpush1.msra.mxu0 0.0
    %1934 = vmatprep.subr.mxu0 0.0
    %1935 = vmatpush1.msra.mxu0 0.0
    %1936 = vmatprep.subr.mxu0 0.0
    %1937 = vmatpush1.msra.mxu0 0.0
    %1938 = vmatprep.subr.mxu0 0.0
    %1939 = vmatpush1.msra.mxu0 0.0
    %1940 = vmatprep.subr.mxu0 0.0
    %1941 = vmatpush1.msra.mxu0 0.0
    %1942 = vmatprep.subr.mxu0 0.0
    %1943 = vmatpush1.msra.mxu0 0.0
    %1944 = vmatprep.subr.mxu0 0.0
    %1945 = vmatpush1.msra.mxu0 0.0
    %1946 = vmatprep.mubr.f32.mxu0 0.0
    %1947 = vmatmul.mubr.f32.gmra.mrb[0].mxu0 %v1877
    %v1948 = vpop.f32.mrb[0].mxu0
    %v1949 = vadd.f32 0.0, %v1948
    %v1950 = vpop.f32.mrb[0].mxu0
    %1951 = vmatprep.mubr.f32.mxu0 0.0
    %1952 = vmatmul.mubr.f32.gmra.mrb[0].mxu0 %v1880
    %v1953 = vpop.f32.mrb[0].mxu0
    %v1954 = vadd.f32 0.0, %v1953
    %v1955 = vpop.f32.mrb[0].mxu0
    %1956 = vdwg.mxu0
    %v1957 = vadd.f32 %v153, %v1949
    %v1958 = vadd.f32 %v158, %v1954
    %v1959 = vld [vmem:[%s8] sm:$0x1]
    %v1960 = vmul.f32 %v1957, %v1957
    %v1961 = vmul.f32 %v1958, %v1958
    %v1962 = vsel %vm179, %v1960, 0.0
    %1963 = vadd.xlane.f32.xlu0 %v1962
    %v1964 = vpop.xlane.xlu0 %1963
    %v1965 = vsel %vm179, %v1961, 0.0
    %1966 = vadd.xlane.f32.xlu0 %v1965
    %v1967 = vpop.xlane.xlu0 %1966
    %v1968 = vmul.f32 %v1964, %v186
    %v1969 = vmul.f32 %v1967, %v186
    %v1970 = vadd.f32 %v1968, 1e-06
    %v1971 = vadd.f32 %v1969, 1e-06
    %v1972 = vrsqrt.pop %v1970
    %v1973 = vrsqrt.pop %v1971
    %v1974 = vmul.f32 %v1957, %v1972
    %v1975 = vmul.f32 %v1958, %v1973
    %v1977 = vlaneseq
    %v1978 = vshrl.u32 %v1977, 7
    %v1979 = vsub.s32 0, %v1978
    %v1980 = vrot.slane %v1959, %v1979
    %v1982 = vmul.f32 %v1974, %v1980
    %v1983 = vmul.f32 %v1975, %v1980
    %v1984 = vld [vmem:[%s11] sm:$0xff]
    %v1985 = vld [vmem:[%s11 + $0x8] sm:$0xff]
    %v1986 = vld [vmem:[%s11 + $0x10] sm:$0xff]
    %v1987 = vld [vmem:[%s11 + $0x18] sm:$0xff]
    %v1988 = vld [vmem:[%s11 + $0x20] sm:$0xff]
    %v1989 = vld [vmem:[%s11 + $0x28] sm:$0xff]
    %v1990 = vld [vmem:[%s11 + $0x30] sm:$0xff]
    %v1991 = vld [vmem:[%s11 + $0x38] sm:$0xff]
    %v1992 = vld [vmem:[%s11 + $0x40] sm:$0xff]
    %v1993 = vld [vmem:[%s11 + $0x48] sm:$0xff]
    %v1994 = vld [vmem:[%s11 + $0x50] sm:$0xff]
    %v1995 = vld [vmem:[%s11 + $0x58] sm:$0xff]
    %v1996 = vld [vmem:[%s11 + $0x60] sm:$0xff]
    %v1997 = vld [vmem:[%s11 + $0x68] sm:$0xff]
    %v1998 = vld [vmem:[%s11 + $0x70] sm:$0xff]
    %v1999 = vld [vmem:[%s11 + $0x78] sm:$0xff]
    %v2001 = vsel %vm179, %v1982, 0
    %v2004 = vsel %vm179, %v1983, 0
    %2006 = vmatprep.subr.mxu0 %v1985
    %2007 = vmatpush1.msra.mxu0 %v1984
    %2008 = vmatprep.subr.mxu0 %v1987
    %2009 = vmatpush1.msra.mxu0 %v1986
    %2010 = vmatprep.subr.mxu0 %v1989
    %2011 = vmatpush1.msra.mxu0 %v1988
    %2012 = vmatprep.subr.mxu0 %v1991
    %2013 = vmatpush1.msra.mxu0 %v1990
    %2014 = vmatprep.subr.mxu0 %v1993
    %2015 = vmatpush1.msra.mxu0 %v1992
    %2016 = vmatprep.subr.mxu0 %v1995
    %2017 = vmatpush1.msra.mxu0 %v1994
    %2018 = vmatprep.subr.mxu0 %v1997
    %2019 = vmatpush1.msra.mxu0 %v1996
    %2020 = vmatprep.subr.mxu0 %v1999
    %2021 = vmatpush1.msra.mxu0 %v1998
    %2022 = vmatprep.subr.mxu0 0.0
    %2023 = vmatpush1.msra.mxu0 0.0
    %2024 = vmatprep.subr.mxu0 0.0
    %2025 = vmatpush1.msra.mxu0 0.0
    %2026 = vmatprep.subr.mxu0 0.0
    %2027 = vmatpush1.msra.mxu0 0.0
    %2028 = vmatprep.subr.mxu0 0.0
    %2029 = vmatpush1.msra.mxu0 0.0
    %2030 = vmatprep.subr.mxu0 0.0
    %2031 = vmatpush1.msra.mxu0 0.0
    %2032 = vmatprep.subr.mxu0 0.0
    %2033 = vmatpush1.msra.mxu0 0.0
    %2034 = vmatprep.subr.mxu0 0.0
    %2035 = vmatpush1.msra.mxu0 0.0
    %2036 = vmatprep.subr.mxu0 0.0
    %2037 = vmatpush1.msra.mxu0 0.0
    %2038 = vmatprep.subr.mxu0 0.0
    %2039 = vmatpush1.msra.mxu0 0.0
    %2040 = vmatprep.subr.mxu0 0.0
    %2041 = vmatpush1.msra.mxu0 0.0
    %2042 = vmatprep.subr.mxu0 0.0
    %2043 = vmatpush1.msra.mxu0 0.0
    %2044 = vmatprep.subr.mxu0 0.0
    %2045 = vmatpush1.msra.mxu0 0.0
    %2046 = vmatprep.subr.mxu0 0.0
    %2047 = vmatpush1.msra.mxu0 0.0
    %2048 = vmatprep.subr.mxu0 0.0
    %2049 = vmatpush1.msra.mxu0 0.0
    %2050 = vmatprep.subr.mxu0 0.0
    %2051 = vmatpush1.msra.mxu0 0.0
    %2052 = vmatprep.subr.mxu0 0.0
    %2053 = vmatpush1.msra.mxu0 0.0
    %2054 = vmatprep.subr.mxu0 0.0
    %2055 = vmatpush1.msra.mxu0 0.0
    %2056 = vmatprep.subr.mxu0 0.0
    %2057 = vmatpush1.msra.mxu0 0.0
    %2058 = vmatprep.subr.mxu0 0.0
    %2059 = vmatpush1.msra.mxu0 0.0
    %2060 = vmatprep.subr.mxu0 0.0
    %2061 = vmatpush1.msra.mxu0 0.0
    %2062 = vmatprep.subr.mxu0 0.0
    %2063 = vmatpush1.msra.mxu0 0.0
    %2064 = vmatprep.subr.mxu0 0.0
    %2065 = vmatpush1.msra.mxu0 0.0
    %2066 = vmatprep.subr.mxu0 0.0
    %2067 = vmatpush1.msra.mxu0 0.0
    %2068 = vmatprep.subr.mxu0 0.0
    %2069 = vmatpush1.msra.mxu0 0.0
    %2070 = vmatprep.mubr.f32.mxu0 0.0
    %2071 = vmatmul.mubr.f32.gmra.mrb[0].mxu0 %v2001
    %v2072 = vpop.f32.mrb[0].mxu0
    %v2073 = vadd.f32 0.0, %v2072
    %v2074 = vpop.f32.mrb[0].mxu0
    %v2075 = vadd.f32 0.0, %v2074
    %2076 = vmatprep.mubr.f32.mxu0 0.0
    %2077 = vmatmul.mubr.f32.gmra.mrb[0].mxu0 %v2004
    %v2078 = vpop.f32.mrb[0].mxu0
    %v2079 = vadd.f32 0.0, %v2078
    %v2080 = vpop.f32.mrb[0].mxu0
    %v2081 = vadd.f32 0.0, %v2080
    %2082 = vdwg.mxu0
    %v2083 = vxor.u32 %v2073, 2147483648
    %v2084 = vxor.u32 %v2075, 2147483648
    %v2085 = vxor.u32 %v2079, 2147483648
    %v2086 = vxor.u32 %v2081, 2147483648
    %v2087 = vmul.f32 %v2083, 1.442695
    %v2088 = vpow.pop %v2087
    %v2089 = vmul.f32 %v2084, 1.442695
    %v2090 = vpow.pop %v2089
    %v2091 = vmul.f32 %v2085, 1.442695
    %v2092 = vpow.pop %v2091
    %v2093 = vmul.f32 %v2086, 1.442695
    %v2094 = vpow.pop %v2093
    %v2095 = vadd.f32 %v2088, 1.0
    %v2096 = vadd.f32 %v2090, 1.0
    %v2097 = vadd.f32 %v2092, 1.0
    %v2098 = vadd.f32 %v2094, 1.0
    %v2099 = vrcp.pop %v2095
    %v2100 = vmul.f32 1.0, %v2099
    %v2101 = vrcp.pop %v2096
    %v2102 = vmul.f32 1.0, %v2101
    %v2103 = vrcp.pop %v2097
    %v2104 = vmul.f32 1.0, %v2103
    %v2105 = vrcp.pop %v2098
    %v2106 = vmul.f32 1.0, %v2105
    %v2107 = vmul.f32 %v2073, %v2100
    %v2108 = vmul.f32 %v2075, %v2102
    %v2109 = vmul.f32 %v2079, %v2104
    %v2110 = vmul.f32 %v2081, %v2106
    %v2111 = vld [vmem:[%s12] sm:$0xff]
    %v2112 = vld [vmem:[%s12 + $0x8] sm:$0xff]
    %v2113 = vld [vmem:[%s12 + $0x10] sm:$0xff]
    %v2114 = vld [vmem:[%s12 + $0x18] sm:$0xff]
    %v2115 = vld [vmem:[%s12 + $0x20] sm:$0xff]
    %v2116 = vld [vmem:[%s12 + $0x28] sm:$0xff]
    %v2117 = vld [vmem:[%s12 + $0x30] sm:$0xff]
    %v2118 = vld [vmem:[%s12 + $0x38] sm:$0xff]
    %v2119 = vld [vmem:[%s12 + $0x40] sm:$0xff]
    %v2120 = vld [vmem:[%s12 + $0x48] sm:$0xff]
    %v2121 = vld [vmem:[%s12 + $0x50] sm:$0xff]
    %v2122 = vld [vmem:[%s12 + $0x58] sm:$0xff]
    %v2123 = vld [vmem:[%s12 + $0x60] sm:$0xff]
    %v2124 = vld [vmem:[%s12 + $0x68] sm:$0xff]
    %v2125 = vld [vmem:[%s12 + $0x70] sm:$0xff]
    %v2126 = vld [vmem:[%s12 + $0x78] sm:$0xff]
    %v2127 = vld [vmem:[%s12 + $0x80] sm:$0xff]
    %v2128 = vld [vmem:[%s12 + $0x88] sm:$0xff]
    %v2129 = vld [vmem:[%s12 + $0x90] sm:$0xff]
    %v2130 = vld [vmem:[%s12 + $0x98] sm:$0xff]
    %v2131 = vld [vmem:[%s12 + $0xa0] sm:$0xff]
    %v2132 = vld [vmem:[%s12 + $0xa8] sm:$0xff]
    %v2133 = vld [vmem:[%s12 + $0xb0] sm:$0xff]
    %v2134 = vld [vmem:[%s12 + $0xb8] sm:$0xff]
    %v2135 = vld [vmem:[%s12 + $0xc0] sm:$0xff]
    %v2136 = vld [vmem:[%s12 + $0xc8] sm:$0xff]
    %v2137 = vld [vmem:[%s12 + $0xd0] sm:$0xff]
    %v2138 = vld [vmem:[%s12 + $0xd8] sm:$0xff]
    %v2139 = vld [vmem:[%s12 + $0xe0] sm:$0xff]
    %v2140 = vld [vmem:[%s12 + $0xe8] sm:$0xff]
    %v2141 = vld [vmem:[%s12 + $0xf0] sm:$0xff]
    %v2142 = vld [vmem:[%s12 + $0xf8] sm:$0xff]
    %2143 = vmatprep.subr.mxu0 0.0
    %2144 = vmatpush1.msra.mxu0 %v2111
    %2145 = vmatprep.subr.mxu0 0.0
    %2146 = vmatpush1.msra.mxu0 %v2112
    %2147 = vmatprep.subr.mxu0 0.0
    %2148 = vmatpush1.msra.mxu0 %v2113
    %2149 = vmatprep.subr.mxu0 0.0
    %2150 = vmatpush1.msra.mxu0 %v2114
    %2151 = vmatprep.subr.mxu0 0.0
    %2152 = vmatpush1.msra.mxu0 %v2115
    %2153 = vmatprep.subr.mxu0 0.0
    %2154 = vmatpush1.msra.mxu0 %v2116
    %2155 = vmatprep.subr.mxu0 0.0
    %2156 = vmatpush1.msra.mxu0 %v2117
    %2157 = vmatprep.subr.mxu0 0.0
    %2158 = vmatpush1.msra.mxu0 %v2118
    %2159 = vmatprep.subr.mxu0 0.0
    %2160 = vmatpush1.msra.mxu0 %v2119
    %2161 = vmatprep.subr.mxu0 0.0
    %2162 = vmatpush1.msra.mxu0 %v2120
    %2163 = vmatprep.subr.mxu0 0.0
    %2164 = vmatpush1.msra.mxu0 %v2121
    %2165 = vmatprep.subr.mxu0 0.0
    %2166 = vmatpush1.msra.mxu0 %v2122
    %2167 = vmatprep.subr.mxu0 0.0
    %2168 = vmatpush1.msra.mxu0 %v2123
    %2169 = vmatprep.subr.mxu0 0.0
    %2170 = vmatpush1.msra.mxu0 %v2124
    %2171 = vmatprep.subr.mxu0 0.0
    %2172 = vmatpush1.msra.mxu0 %v2125
    %2173 = vmatprep.subr.mxu0 0.0
    %2174 = vmatpush1.msra.mxu0 %v2126
    %2175 = vmatprep.subr.mxu0 0.0
    %2176 = vmatpush1.msra.mxu0 %v2127
    %2177 = vmatprep.subr.mxu0 0.0
    %2178 = vmatpush1.msra.mxu0 %v2128
    %2179 = vmatprep.subr.mxu0 0.0
    %2180 = vmatpush1.msra.mxu0 %v2129
    %2181 = vmatprep.subr.mxu0 0.0
    %2182 = vmatpush1.msra.mxu0 %v2130
    %2183 = vmatprep.subr.mxu0 0.0
    %2184 = vmatpush1.msra.mxu0 %v2131
    %2185 = vmatprep.subr.mxu0 0.0
    %2186 = vmatpush1.msra.mxu0 %v2132
    %2187 = vmatprep.subr.mxu0 0.0
    %2188 = vmatpush1.msra.mxu0 %v2133
    %2189 = vmatprep.subr.mxu0 0.0
    %2190 = vmatpush1.msra.mxu0 %v2134
    %2191 = vmatprep.subr.mxu0 0.0
    %2192 = vmatpush1.msra.mxu0 %v2135
    %2193 = vmatprep.subr.mxu0 0.0
    %2194 = vmatpush1.msra.mxu0 %v2136
    %2195 = vmatprep.subr.mxu0 0.0
    %2196 = vmatpush1.msra.mxu0 %v2137
    %2197 = vmatprep.subr.mxu0 0.0
    %2198 = vmatpush1.msra.mxu0 %v2138
    %2199 = vmatprep.subr.mxu0 0.0
    %2200 = vmatpush1.msra.mxu0 %v2139
    %2201 = vmatprep.subr.mxu0 0.0
    %2202 = vmatpush1.msra.mxu0 %v2140
    %2203 = vmatprep.subr.mxu0 0.0
    %2204 = vmatpush1.msra.mxu0 %v2141
    %2205 = vmatprep.subr.mxu0 0.0
    %2206 = vmatpush1.msra.mxu0 %v2142
    %2207 = vmatprep.mubr.f32.mxu0 %v2108
    %2208 = vmatmul.mubr.f32.gmra.mrb[0].mxu0 %v2107
    %v2209 = vpop.f32.mrb[0].mxu0
    %v2210 = vadd.f32 0.0, %v2209
    %v2211 = vpop.f32.mrb[0].mxu0
    %2212 = vmatprep.mubr.f32.mxu0 %v2110
    %2213 = vmatmul.mubr.f32.gmra.mrb[0].mxu0 %v2109
    %v2214 = vpop.f32.mrb[0].mxu0
    %v2215 = vadd.f32 0.0, %v2214
    %v2216 = vpop.f32.mrb[0].mxu0
    %2217 = vdwg.mxu0
    %v2218 = vadd.f32 %v1957, %v2210
    %v2219 = vadd.f32 %v1958, %v2215
    %s2220 = scalar_lea.vmem %s7, 1
    %v2221 = vld [vmem:[%s2220] sm:$0x1]
    %v2222 = vmul.f32 %v2218, %v2218
    %v2223 = vmul.f32 %v2219, %v2219
    %v2224 = vsel %vm179, %v2222, 0.0
    %2225 = vadd.xlane.f32.xlu0 %v2224
    %v2226 = vpop.xlane.xlu0 %2225
    %v2227 = vsel %vm179, %v2223, 0.0
    %2228 = vadd.xlane.f32.xlu0 %v2227
    %v2229 = vpop.xlane.xlu0 %2228
    %v2230 = vmul.f32 %v2226, %v186
    %v2231 = vmul.f32 %v2229, %v186
    %v2232 = vadd.f32 %v2230, 1e-06
    %v2233 = vadd.f32 %v2231, 1e-06
    %v2234 = vrsqrt.pop %v2232
    %v2235 = vrsqrt.pop %v2233
    %v2236 = vmul.f32 %v2218, %v2234
    %v2237 = vmul.f32 %v2219, %v2235
    %v2239 = vlaneseq
    %v2240 = vshrl.u32 %v2239, 7
    %v2241 = vsub.s32 0, %v2240
    %v2242 = vrot.slane %v2221, %v2241
    %v2244 = vmul.f32 %v2236, %v2242
    %v2245 = vmul.f32 %v2237, %v2242
    %s2246 = scalar_lea.vmem %s9, 128
    %v2247 = vld [vmem:[%s2246] sm:$0xff]
    %v2248 = vld [vmem:[%s2246 + $0x8] sm:$0xff]
    %v2249 = vld [vmem:[%s2246 + $0x10] sm:$0xff]
    %v2250 = vld [vmem:[%s2246 + $0x18] sm:$0xff]
    %v2251 = vld [vmem:[%s2246 + $0x20] sm:$0xff]
    %v2252 = vld [vmem:[%s2246 + $0x28] sm:$0xff]
    %v2253 = vld [vmem:[%s2246 + $0x30] sm:$0xff]
    %v2254 = vld [vmem:[%s2246 + $0x38] sm:$0xff]
    %v2255 = vld [vmem:[%s2246 + $0x40] sm:$0xff]
    %v2256 = vld [vmem:[%s2246 + $0x48] sm:$0xff]
    %v2257 = vld [vmem:[%s2246 + $0x50] sm:$0xff]
    %v2258 = vld [vmem:[%s2246 + $0x58] sm:$0xff]
    %v2259 = vld [vmem:[%s2246 + $0x60] sm:$0xff]
    %v2260 = vld [vmem:[%s2246 + $0x68] sm:$0xff]
    %v2261 = vld [vmem:[%s2246 + $0x70] sm:$0xff]
    %v2262 = vld [vmem:[%s2246 + $0x78] sm:$0xff]
    %v2264 = vsel %vm179, %v2244, 0
    %v2267 = vsel %vm179, %v2245, 0
    %2269 = vmatprep.subr.mxu0 %v2248
    %2270 = vmatpush1.msra.mxu0 %v2247
    %2271 = vmatprep.subr.mxu0 %v2250
    %2272 = vmatpush1.msra.mxu0 %v2249
    %2273 = vmatprep.subr.mxu0 %v2252
    %2274 = vmatpush1.msra.mxu0 %v2251
    %2275 = vmatprep.subr.mxu0 %v2254
    %2276 = vmatpush1.msra.mxu0 %v2253
    %2277 = vmatprep.subr.mxu0 %v2256
    %2278 = vmatpush1.msra.mxu0 %v2255
    %2279 = vmatprep.subr.mxu0 %v2258
    %2280 = vmatpush1.msra.mxu0 %v2257
    %2281 = vmatprep.subr.mxu0 %v2260
    %2282 = vmatpush1.msra.mxu0 %v2259
    %2283 = vmatprep.subr.mxu0 %v2262
    %2284 = vmatpush1.msra.mxu0 %v2261
    %2285 = vmatprep.subr.mxu0 0.0
    %2286 = vmatpush1.msra.mxu0 0.0
    %2287 = vmatprep.subr.mxu0 0.0
    %2288 = vmatpush1.msra.mxu0 0.0
    %2289 = vmatprep.subr.mxu0 0.0
    %2290 = vmatpush1.msra.mxu0 0.0
    %2291 = vmatprep.subr.mxu0 0.0
    %2292 = vmatpush1.msra.mxu0 0.0
    %2293 = vmatprep.subr.mxu0 0.0
    %2294 = vmatpush1.msra.mxu0 0.0
    %2295 = vmatprep.subr.mxu0 0.0
    %2296 = vmatpush1.msra.mxu0 0.0
    %2297 = vmatprep.subr.mxu0 0.0
    %2298 = vmatpush1.msra.mxu0 0.0
    %2299 = vmatprep.subr.mxu0 0.0
    %2300 = vmatpush1.msra.mxu0 0.0
    %2301 = vmatprep.subr.mxu0 0.0
    %2302 = vmatpush1.msra.mxu0 0.0
    %2303 = vmatprep.subr.mxu0 0.0
    %2304 = vmatpush1.msra.mxu0 0.0
    %2305 = vmatprep.subr.mxu0 0.0
    %2306 = vmatpush1.msra.mxu0 0.0
    %2307 = vmatprep.subr.mxu0 0.0
    %2308 = vmatpush1.msra.mxu0 0.0
    %2309 = vmatprep.subr.mxu0 0.0
    %2310 = vmatpush1.msra.mxu0 0.0
    %2311 = vmatprep.subr.mxu0 0.0
    %2312 = vmatpush1.msra.mxu0 0.0
    %2313 = vmatprep.subr.mxu0 0.0
    %2314 = vmatpush1.msra.mxu0 0.0
    %2315 = vmatprep.subr.mxu0 0.0
    %2316 = vmatpush1.msra.mxu0 0.0
    %2317 = vmatprep.subr.mxu0 0.0
    %2318 = vmatpush1.msra.mxu0 0.0
    %2319 = vmatprep.subr.mxu0 0.0
    %2320 = vmatpush1.msra.mxu0 0.0
    %2321 = vmatprep.subr.mxu0 0.0
    %2322 = vmatpush1.msra.mxu0 0.0
    %2323 = vmatprep.subr.mxu0 0.0
    %2324 = vmatpush1.msra.mxu0 0.0
    %2325 = vmatprep.subr.mxu0 0.0
    %2326 = vmatpush1.msra.mxu0 0.0
    %2327 = vmatprep.subr.mxu0 0.0
    %2328 = vmatpush1.msra.mxu0 0.0
    %2329 = vmatprep.subr.mxu0 0.0
    %2330 = vmatpush1.msra.mxu0 0.0
    %2331 = vmatprep.subr.mxu0 0.0
    %2332 = vmatpush1.msra.mxu0 0.0
    %2333 = vmatprep.mubr.f32.mxu0 0.0
    %2334 = vmatmul.mubr.f32.gmra.mrb[0].mxu0 %v2264
    %v2335 = vpop.f32.mrb[0].mxu0
    %v2336 = vadd.f32 0.0, %v2335
    %v2337 = vpop.f32.mrb[0].mxu0
    %v2338 = vadd.f32 0.0, %v2337
    %2339 = vmatprep.mubr.f32.mxu0 0.0
    %2340 = vmatmul.mubr.f32.gmra.mrb[0].mxu0 %v2267
    %v2341 = vpop.f32.mrb[0].mxu0
    %v2342 = vadd.f32 0.0, %v2341
    %v2343 = vpop.f32.mrb[0].mxu0
    %v2344 = vadd.f32 0.0, %v2343
    %2345 = vdwg.mxu0
    %v2346 = vmul.f32 %v2336, %v164
    %v2347 = vmul.f32 %v2342, %v165
    %v2349 = vsel %vm179, %v2336, 0
    %v2352 = vsel %vm179, %v2342, 0
    %2354 = vmatprep.subr.mxu0 0.0
    %2355 = vmatpush1.msra.mxu0 %v168
    %2356 = vmatprep.subr.mxu0 0.0
    %2357 = vmatpush1.msra.mxu0 %v169
    %2358 = vmatprep.subr.mxu0 0.0
    %2359 = vmatpush1.msra.mxu0 %v170
    %2360 = vmatprep.subr.mxu0 0.0
    %2361 = vmatpush1.msra.mxu0 %v171
    %2362 = vmatprep.subr.mxu0 0.0
    %2363 = vmatpush1.msra.mxu0 %v172
    %2364 = vmatprep.subr.mxu0 0.0
    %2365 = vmatpush1.msra.mxu0 %v173
    %2366 = vmatprep.subr.mxu0 0.0
    %2367 = vmatpush1.msra.mxu0 %v174
    %2368 = vmatprep.subr.mxu0 0.0
    %2369 = vmatpush1.msra.mxu0 %v175
    %2370 = vmatprep.subr.mxu0 0.0
    %2371 = vmatpush1.msra.mxu0 0.0
    %2372 = vmatprep.subr.mxu0 0.0
    %2373 = vmatpush1.msra.mxu0 0.0
    %2374 = vmatprep.subr.mxu0 0.0
    %2375 = vmatpush1.msra.mxu0 0.0
    %2376 = vmatprep.subr.mxu0 0.0
    %2377 = vmatpush1.msra.mxu0 0.0
    %2378 = vmatprep.subr.mxu0 0.0
    %2379 = vmatpush1.msra.mxu0 0.0
    %2380 = vmatprep.subr.mxu0 0.0
    %2381 = vmatpush1.msra.mxu0 0.0
    %2382 = vmatprep.subr.mxu0 0.0
    %2383 = vmatpush1.msra.mxu0 0.0
    %2384 = vmatprep.subr.mxu0 0.0
    %2385 = vmatpush1.msra.mxu0 0.0
    %2386 = vmatprep.subr.mxu0 0.0
    %2387 = vmatpush1.msra.mxu0 0.0
    %2388 = vmatprep.subr.mxu0 0.0
    %2389 = vmatpush1.msra.mxu0 0.0
    %2390 = vmatprep.subr.mxu0 0.0
    %2391 = vmatpush1.msra.mxu0 0.0
    %2392 = vmatprep.subr.mxu0 0.0
    %2393 = vmatpush1.msra.mxu0 0.0
    %2394 = vmatprep.subr.mxu0 0.0
    %2395 = vmatpush1.msra.mxu0 0.0
    %2396 = vmatprep.subr.mxu0 0.0
    %2397 = vmatpush1.msra.mxu0 0.0
    %2398 = vmatprep.subr.mxu0 0.0
    %2399 = vmatpush1.msra.mxu0 0.0
    %2400 = vmatprep.subr.mxu0 0.0
    %2401 = vmatpush1.msra.mxu0 0.0
    %2402 = vmatprep.subr.mxu0 0.0
    %2403 = vmatpush1.msra.mxu0 0.0
    %2404 = vmatprep.subr.mxu0 0.0
    %2405 = vmatpush1.msra.mxu0 0.0
    %2406 = vmatprep.subr.mxu0 0.0
    %2407 = vmatpush1.msra.mxu0 0.0
    %2408 = vmatprep.subr.mxu0 0.0
    %2409 = vmatpush1.msra.mxu0 0.0
    %2410 = vmatprep.subr.mxu0 0.0
    %2411 = vmatpush1.msra.mxu0 0.0
    %2412 = vmatprep.subr.mxu0 0.0
    %2413 = vmatpush1.msra.mxu0 0.0
    %2414 = vmatprep.subr.mxu0 0.0
    %2415 = vmatpush1.msra.mxu0 0.0
    %2416 = vmatprep.subr.mxu0 0.0
    %2417 = vmatpush1.msra.mxu0 0.0
    %2418 = vmatprep.mubr.f32.mxu0 0.0
    %2419 = vmatmul.mubr.f32.gmra.mrb[0].mxu0 %v2349
    %v2420 = vpop.f32.mrb[0].mxu0
    %v2421 = vadd.f32 0.0, %v2420
    %v2422 = vpop.f32.mrb[0].mxu0
    %2423 = vmatprep.mubr.f32.mxu0 0.0
    %2424 = vmatmul.mubr.f32.gmra.mrb[0].mxu0 %v2352
    %v2425 = vpop.f32.mrb[0].mxu0
    %v2426 = vadd.f32 0.0, %v2425
    %v2427 = vpop.f32.mrb[0].mxu0
    %2428 = vdwg.mxu0
    %v2429 = vmul.f32 %v2421, %v166
    %v2430 = vmul.f32 %v2426, %v167
    %v2431 = vadd.f32 %v2346, %v2429
    %v2432 = vadd.f32 %v2347, %v2430
    %v2433 = vmul.f32 %v2336, %v392
    %v2434 = vmul.f32 %v2342, %v394
    %2435 = vrot.lane.b32.xlu0 %v2336, 64
    %v2436 = vpop.permute.xlu0 %2435
    %2437 = vrot.lane.b32.xlu0 %v2342, 64
    %v2438 = vpop.permute.xlu0 %2437
    %v2439 = vsel %vm179, %v2436, 0
    %v2441 = vsel %vm179, %v2438, 0
    %2443 = vmatprep.subr.mxu0 0.0
    %2444 = vmatpush1.msra.mxu0 %v168
    %2445 = vmatprep.subr.mxu0 0.0
    %2446 = vmatpush1.msra.mxu0 %v169
    %2447 = vmatprep.subr.mxu0 0.0
    %2448 = vmatpush1.msra.mxu0 %v170
    %2449 = vmatprep.subr.mxu0 0.0
    %2450 = vmatpush1.msra.mxu0 %v171
    %2451 = vmatprep.subr.mxu0 0.0
    %2452 = vmatpush1.msra.mxu0 %v172
    %2453 = vmatprep.subr.mxu0 0.0
    %2454 = vmatpush1.msra.mxu0 %v173
    %2455 = vmatprep.subr.mxu0 0.0
    %2456 = vmatpush1.msra.mxu0 %v174
    %2457 = vmatprep.subr.mxu0 0.0
    %2458 = vmatpush1.msra.mxu0 %v175
    %2459 = vmatprep.subr.mxu0 0.0
    %2460 = vmatpush1.msra.mxu0 0.0
    %2461 = vmatprep.subr.mxu0 0.0
    %2462 = vmatpush1.msra.mxu0 0.0
    %2463 = vmatprep.subr.mxu0 0.0
    %2464 = vmatpush1.msra.mxu0 0.0
    %2465 = vmatprep.subr.mxu0 0.0
    %2466 = vmatpush1.msra.mxu0 0.0
    %2467 = vmatprep.subr.mxu0 0.0
    %2468 = vmatpush1.msra.mxu0 0.0
    %2469 = vmatprep.subr.mxu0 0.0
    %2470 = vmatpush1.msra.mxu0 0.0
    %2471 = vmatprep.subr.mxu0 0.0
    %2472 = vmatpush1.msra.mxu0 0.0
    %2473 = vmatprep.subr.mxu0 0.0
    %2474 = vmatpush1.msra.mxu0 0.0
    %2475 = vmatprep.subr.mxu0 0.0
    %2476 = vmatpush1.msra.mxu0 0.0
    %2477 = vmatprep.subr.mxu0 0.0
    %2478 = vmatpush1.msra.mxu0 0.0
    %2479 = vmatprep.subr.mxu0 0.0
    %2480 = vmatpush1.msra.mxu0 0.0
    %2481 = vmatprep.subr.mxu0 0.0
    %2482 = vmatpush1.msra.mxu0 0.0
    %2483 = vmatprep.subr.mxu0 0.0
    %2484 = vmatpush1.msra.mxu0 0.0
    %2485 = vmatprep.subr.mxu0 0.0
    %2486 = vmatpush1.msra.mxu0 0.0
    %2487 = vmatprep.subr.mxu0 0.0
    %2488 = vmatpush1.msra.mxu0 0.0
    %2489 = vmatprep.subr.mxu0 0.0
    %2490 = vmatpush1.msra.mxu0 0.0
    %2491 = vmatprep.subr.mxu0 0.0
    %2492 = vmatpush1.msra.mxu0 0.0
    %2493 = vmatprep.subr.mxu0 0.0
    %2494 = vmatpush1.msra.mxu0 0.0
    %2495 = vmatprep.subr.mxu0 0.0
    %2496 = vmatpush1.msra.mxu0 0.0
    %2497 = vmatprep.subr.mxu0 0.0
    %2498 = vmatpush1.msra.mxu0 0.0
    %2499 = vmatprep.subr.mxu0 0.0
    %2500 = vmatpush1.msra.mxu0 0.0
    %2501 = vmatprep.subr.mxu0 0.0
    %2502 = vmatpush1.msra.mxu0 0.0
    %2503 = vmatprep.subr.mxu0 0.0
    %2504 = vmatpush1.msra.mxu0 0.0
    %2505 = vmatprep.subr.mxu0 0.0
    %2506 = vmatpush1.msra.mxu0 0.0
    %2507 = vmatprep.mubr.f32.mxu0 0.0
    %2508 = vmatmul.mubr.f32.gmra.mrb[0].mxu0 %v2439
    %v2509 = vpop.f32.mrb[0].mxu0
    %v2510 = vadd.f32 0.0, %v2509
    %v2511 = vpop.f32.mrb[0].mxu0
    %2512 = vmatprep.mubr.f32.mxu0 0.0
    %2513 = vmatmul.mubr.f32.gmra.mrb[0].mxu0 %v2441
    %v2514 = vpop.f32.mrb[0].mxu0
    %v2515 = vadd.f32 0.0, %v2514
    %v2516 = vpop.f32.mrb[0].mxu0
    %2517 = vdwg.mxu0
    %v2518 = vmul.f32 %v2510, %v166
    %v2519 = vmul.f32 %v2515, %v167
    %2522 = vrot.lane.b32.xlu0 %v2518, 64
    %v2523 = vpop.permute.xlu0 %2522
    %2524 = vrot.lane.b32.xlu0 %v2519, 64
    %v2525 = vpop.permute.xlu0 %2524
    %v2528 = vadd.f32 %v2433, %v2523
    %v2529 = vadd.f32 %v2434, %v2525
    %2531 = vrot.lane.b32.xlu0 %v2528, 64
    %v2532 = vpop.permute.xlu0 %2531
    %v2534 = vsel %vm497, %v2431, 0
    %v2536 = vsel %vm497, %v2532, 0
    %2538 = vmatprep.subr.mxu0 0.0
    %2539 = vmatpush1.xpose.msra.mxu0 %v2536
    %2540 = vmatprep.subr.mxu0 0.0
    %2541 = vmatpush1.xpose.msra.mxu0 0.0
    %2542 = vmatprep.subr.mxu0 0.0
    %2543 = vmatpush1.xpose.msra.mxu0 0.0
    %2544 = vmatprep.subr.mxu0 0.0
    %2545 = vmatpush1.xpose.msra.mxu0 0.0
    %2546 = vmatprep.subr.mxu0 0.0
    %2547 = vmatpush1.xpose.msra.mxu0 0.0
    %2548 = vmatprep.subr.mxu0 0.0
    %2549 = vmatpush1.xpose.msra.mxu0 0.0
    %2550 = vmatprep.subr.mxu0 0.0
    %2551 = vmatpush1.xpose.msra.mxu0 0.0
    %2552 = vmatprep.subr.mxu0 0.0
    %2553 = vmatpush1.xpose.msra.mxu0 0.0
    %2554 = vmatprep.subr.mxu0 0.0
    %2555 = vmatpush1.xpose.msra.mxu0 0.0
    %2556 = vmatprep.subr.mxu0 0.0
    %2557 = vmatpush1.xpose.msra.mxu0 0.0
    %2558 = vmatprep.subr.mxu0 0.0
    %2559 = vmatpush1.xpose.msra.mxu0 0.0
    %2560 = vmatprep.subr.mxu0 0.0
    %2561 = vmatpush1.xpose.msra.mxu0 0.0
    %2562 = vmatprep.subr.mxu0 0.0
    %2563 = vmatpush1.xpose.msra.mxu0 0.0
    %2564 = vmatprep.subr.mxu0 0.0
    %2565 = vmatpush1.xpose.msra.mxu0 0.0
    %2566 = vmatprep.subr.mxu0 0.0
    %2567 = vmatpush1.xpose.msra.mxu0 0.0
    %2568 = vmatprep.subr.mxu0 0.0
    %2569 = vmatpush1.xpose.msra.mxu0 0.0
    %2570 = vmatprep.subr.mxu0 0.0
    %2571 = vmatpush1.xpose.msra.mxu0 0.0
    %2572 = vmatprep.subr.mxu0 0.0
    %2573 = vmatpush1.xpose.msra.mxu0 0.0
    %2574 = vmatprep.subr.mxu0 0.0
    %2575 = vmatpush1.xpose.msra.mxu0 0.0
    %2576 = vmatprep.subr.mxu0 0.0
    %2577 = vmatpush1.xpose.msra.mxu0 0.0
    %2578 = vmatprep.subr.mxu0 0.0
    %2579 = vmatpush1.xpose.msra.mxu0 0.0
    %2580 = vmatprep.subr.mxu0 0.0
    %2581 = vmatpush1.xpose.msra.mxu0 0.0
    %2582 = vmatprep.subr.mxu0 0.0
    %2583 = vmatpush1.xpose.msra.mxu0 0.0
    %2584 = vmatprep.subr.mxu0 0.0
    %2585 = vmatpush1.xpose.msra.mxu0 0.0
    %2586 = vmatprep.subr.mxu0 0.0
    %2587 = vmatpush1.xpose.msra.mxu0 0.0
    %2588 = vmatprep.subr.mxu0 0.0
    %2589 = vmatpush1.xpose.msra.mxu0 0.0
    %2590 = vmatprep.subr.mxu0 0.0
    %2591 = vmatpush1.xpose.msra.mxu0 0.0
    %2592 = vmatprep.subr.mxu0 0.0
    %2593 = vmatpush1.xpose.msra.mxu0 0.0
    %2594 = vmatprep.subr.mxu0 0.0
    %2595 = vmatpush1.xpose.msra.mxu0 0.0
    %2596 = vmatprep.subr.mxu0 0.0
    %2597 = vmatpush1.xpose.msra.mxu0 0.0
    %2598 = vmatprep.subr.mxu0 0.0
    %2599 = vmatpush1.xpose.msra.mxu0 0.0
    %2600 = vmatprep.subr.mxu0 0.0
    %2601 = vmatpush1.xpose.msra.mxu0 0.0
    %2602 = vmatprep.mubr.f32.mxu0 0.0
    %2603 = vmatmul.mubr.f32.gmra.mrb[0].mxu0 %v2534
    %v2604 = vpop.f32.mrb[0].mxu0
    %v2605 = vadd.f32 0.0, %v2604
    %v2606 = vpop.f32.mrb[0].mxu0
    %2607 = vdwg.mxu0
    %v2608 = vmul.f32 %v2605, 0.25
    %v2609 = vadd.f32 %v2608, %v577
    %v2610 = vsel %vm579, %v2609, -inf
    %2611 = vmax.xlane.f32.xlu0 %v2610
    %v2612 = vpop.xlane.xlu0 %2611
    %v2613 = vsub.f32 %v2609, %v2612
    %v2614 = vmul.f32 %v2613, 1.442695
    %v2615 = vpow.pop %v2614
    %v2616 = vsel %vm579, %v2615, 0.0
    %2617 = vadd.xlane.f32.xlu0 %v2616
    %v2618 = vpop.xlane.xlu0 %2617
    %v2619 = vrcp.pop %v2618
    %v2620 = vmul.f32 %v2615, %v2619
    %v2622 = vsel %vm579, %v2620, 0
    %2624 = vmatprep.subr.mxu0 0.0
    %2625 = vmatpush1.msra.mxu0 %v2338
    %2626 = vmatprep.subr.mxu0 0.0
    %2627 = vmatpush1.msra.mxu0 0.0
    %2628 = vmatprep.subr.mxu0 0.0
    %2629 = vmatpush1.msra.mxu0 0.0
    %2630 = vmatprep.subr.mxu0 0.0
    %2631 = vmatpush1.msra.mxu0 0.0
    %2632 = vmatprep.subr.mxu0 0.0
    %2633 = vmatpush1.msra.mxu0 0.0
    %2634 = vmatprep.subr.mxu0 0.0
    %2635 = vmatpush1.msra.mxu0 0.0
    %2636 = vmatprep.subr.mxu0 0.0
    %2637 = vmatpush1.msra.mxu0 0.0
    %2638 = vmatprep.subr.mxu0 0.0
    %2639 = vmatpush1.msra.mxu0 0.0
    %2640 = vmatprep.subr.mxu0 0.0
    %2641 = vmatpush1.msra.mxu0 0.0
    %2642 = vmatprep.subr.mxu0 0.0
    %2643 = vmatpush1.msra.mxu0 0.0
    %2644 = vmatprep.subr.mxu0 0.0
    %2645 = vmatpush1.msra.mxu0 0.0
    %2646 = vmatprep.subr.mxu0 0.0
    %2647 = vmatpush1.msra.mxu0 0.0
    %2648 = vmatprep.subr.mxu0 0.0
    %2649 = vmatpush1.msra.mxu0 0.0
    %2650 = vmatprep.subr.mxu0 0.0
    %2651 = vmatpush1.msra.mxu0 0.0
    %2652 = vmatprep.subr.mxu0 0.0
    %2653 = vmatpush1.msra.mxu0 0.0
    %2654 = vmatprep.subr.mxu0 0.0
    %2655 = vmatpush1.msra.mxu0 0.0
    %2656 = vmatprep.subr.mxu0 0.0
    %2657 = vmatpush1.msra.mxu0 0.0
    %2658 = vmatprep.subr.mxu0 0.0
    %2659 = vmatpush1.msra.mxu0 0.0
    %2660 = vmatprep.subr.mxu0 0.0
    %2661 = vmatpush1.msra.mxu0 0.0
    %2662 = vmatprep.subr.mxu0 0.0
    %2663 = vmatpush1.msra.mxu0 0.0
    %2664 = vmatprep.subr.mxu0 0.0
    %2665 = vmatpush1.msra.mxu0 0.0
    %2666 = vmatprep.subr.mxu0 0.0
    %2667 = vmatpush1.msra.mxu0 0.0
    %2668 = vmatprep.subr.mxu0 0.0
    %2669 = vmatpush1.msra.mxu0 0.0
    %2670 = vmatprep.subr.mxu0 0.0
    %2671 = vmatpush1.msra.mxu0 0.0
    %2672 = vmatprep.subr.mxu0 0.0
    %2673 = vmatpush1.msra.mxu0 0.0
    %2674 = vmatprep.subr.mxu0 0.0
    %2675 = vmatpush1.msra.mxu0 0.0
    %2676 = vmatprep.subr.mxu0 0.0
    %2677 = vmatpush1.msra.mxu0 0.0
    %2678 = vmatprep.subr.mxu0 0.0
    %2679 = vmatpush1.msra.mxu0 0.0
    %2680 = vmatprep.subr.mxu0 0.0
    %2681 = vmatpush1.msra.mxu0 0.0
    %2682 = vmatprep.subr.mxu0 0.0
    %2683 = vmatpush1.msra.mxu0 0.0
    %2684 = vmatprep.subr.mxu0 0.0
    %2685 = vmatpush1.msra.mxu0 0.0
    %2686 = vmatprep.subr.mxu0 0.0
    %2687 = vmatpush1.msra.mxu0 0.0
    %2688 = vmatprep.mubr.f32.mxu0 0.0
    %2689 = vmatmul.mubr.f32.gmra.mrb[0].mxu0 %v2622
    %v2690 = vpop.f32.mrb[0].mxu0
    %v2691 = vadd.f32 0.0, %v2690
    %v2692 = vpop.f32.mrb[0].mxu0
    %2693 = vdwg.mxu0
    %2695 = vrot.lane.b32.xlu0 %v2529, 64
    %v2696 = vpop.permute.xlu0 %2695
    %v2698 = vsel %vm497, %v2432, 0
    %v2700 = vsel %vm497, %v2696, 0
    %2702 = vmatprep.subr.mxu0 0.0
    %2703 = vmatpush1.xpose.msra.mxu0 %v2700
    %2704 = vmatprep.subr.mxu0 0.0
    %2705 = vmatpush1.xpose.msra.mxu0 0.0
    %2706 = vmatprep.subr.mxu0 0.0
    %2707 = vmatpush1.xpose.msra.mxu0 0.0
    %2708 = vmatprep.subr.mxu0 0.0
    %2709 = vmatpush1.xpose.msra.mxu0 0.0
    %2710 = vmatprep.subr.mxu0 0.0
    %2711 = vmatpush1.xpose.msra.mxu0 0.0
    %2712 = vmatprep.subr.mxu0 0.0
    %2713 = vmatpush1.xpose.msra.mxu0 0.0
    %2714 = vmatprep.subr.mxu0 0.0
    %2715 = vmatpush1.xpose.msra.mxu0 0.0
    %2716 = vmatprep.subr.mxu0 0.0
    %2717 = vmatpush1.xpose.msra.mxu0 0.0
    %2718 = vmatprep.subr.mxu0 0.0
    %2719 = vmatpush1.xpose.msra.mxu0 0.0
    %2720 = vmatprep.subr.mxu0 0.0
    %2721 = vmatpush1.xpose.msra.mxu0 0.0
    %2722 = vmatprep.subr.mxu0 0.0
    %2723 = vmatpush1.xpose.msra.mxu0 0.0
    %2724 = vmatprep.subr.mxu0 0.0
    %2725 = vmatpush1.xpose.msra.mxu0 0.0
    %2726 = vmatprep.subr.mxu0 0.0
    %2727 = vmatpush1.xpose.msra.mxu0 0.0
    %2728 = vmatprep.subr.mxu0 0.0
    %2729 = vmatpush1.xpose.msra.mxu0 0.0
    %2730 = vmatprep.subr.mxu0 0.0
    %2731 = vmatpush1.xpose.msra.mxu0 0.0
    %2732 = vmatprep.subr.mxu0 0.0
    %2733 = vmatpush1.xpose.msra.mxu0 0.0
    %2734 = vmatprep.subr.mxu0 0.0
    %2735 = vmatpush1.xpose.msra.mxu0 0.0
    %2736 = vmatprep.subr.mxu0 0.0
    %2737 = vmatpush1.xpose.msra.mxu0 0.0
    %2738 = vmatprep.subr.mxu0 0.0
    %2739 = vmatpush1.xpose.msra.mxu0 0.0
    %2740 = vmatprep.subr.mxu0 0.0
    %2741 = vmatpush1.xpose.msra.mxu0 0.0
    %2742 = vmatprep.subr.mxu0 0.0
    %2743 = vmatpush1.xpose.msra.mxu0 0.0
    %2744 = vmatprep.subr.mxu0 0.0
    %2745 = vmatpush1.xpose.msra.mxu0 0.0
    %2746 = vmatprep.subr.mxu0 0.0
    %2747 = vmatpush1.xpose.msra.mxu0 0.0
    %2748 = vmatprep.subr.mxu0 0.0
    %2749 = vmatpush1.xpose.msra.mxu0 0.0
    %2750 = vmatprep.subr.mxu0 0.0
    %2751 = vmatpush1.xpose.msra.mxu0 0.0
    %2752 = vmatprep.subr.mxu0 0.0
    %2753 = vmatpush1.xpose.msra.mxu0 0.0
    %2754 = vmatprep.subr.mxu0 0.0
    %2755 = vmatpush1.xpose.msra.mxu0 0.0
    %2756 = vmatprep.subr.mxu0 0.0
    %2757 = vmatpush1.xpose.msra.mxu0 0.0
    %2758 = vmatprep.subr.mxu0 0.0
    %2759 = vmatpush1.xpose.msra.mxu0 0.0
    %2760 = vmatprep.subr.mxu0 0.0
    %2761 = vmatpush1.xpose.msra.mxu0 0.0
    %2762 = vmatprep.subr.mxu0 0.0
    %2763 = vmatpush1.xpose.msra.mxu0 0.0
    %2764 = vmatprep.subr.mxu0 0.0
    %2765 = vmatpush1.xpose.msra.mxu0 0.0
    %2766 = vmatprep.mubr.f32.mxu0 0.0
    %2767 = vmatmul.mubr.f32.gmra.mrb[0].mxu0 %v2698
    %v2768 = vpop.f32.mrb[0].mxu0
    %v2769 = vadd.f32 0.0, %v2768
    %v2770 = vpop.f32.mrb[0].mxu0
    %2771 = vdwg.mxu0
    %v2772 = vmul.f32 %v2769, 0.25
    %v2773 = vadd.f32 %v2772, %v746
    %v2774 = vsel %vm579, %v2773, -inf
    %2775 = vmax.xlane.f32.xlu0 %v2774
    %v2776 = vpop.xlane.xlu0 %2775
    %v2777 = vsub.f32 %v2773, %v2776
    %v2778 = vmul.f32 %v2777, 1.442695
    %v2779 = vpow.pop %v2778
    %v2780 = vsel %vm579, %v2779, 0.0
    %2781 = vadd.xlane.f32.xlu0 %v2780
    %v2782 = vpop.xlane.xlu0 %2781
    %v2783 = vrcp.pop %v2782
    %v2784 = vmul.f32 %v2779, %v2783
    %v2786 = vsel %vm579, %v2784, 0
    %2788 = vmatprep.subr.mxu0 0.0
    %2789 = vmatpush1.msra.mxu0 %v2344
    %2790 = vmatprep.subr.mxu0 0.0
    %2791 = vmatpush1.msra.mxu0 0.0
    %2792 = vmatprep.subr.mxu0 0.0
    %2793 = vmatpush1.msra.mxu0 0.0
    %2794 = vmatprep.subr.mxu0 0.0
    %2795 = vmatpush1.msra.mxu0 0.0
    %2796 = vmatprep.subr.mxu0 0.0
    %2797 = vmatpush1.msra.mxu0 0.0
    %2798 = vmatprep.subr.mxu0 0.0
    %2799 = vmatpush1.msra.mxu0 0.0
    %2800 = vmatprep.subr.mxu0 0.0
    %2801 = vmatpush1.msra.mxu0 0.0
    %2802 = vmatprep.subr.mxu0 0.0
    %2803 = vmatpush1.msra.mxu0 0.0
    %2804 = vmatprep.subr.mxu0 0.0
    %2805 = vmatpush1.msra.mxu0 0.0
    %2806 = vmatprep.subr.mxu0 0.0
    %2807 = vmatpush1.msra.mxu0 0.0
    %2808 = vmatprep.subr.mxu0 0.0
    %2809 = vmatpush1.msra.mxu0 0.0
    %2810 = vmatprep.subr.mxu0 0.0
    %2811 = vmatpush1.msra.mxu0 0.0
    %2812 = vmatprep.subr.mxu0 0.0
    %2813 = vmatpush1.msra.mxu0 0.0
    %2814 = vmatprep.subr.mxu0 0.0
    %2815 = vmatpush1.msra.mxu0 0.0
    %2816 = vmatprep.subr.mxu0 0.0
    %2817 = vmatpush1.msra.mxu0 0.0
    %2818 = vmatprep.subr.mxu0 0.0
    %2819 = vmatpush1.msra.mxu0 0.0
    %2820 = vmatprep.subr.mxu0 0.0
    %2821 = vmatpush1.msra.mxu0 0.0
    %2822 = vmatprep.subr.mxu0 0.0
    %2823 = vmatpush1.msra.mxu0 0.0
    %2824 = vmatprep.subr.mxu0 0.0
    %2825 = vmatpush1.msra.mxu0 0.0
    %2826 = vmatprep.subr.mxu0 0.0
    %2827 = vmatpush1.msra.mxu0 0.0
    %2828 = vmatprep.subr.mxu0 0.0
    %2829 = vmatpush1.msra.mxu0 0.0
    %2830 = vmatprep.subr.mxu0 0.0
    %2831 = vmatpush1.msra.mxu0 0.0
    %2832 = vmatprep.subr.mxu0 0.0
    %2833 = vmatpush1.msra.mxu0 0.0
    %2834 = vmatprep.subr.mxu0 0.0
    %2835 = vmatpush1.msra.mxu0 0.0
    %2836 = vmatprep.subr.mxu0 0.0
    %2837 = vmatpush1.msra.mxu0 0.0
    %2838 = vmatprep.subr.mxu0 0.0
    %2839 = vmatpush1.msra.mxu0 0.0
    %2840 = vmatprep.subr.mxu0 0.0
    %2841 = vmatpush1.msra.mxu0 0.0
    %2842 = vmatprep.subr.mxu0 0.0
    %2843 = vmatpush1.msra.mxu0 0.0
    %2844 = vmatprep.subr.mxu0 0.0
    %2845 = vmatpush1.msra.mxu0 0.0
    %2846 = vmatprep.subr.mxu0 0.0
    %2847 = vmatpush1.msra.mxu0 0.0
    %2848 = vmatprep.subr.mxu0 0.0
    %2849 = vmatpush1.msra.mxu0 0.0
    %2850 = vmatprep.subr.mxu0 0.0
    %2851 = vmatpush1.msra.mxu0 0.0
    %2852 = vmatprep.mubr.f32.mxu0 0.0
    %2853 = vmatmul.mubr.f32.gmra.mrb[0].mxu0 %v2786
    %v2854 = vpop.f32.mrb[0].mxu0
    %v2855 = vadd.f32 0.0, %v2854
    %v2856 = vpop.f32.mrb[0].mxu0
    %2857 = vdwg.mxu0
    %2858 = vrot.lane.b32.xlu0 %v2431, 112
    %v2859 = vpop.permute.xlu0 %2858
    %2860 = vrot.lane.b32.xlu0 %v2528, 48
    %v2861 = vpop.permute.xlu0 %2860
    %v2862 = vsel %vm497, %v2859, 0
    %v2864 = vsel %vm497, %v2861, 0
    %2866 = vmatprep.subr.mxu0 0.0
    %2867 = vmatpush1.xpose.msra.mxu0 %v2864
    %2868 = vmatprep.subr.mxu0 0.0
    %2869 = vmatpush1.xpose.msra.mxu0 0.0
    %2870 = vmatprep.subr.mxu0 0.0
    %2871 = vmatpush1.xpose.msra.mxu0 0.0
    %2872 = vmatprep.subr.mxu0 0.0
    %2873 = vmatpush1.xpose.msra.mxu0 0.0
    %2874 = vmatprep.subr.mxu0 0.0
    %2875 = vmatpush1.xpose.msra.mxu0 0.0
    %2876 = vmatprep.subr.mxu0 0.0
    %2877 = vmatpush1.xpose.msra.mxu0 0.0
    %2878 = vmatprep.subr.mxu0 0.0
    %2879 = vmatpush1.xpose.msra.mxu0 0.0
    %2880 = vmatprep.subr.mxu0 0.0
    %2881 = vmatpush1.xpose.msra.mxu0 0.0
    %2882 = vmatprep.subr.mxu0 0.0
    %2883 = vmatpush1.xpose.msra.mxu0 0.0
    %2884 = vmatprep.subr.mxu0 0.0
    %2885 = vmatpush1.xpose.msra.mxu0 0.0
    %2886 = vmatprep.subr.mxu0 0.0
    %2887 = vmatpush1.xpose.msra.mxu0 0.0
    %2888 = vmatprep.subr.mxu0 0.0
    %2889 = vmatpush1.xpose.msra.mxu0 0.0
    %2890 = vmatprep.subr.mxu0 0.0
    %2891 = vmatpush1.xpose.msra.mxu0 0.0
    %2892 = vmatprep.subr.mxu0 0.0
    %2893 = vmatpush1.xpose.msra.mxu0 0.0
    %2894 = vmatprep.subr.mxu0 0.0
    %2895 = vmatpush1.xpose.msra.mxu0 0.0
    %2896 = vmatprep.subr.mxu0 0.0
    %2897 = vmatpush1.xpose.msra.mxu0 0.0
    %2898 = vmatprep.subr.mxu0 0.0
    %2899 = vmatpush1.xpose.msra.mxu0 0.0
    %2900 = vmatprep.subr.mxu0 0.0
    %2901 = vmatpush1.xpose.msra.mxu0 0.0
    %2902 = vmatprep.subr.mxu0 0.0
    %2903 = vmatpush1.xpose.msra.mxu0 0.0
    %2904 = vmatprep.subr.mxu0 0.0
    %2905 = vmatpush1.xpose.msra.mxu0 0.0
    %2906 = vmatprep.subr.mxu0 0.0
    %2907 = vmatpush1.xpose.msra.mxu0 0.0
    %2908 = vmatprep.subr.mxu0 0.0
    %2909 = vmatpush1.xpose.msra.mxu0 0.0
    %2910 = vmatprep.subr.mxu0 0.0
    %2911 = vmatpush1.xpose.msra.mxu0 0.0
    %2912 = vmatprep.subr.mxu0 0.0
    %2913 = vmatpush1.xpose.msra.mxu0 0.0
    %2914 = vmatprep.subr.mxu0 0.0
    %2915 = vmatpush1.xpose.msra.mxu0 0.0
    %2916 = vmatprep.subr.mxu0 0.0
    %2917 = vmatpush1.xpose.msra.mxu0 0.0
    %2918 = vmatprep.subr.mxu0 0.0
    %2919 = vmatpush1.xpose.msra.mxu0 0.0
    %2920 = vmatprep.subr.mxu0 0.0
    %2921 = vmatpush1.xpose.msra.mxu0 0.0
    %2922 = vmatprep.subr.mxu0 0.0
    %2923 = vmatpush1.xpose.msra.mxu0 0.0
    %2924 = vmatprep.subr.mxu0 0.0
    %2925 = vmatpush1.xpose.msra.mxu0 0.0
    %2926 = vmatprep.subr.mxu0 0.0
    %2927 = vmatpush1.xpose.msra.mxu0 0.0
    %2928 = vmatprep.subr.mxu0 0.0
    %2929 = vmatpush1.xpose.msra.mxu0 0.0
    %2930 = vmatprep.mubr.f32.mxu0 0.0
    %2931 = vmatmul.mubr.f32.gmra.mrb[0].mxu0 %v2862
    %v2932 = vpop.f32.mrb[0].mxu0
    %v2933 = vadd.f32 0.0, %v2932
    %v2934 = vpop.f32.mrb[0].mxu0
    %2935 = vdwg.mxu0
    %v2936 = vmul.f32 %v2933, 0.25
    %v2937 = vadd.f32 %v2936, %v577
    %v2938 = vsel %vm579, %v2937, -inf
    %2939 = vmax.xlane.f32.xlu0 %v2938
    %v2940 = vpop.xlane.xlu0 %2939
    %v2941 = vsub.f32 %v2937, %v2940
    %v2942 = vmul.f32 %v2941, 1.442695
    %v2943 = vpow.pop %v2942
    %v2944 = vsel %vm579, %v2943, 0.0
    %2945 = vadd.xlane.f32.xlu0 %v2944
    %v2946 = vpop.xlane.xlu0 %2945
    %v2947 = vrcp.pop %v2946
    %v2948 = vmul.f32 %v2943, %v2947
    %2950 = vrot.lane.b32.xlu0 %v2338, 112
    %v2951 = vpop.permute.xlu0 %2950
    %v2954 = vsel %vm579, %v2948, 0
    %2956 = vmatprep.subr.mxu0 0.0
    %2957 = vmatpush1.msra.mxu0 %v2951
    %2958 = vmatprep.subr.mxu0 0.0
    %2959 = vmatpush1.msra.mxu0 0.0
    %2960 = vmatprep.subr.mxu0 0.0
    %2961 = vmatpush1.msra.mxu0 0.0
    %2962 = vmatprep.subr.mxu0 0.0
    %2963 = vmatpush1.msra.mxu0 0.0
    %2964 = vmatprep.subr.mxu0 0.0
    %2965 = vmatpush1.msra.mxu0 0.0
    %2966 = vmatprep.subr.mxu0 0.0
    %2967 = vmatpush1.msra.mxu0 0.0
    %2968 = vmatprep.subr.mxu0 0.0
    %2969 = vmatpush1.msra.mxu0 0.0
    %2970 = vmatprep.subr.mxu0 0.0
    %2971 = vmatpush1.msra.mxu0 0.0
    %2972 = vmatprep.subr.mxu0 0.0
    %2973 = vmatpush1.msra.mxu0 0.0
    %2974 = vmatprep.subr.mxu0 0.0
    %2975 = vmatpush1.msra.mxu0 0.0
    %2976 = vmatprep.subr.mxu0 0.0
    %2977 = vmatpush1.msra.mxu0 0.0
    %2978 = vmatprep.subr.mxu0 0.0
    %2979 = vmatpush1.msra.mxu0 0.0
    %2980 = vmatprep.subr.mxu0 0.0
    %2981 = vmatpush1.msra.mxu0 0.0
    %2982 = vmatprep.subr.mxu0 0.0
    %2983 = vmatpush1.msra.mxu0 0.0
    %2984 = vmatprep.subr.mxu0 0.0
    %2985 = vmatpush1.msra.mxu0 0.0
    %2986 = vmatprep.subr.mxu0 0.0
    %2987 = vmatpush1.msra.mxu0 0.0
    %2988 = vmatprep.subr.mxu0 0.0
    %2989 = vmatpush1.msra.mxu0 0.0
    %2990 = vmatprep.subr.mxu0 0.0
    %2991 = vmatpush1.msra.mxu0 0.0
    %2992 = vmatprep.subr.mxu0 0.0
    %2993 = vmatpush1.msra.mxu0 0.0
    %2994 = vmatprep.subr.mxu0 0.0
    %2995 = vmatpush1.msra.mxu0 0.0
    %2996 = vmatprep.subr.mxu0 0.0
    %2997 = vmatpush1.msra.mxu0 0.0
    %2998 = vmatprep.subr.mxu0 0.0
    %2999 = vmatpush1.msra.mxu0 0.0
    %3000 = vmatprep.subr.mxu0 0.0
    %3001 = vmatpush1.msra.mxu0 0.0
    %3002 = vmatprep.subr.mxu0 0.0
    %3003 = vmatpush1.msra.mxu0 0.0
    %3004 = vmatprep.subr.mxu0 0.0
    %3005 = vmatpush1.msra.mxu0 0.0
    %3006 = vmatprep.subr.mxu0 0.0
    %3007 = vmatpush1.msra.mxu0 0.0
    %3008 = vmatprep.subr.mxu0 0.0
    %3009 = vmatpush1.msra.mxu0 0.0
    %3010 = vmatprep.subr.mxu0 0.0
    %3011 = vmatpush1.msra.mxu0 0.0
    %3012 = vmatprep.subr.mxu0 0.0
    %3013 = vmatpush1.msra.mxu0 0.0
    %3014 = vmatprep.subr.mxu0 0.0
    %3015 = vmatpush1.msra.mxu0 0.0
    %3016 = vmatprep.subr.mxu0 0.0
    %3017 = vmatpush1.msra.mxu0 0.0
    %3018 = vmatprep.subr.mxu0 0.0
    %3019 = vmatpush1.msra.mxu0 0.0
    %3020 = vmatprep.mubr.f32.mxu0 0.0
    %3021 = vmatmul.mubr.f32.gmra.mrb[0].mxu0 %v2954
    %v3022 = vpop.f32.mrb[0].mxu0
    %v3023 = vadd.f32 0.0, %v3022
    %v3024 = vpop.f32.mrb[0].mxu0
    %3025 = vdwg.mxu0
    %3026 = vrot.lane.b32.xlu0 %v2432, 112
    %v3027 = vpop.permute.xlu0 %3026
    %3028 = vrot.lane.b32.xlu0 %v2529, 48
    %v3029 = vpop.permute.xlu0 %3028
    %v3030 = vsel %vm497, %v3027, 0
    %v3032 = vsel %vm497, %v3029, 0
    %3034 = vmatprep.subr.mxu0 0.0
    %3035 = vmatpush1.xpose.msra.mxu0 %v3032
    %3036 = vmatprep.subr.mxu0 0.0
    %3037 = vmatpush1.xpose.msra.mxu0 0.0
    %3038 = vmatprep.subr.mxu0 0.0
    %3039 = vmatpush1.xpose.msra.mxu0 0.0
    %3040 = vmatprep.subr.mxu0 0.0
    %3041 = vmatpush1.xpose.msra.mxu0 0.0
    %3042 = vmatprep.subr.mxu0 0.0
    %3043 = vmatpush1.xpose.msra.mxu0 0.0
    %3044 = vmatprep.subr.mxu0 0.0
    %3045 = vmatpush1.xpose.msra.mxu0 0.0
    %3046 = vmatprep.subr.mxu0 0.0
    %3047 = vmatpush1.xpose.msra.mxu0 0.0
    %3048 = vmatprep.subr.mxu0 0.0
    %3049 = vmatpush1.xpose.msra.mxu0 0.0
    %3050 = vmatprep.subr.mxu0 0.0
    %3051 = vmatpush1.xpose.msra.mxu0 0.0
    %3052 = vmatprep.subr.mxu0 0.0
    %3053 = vmatpush1.xpose.msra.mxu0 0.0
    %3054 = vmatprep.subr.mxu0 0.0
    %3055 = vmatpush1.xpose.msra.mxu0 0.0
    %3056 = vmatprep.subr.mxu0 0.0
    %3057 = vmatpush1.xpose.msra.mxu0 0.0
    %3058 = vmatprep.subr.mxu0 0.0
    %3059 = vmatpush1.xpose.msra.mxu0 0.0
    %3060 = vmatprep.subr.mxu0 0.0
    %3061 = vmatpush1.xpose.msra.mxu0 0.0
    %3062 = vmatprep.subr.mxu0 0.0
    %3063 = vmatpush1.xpose.msra.mxu0 0.0
    %3064 = vmatprep.subr.mxu0 0.0
    %3065 = vmatpush1.xpose.msra.mxu0 0.0
    %3066 = vmatprep.subr.mxu0 0.0
    %3067 = vmatpush1.xpose.msra.mxu0 0.0
    %3068 = vmatprep.subr.mxu0 0.0
    %3069 = vmatpush1.xpose.msra.mxu0 0.0
    %3070 = vmatprep.subr.mxu0 0.0
    %3071 = vmatpush1.xpose.msra.mxu0 0.0
    %3072 = vmatprep.subr.mxu0 0.0
    %3073 = vmatpush1.xpose.msra.mxu0 0.0
    %3074 = vmatprep.subr.mxu0 0.0
    %3075 = vmatpush1.xpose.msra.mxu0 0.0
    %3076 = vmatprep.subr.mxu0 0.0
    %3077 = vmatpush1.xpose.msra.mxu0 0.0
    %3078 = vmatprep.subr.mxu0 0.0
    %3079 = vmatpush1.xpose.msra.mxu0 0.0
    %3080 = vmatprep.subr.mxu0 0.0
    %3081 = vmatpush1.xpose.msra.mxu0 0.0
    %3082 = vmatprep.subr.mxu0 0.0
    %3083 = vmatpush1.xpose.msra.mxu0 0.0
    %3084 = vmatprep.subr.mxu0 0.0
    %3085 = vmatpush1.xpose.msra.mxu0 0.0
    %3086 = vmatprep.subr.mxu0 0.0
    %3087 = vmatpush1.xpose.msra.mxu0 0.0
    %3088 = vmatprep.subr.mxu0 0.0
    %3089 = vmatpush1.xpose.msra.mxu0 0.0
    %3090 = vmatprep.subr.mxu0 0.0
    %3091 = vmatpush1.xpose.msra.mxu0 0.0
    %3092 = vmatprep.subr.mxu0 0.0
    %3093 = vmatpush1.xpose.msra.mxu0 0.0
    %3094 = vmatprep.subr.mxu0 0.0
    %3095 = vmatpush1.xpose.msra.mxu0 0.0
    %3096 = vmatprep.subr.mxu0 0.0
    %3097 = vmatpush1.xpose.msra.mxu0 0.0
    %3098 = vmatprep.mubr.f32.mxu0 0.0
    %3099 = vmatmul.mubr.f32.gmra.mrb[0].mxu0 %v3030
    %v3100 = vpop.f32.mrb[0].mxu0
    %v3101 = vadd.f32 0.0, %v3100
    %v3102 = vpop.f32.mrb[0].mxu0
    %3103 = vdwg.mxu0
    %v3104 = vmul.f32 %v3101, 0.25
    %v3105 = vadd.f32 %v3104, %v746
    %v3106 = vsel %vm579, %v3105, -inf
    %3107 = vmax.xlane.f32.xlu0 %v3106
    %v3108 = vpop.xlane.xlu0 %3107
    %v3109 = vsub.f32 %v3105, %v3108
    %v3110 = vmul.f32 %v3109, 1.442695
    %v3111 = vpow.pop %v3110
    %v3112 = vsel %vm579, %v3111, 0.0
    %3113 = vadd.xlane.f32.xlu0 %v3112
    %v3114 = vpop.xlane.xlu0 %3113
    %v3115 = vrcp.pop %v3114
    %v3116 = vmul.f32 %v3111, %v3115
    %3118 = vrot.lane.b32.xlu0 %v2344, 112
    %v3119 = vpop.permute.xlu0 %3118
    %v3122 = vsel %vm579, %v3116, 0
    %3124 = vmatprep.subr.mxu0 0.0
    %3125 = vmatpush1.msra.mxu0 %v3119
    %3126 = vmatprep.subr.mxu0 0.0
    %3127 = vmatpush1.msra.mxu0 0.0
    %3128 = vmatprep.subr.mxu0 0.0
    %3129 = vmatpush1.msra.mxu0 0.0
    %3130 = vmatprep.subr.mxu0 0.0
    %3131 = vmatpush1.msra.mxu0 0.0
    %3132 = vmatprep.subr.mxu0 0.0
    %3133 = vmatpush1.msra.mxu0 0.0
    %3134 = vmatprep.subr.mxu0 0.0
    %3135 = vmatpush1.msra.mxu0 0.0
    %3136 = vmatprep.subr.mxu0 0.0
    %3137 = vmatpush1.msra.mxu0 0.0
    %3138 = vmatprep.subr.mxu0 0.0
    %3139 = vmatpush1.msra.mxu0 0.0
    %3140 = vmatprep.subr.mxu0 0.0
    %3141 = vmatpush1.msra.mxu0 0.0
    %3142 = vmatprep.subr.mxu0 0.0
    %3143 = vmatpush1.msra.mxu0 0.0
    %3144 = vmatprep.subr.mxu0 0.0
    %3145 = vmatpush1.msra.mxu0 0.0
    %3146 = vmatprep.subr.mxu0 0.0
    %3147 = vmatpush1.msra.mxu0 0.0
    %3148 = vmatprep.subr.mxu0 0.0
    %3149 = vmatpush1.msra.mxu0 0.0
    %3150 = vmatprep.subr.mxu0 0.0
    %3151 = vmatpush1.msra.mxu0 0.0
    %3152 = vmatprep.subr.mxu0 0.0
    %3153 = vmatpush1.msra.mxu0 0.0
    %3154 = vmatprep.subr.mxu0 0.0
    %3155 = vmatpush1.msra.mxu0 0.0
    %3156 = vmatprep.subr.mxu0 0.0
    %3157 = vmatpush1.msra.mxu0 0.0
    %3158 = vmatprep.subr.mxu0 0.0
    %3159 = vmatpush1.msra.mxu0 0.0
    %3160 = vmatprep.subr.mxu0 0.0
    %3161 = vmatpush1.msra.mxu0 0.0
    %3162 = vmatprep.subr.mxu0 0.0
    %3163 = vmatpush1.msra.mxu0 0.0
    %3164 = vmatprep.subr.mxu0 0.0
    %3165 = vmatpush1.msra.mxu0 0.0
    %3166 = vmatprep.subr.mxu0 0.0
    %3167 = vmatpush1.msra.mxu0 0.0
    %3168 = vmatprep.subr.mxu0 0.0
    %3169 = vmatpush1.msra.mxu0 0.0
    %3170 = vmatprep.subr.mxu0 0.0
    %3171 = vmatpush1.msra.mxu0 0.0
    %3172 = vmatprep.subr.mxu0 0.0
    %3173 = vmatpush1.msra.mxu0 0.0
    %3174 = vmatprep.subr.mxu0 0.0
    %3175 = vmatpush1.msra.mxu0 0.0
    %3176 = vmatprep.subr.mxu0 0.0
    %3177 = vmatpush1.msra.mxu0 0.0
    %3178 = vmatprep.subr.mxu0 0.0
    %3179 = vmatpush1.msra.mxu0 0.0
    %3180 = vmatprep.subr.mxu0 0.0
    %3181 = vmatpush1.msra.mxu0 0.0
    %3182 = vmatprep.subr.mxu0 0.0
    %3183 = vmatpush1.msra.mxu0 0.0
    %3184 = vmatprep.subr.mxu0 0.0
    %3185 = vmatpush1.msra.mxu0 0.0
    %3186 = vmatprep.subr.mxu0 0.0
    %3187 = vmatpush1.msra.mxu0 0.0
    %3188 = vmatprep.mubr.f32.mxu0 0.0
    %3189 = vmatmul.mubr.f32.gmra.mrb[0].mxu0 %v3122
    %v3190 = vpop.f32.mrb[0].mxu0
    %v3191 = vadd.f32 0.0, %v3190
    %v3192 = vpop.f32.mrb[0].mxu0
    %3193 = vdwg.mxu0
    %3194 = vrot.lane.b32.xlu0 %v2431, 96
    %v3195 = vpop.permute.xlu0 %3194
    %3196 = vrot.lane.b32.xlu0 %v2528, 32
    %v3197 = vpop.permute.xlu0 %3196
    %v3198 = vsel %vm497, %v3195, 0
    %v3200 = vsel %vm497, %v3197, 0
    %3202 = vmatprep.subr.mxu0 0.0
    %3203 = vmatpush1.xpose.msra.mxu0 %v3200
    %3204 = vmatprep.subr.mxu0 0.0
    %3205 = vmatpush1.xpose.msra.mxu0 0.0
    %3206 = vmatprep.subr.mxu0 0.0
    %3207 = vmatpush1.xpose.msra.mxu0 0.0
    %3208 = vmatprep.subr.mxu0 0.0
    %3209 = vmatpush1.xpose.msra.mxu0 0.0
    %3210 = vmatprep.subr.mxu0 0.0
    %3211 = vmatpush1.xpose.msra.mxu0 0.0
    %3212 = vmatprep.subr.mxu0 0.0
    %3213 = vmatpush1.xpose.msra.mxu0 0.0
    %3214 = vmatprep.subr.mxu0 0.0
    %3215 = vmatpush1.xpose.msra.mxu0 0.0
    %3216 = vmatprep.subr.mxu0 0.0
    %3217 = vmatpush1.xpose.msra.mxu0 0.0
    %3218 = vmatprep.subr.mxu0 0.0
    %3219 = vmatpush1.xpose.msra.mxu0 0.0
    %3220 = vmatprep.subr.mxu0 0.0
    %3221 = vmatpush1.xpose.msra.mxu0 0.0
    %3222 = vmatprep.subr.mxu0 0.0
    %3223 = vmatpush1.xpose.msra.mxu0 0.0
    %3224 = vmatprep.subr.mxu0 0.0
    %3225 = vmatpush1.xpose.msra.mxu0 0.0
    %3226 = vmatprep.subr.mxu0 0.0
    %3227 = vmatpush1.xpose.msra.mxu0 0.0
    %3228 = vmatprep.subr.mxu0 0.0
    %3229 = vmatpush1.xpose.msra.mxu0 0.0
    %3230 = vmatprep.subr.mxu0 0.0
    %3231 = vmatpush1.xpose.msra.mxu0 0.0
    %3232 = vmatprep.subr.mxu0 0.0
    %3233 = vmatpush1.xpose.msra.mxu0 0.0
    %3234 = vmatprep.subr.mxu0 0.0
    %3235 = vmatpush1.xpose.msra.mxu0 0.0
    %3236 = vmatprep.subr.mxu0 0.0
    %3237 = vmatpush1.xpose.msra.mxu0 0.0
    %3238 = vmatprep.subr.mxu0 0.0
    %3239 = vmatpush1.xpose.msra.mxu0 0.0
    %3240 = vmatprep.subr.mxu0 0.0
    %3241 = vmatpush1.xpose.msra.mxu0 0.0
    %3242 = vmatprep.subr.mxu0 0.0
    %3243 = vmatpush1.xpose.msra.mxu0 0.0
    %3244 = vmatprep.subr.mxu0 0.0
    %3245 = vmatpush1.xpose.msra.mxu0 0.0
    %3246 = vmatprep.subr.mxu0 0.0
    %3247 = vmatpush1.xpose.msra.mxu0 0.0
    %3248 = vmatprep.subr.mxu0 0.0
    %3249 = vmatpush1.xpose.msra.mxu0 0.0
    %3250 = vmatprep.subr.mxu0 0.0
    %3251 = vmatpush1.xpose.msra.mxu0 0.0
    %3252 = vmatprep.subr.mxu0 0.0
    %3253 = vmatpush1.xpose.msra.mxu0 0.0
    %3254 = vmatprep.subr.mxu0 0.0
    %3255 = vmatpush1.xpose.msra.mxu0 0.0
    %3256 = vmatprep.subr.mxu0 0.0
    %3257 = vmatpush1.xpose.msra.mxu0 0.0
    %3258 = vmatprep.subr.mxu0 0.0
    %3259 = vmatpush1.xpose.msra.mxu0 0.0
    %3260 = vmatprep.subr.mxu0 0.0
    %3261 = vmatpush1.xpose.msra.mxu0 0.0
    %3262 = vmatprep.subr.mxu0 0.0
    %3263 = vmatpush1.xpose.msra.mxu0 0.0
    %3264 = vmatprep.subr.mxu0 0.0
    %3265 = vmatpush1.xpose.msra.mxu0 0.0
    %3266 = vmatprep.mubr.f32.mxu0 0.0
    %3267 = vmatmul.mubr.f32.gmra.mrb[0].mxu0 %v3198
    %v3268 = vpop.f32.mrb[0].mxu0
    %v3269 = vadd.f32 0.0, %v3268
    %v3270 = vpop.f32.mrb[0].mxu0
    %3271 = vdwg.mxu0
    %v3272 = vmul.f32 %v3269, 0.25
    %v3273 = vadd.f32 %v3272, %v577
    %v3274 = vsel %vm579, %v3273, -inf
    %3275 = vmax.xlane.f32.xlu0 %v3274
    %v3276 = vpop.xlane.xlu0 %3275
    %v3277 = vsub.f32 %v3273, %v3276
    %v3278 = vmul.f32 %v3277, 1.442695
    %v3279 = vpow.pop %v3278
    %v3280 = vsel %vm579, %v3279, 0.0
    %3281 = vadd.xlane.f32.xlu0 %v3280
    %v3282 = vpop.xlane.xlu0 %3281
    %v3283 = vrcp.pop %v3282
    %v3284 = vmul.f32 %v3279, %v3283
    %3285 = vrot.lane.b32.xlu0 %v2338, 96
    %v3286 = vpop.permute.xlu0 %3285
    %v3289 = vsel %vm579, %v3284, 0
    %3291 = vmatprep.subr.mxu0 0.0
    %3292 = vmatpush1.msra.mxu0 %v3286
    %3293 = vmatprep.subr.mxu0 0.0
    %3294 = vmatpush1.msra.mxu0 0.0
    %3295 = vmatprep.subr.mxu0 0.0
    %3296 = vmatpush1.msra.mxu0 0.0
    %3297 = vmatprep.subr.mxu0 0.0
    %3298 = vmatpush1.msra.mxu0 0.0
    %3299 = vmatprep.subr.mxu0 0.0
    %3300 = vmatpush1.msra.mxu0 0.0
    %3301 = vmatprep.subr.mxu0 0.0
    %3302 = vmatpush1.msra.mxu0 0.0
    %3303 = vmatprep.subr.mxu0 0.0
    %3304 = vmatpush1.msra.mxu0 0.0
    %3305 = vmatprep.subr.mxu0 0.0
    %3306 = vmatpush1.msra.mxu0 0.0
    %3307 = vmatprep.subr.mxu0 0.0
    %3308 = vmatpush1.msra.mxu0 0.0
    %3309 = vmatprep.subr.mxu0 0.0
    %3310 = vmatpush1.msra.mxu0 0.0
    %3311 = vmatprep.subr.mxu0 0.0
    %3312 = vmatpush1.msra.mxu0 0.0
    %3313 = vmatprep.subr.mxu0 0.0
    %3314 = vmatpush1.msra.mxu0 0.0
    %3315 = vmatprep.subr.mxu0 0.0
    %3316 = vmatpush1.msra.mxu0 0.0
    %3317 = vmatprep.subr.mxu0 0.0
    %3318 = vmatpush1.msra.mxu0 0.0
    %3319 = vmatprep.subr.mxu0 0.0
    %3320 = vmatpush1.msra.mxu0 0.0
    %3321 = vmatprep.subr.mxu0 0.0
    %3322 = vmatpush1.msra.mxu0 0.0
    %3323 = vmatprep.subr.mxu0 0.0
    %3324 = vmatpush1.msra.mxu0 0.0
    %3325 = vmatprep.subr.mxu0 0.0
    %3326 = vmatpush1.msra.mxu0 0.0
    %3327 = vmatprep.subr.mxu0 0.0
    %3328 = vmatpush1.msra.mxu0 0.0
    %3329 = vmatprep.subr.mxu0 0.0
    %3330 = vmatpush1.msra.mxu0 0.0
    %3331 = vmatprep.subr.mxu0 0.0
    %3332 = vmatpush1.msra.mxu0 0.0
    %3333 = vmatprep.subr.mxu0 0.0
    %3334 = vmatpush1.msra.mxu0 0.0
    %3335 = vmatprep.subr.mxu0 0.0
    %3336 = vmatpush1.msra.mxu0 0.0
    %3337 = vmatprep.subr.mxu0 0.0
    %3338 = vmatpush1.msra.mxu0 0.0
    %3339 = vmatprep.subr.mxu0 0.0
    %3340 = vmatpush1.msra.mxu0 0.0
    %3341 = vmatprep.subr.mxu0 0.0
    %3342 = vmatpush1.msra.mxu0 0.0
    %3343 = vmatprep.subr.mxu0 0.0
    %3344 = vmatpush1.msra.mxu0 0.0
    %3345 = vmatprep.subr.mxu0 0.0
    %3346 = vmatpush1.msra.mxu0 0.0
    %3347 = vmatprep.subr.mxu0 0.0
    %3348 = vmatpush1.msra.mxu0 0.0
    %3349 = vmatprep.subr.mxu0 0.0
    %3350 = vmatpush1.msra.mxu0 0.0
    %3351 = vmatprep.subr.mxu0 0.0
    %3352 = vmatpush1.msra.mxu0 0.0
    %3353 = vmatprep.subr.mxu0 0.0
    %3354 = vmatpush1.msra.mxu0 0.0
    %3355 = vmatprep.mubr.f32.mxu0 0.0
    %3356 = vmatmul.mubr.f32.gmra.mrb[0].mxu0 %v3289
    %v3357 = vpop.f32.mrb[0].mxu0
    %v3358 = vadd.f32 0.0, %v3357
    %v3359 = vpop.f32.mrb[0].mxu0
    %3360 = vdwg.mxu0
    %3361 = vrot.lane.b32.xlu0 %v2432, 96
    %v3362 = vpop.permute.xlu0 %3361
    %3363 = vrot.lane.b32.xlu0 %v2529, 32
    %v3364 = vpop.permute.xlu0 %3363
    %v3365 = vsel %vm497, %v3362, 0
    %v3367 = vsel %vm497, %v3364, 0
    %3369 = vmatprep.subr.mxu0 0.0
    %3370 = vmatpush1.xpose.msra.mxu0 %v3367
    %3371 = vmatprep.subr.mxu0 0.0
    %3372 = vmatpush1.xpose.msra.mxu0 0.0
    %3373 = vmatprep.subr.mxu0 0.0
    %3374 = vmatpush1.xpose.msra.mxu0 0.0
    %3375 = vmatprep.subr.mxu0 0.0
    %3376 = vmatpush1.xpose.msra.mxu0 0.0
    %3377 = vmatprep.subr.mxu0 0.0
    %3378 = vmatpush1.xpose.msra.mxu0 0.0
    %3379 = vmatprep.subr.mxu0 0.0
    %3380 = vmatpush1.xpose.msra.mxu0 0.0
    %3381 = vmatprep.subr.mxu0 0.0
    %3382 = vmatpush1.xpose.msra.mxu0 0.0
    %3383 = vmatprep.subr.mxu0 0.0
    %3384 = vmatpush1.xpose.msra.mxu0 0.0
    %3385 = vmatprep.subr.mxu0 0.0
    %3386 = vmatpush1.xpose.msra.mxu0 0.0
    %3387 = vmatprep.subr.mxu0 0.0
    %3388 = vmatpush1.xpose.msra.mxu0 0.0
    %3389 = vmatprep.subr.mxu0 0.0
    %3390 = vmatpush1.xpose.msra.mxu0 0.0
    %3391 = vmatprep.subr.mxu0 0.0
    %3392 = vmatpush1.xpose.msra.mxu0 0.0
    %3393 = vmatprep.subr.mxu0 0.0
    %3394 = vmatpush1.xpose.msra.mxu0 0.0
    %3395 = vmatprep.subr.mxu0 0.0
    %3396 = vmatpush1.xpose.msra.mxu0 0.0
    %3397 = vmatprep.subr.mxu0 0.0
    %3398 = vmatpush1.xpose.msra.mxu0 0.0
    %3399 = vmatprep.subr.mxu0 0.0
    %3400 = vmatpush1.xpose.msra.mxu0 0.0
    %3401 = vmatprep.subr.mxu0 0.0
    %3402 = vmatpush1.xpose.msra.mxu0 0.0
    %3403 = vmatprep.subr.mxu0 0.0
    %3404 = vmatpush1.xpose.msra.mxu0 0.0
    %3405 = vmatprep.subr.mxu0 0.0
    %3406 = vmatpush1.xpose.msra.mxu0 0.0
    %3407 = vmatprep.subr.mxu0 0.0
    %3408 = vmatpush1.xpose.msra.mxu0 0.0
    %3409 = vmatprep.subr.mxu0 0.0
    %3410 = vmatpush1.xpose.msra.mxu0 0.0
    %3411 = vmatprep.subr.mxu0 0.0
    %3412 = vmatpush1.xpose.msra.mxu0 0.0
    %3413 = vmatprep.subr.mxu0 0.0
    %3414 = vmatpush1.xpose.msra.mxu0 0.0
    %3415 = vmatprep.subr.mxu0 0.0
    %3416 = vmatpush1.xpose.msra.mxu0 0.0
    %3417 = vmatprep.subr.mxu0 0.0
    %3418 = vmatpush1.xpose.msra.mxu0 0.0
    %3419 = vmatprep.subr.mxu0 0.0
    %3420 = vmatpush1.xpose.msra.mxu0 0.0
    %3421 = vmatprep.subr.mxu0 0.0
    %3422 = vmatpush1.xpose.msra.mxu0 0.0
    %3423 = vmatprep.subr.mxu0 0.0
    %3424 = vmatpush1.xpose.msra.mxu0 0.0
    %3425 = vmatprep.subr.mxu0 0.0
    %3426 = vmatpush1.xpose.msra.mxu0 0.0
    %3427 = vmatprep.subr.mxu0 0.0
    %3428 = vmatpush1.xpose.msra.mxu0 0.0
    %3429 = vmatprep.subr.mxu0 0.0
    %3430 = vmatpush1.xpose.msra.mxu0 0.0
    %3431 = vmatprep.subr.mxu0 0.0
    %3432 = vmatpush1.xpose.msra.mxu0 0.0
    %3433 = vmatprep.mubr.f32.mxu0 0.0
    %3434 = vmatmul.mubr.f32.gmra.mrb[0].mxu0 %v3365
    %v3435 = vpop.f32.mrb[0].mxu0
    %v3436 = vadd.f32 0.0, %v3435
    %v3437 = vpop.f32.mrb[0].mxu0
    %3438 = vdwg.mxu0
    %v3439 = vmul.f32 %v3436, 0.25
    %v3440 = vadd.f32 %v3439, %v746
    %v3441 = vsel %vm579, %v3440, -inf
    %3442 = vmax.xlane.f32.xlu0 %v3441
    %v3443 = vpop.xlane.xlu0 %3442
    %v3444 = vsub.f32 %v3440, %v3443
    %v3445 = vmul.f32 %v3444, 1.442695
    %v3446 = vpow.pop %v3445
    %v3447 = vsel %vm579, %v3446, 0.0
    %3448 = vadd.xlane.f32.xlu0 %v3447
    %v3449 = vpop.xlane.xlu0 %3448
    %v3450 = vrcp.pop %v3449
    %v3451 = vmul.f32 %v3446, %v3450
    %3452 = vrot.lane.b32.xlu0 %v2344, 96
    %v3453 = vpop.permute.xlu0 %3452
    %v3456 = vsel %vm579, %v3451, 0
    %3458 = vmatprep.subr.mxu0 0.0
    %3459 = vmatpush1.msra.mxu0 %v3453
    %3460 = vmatprep.subr.mxu0 0.0
    %3461 = vmatpush1.msra.mxu0 0.0
    %3462 = vmatprep.subr.mxu0 0.0
    %3463 = vmatpush1.msra.mxu0 0.0
    %3464 = vmatprep.subr.mxu0 0.0
    %3465 = vmatpush1.msra.mxu0 0.0
    %3466 = vmatprep.subr.mxu0 0.0
    %3467 = vmatpush1.msra.mxu0 0.0
    %3468 = vmatprep.subr.mxu0 0.0
    %3469 = vmatpush1.msra.mxu0 0.0
    %3470 = vmatprep.subr.mxu0 0.0
    %3471 = vmatpush1.msra.mxu0 0.0
    %3472 = vmatprep.subr.mxu0 0.0
    %3473 = vmatpush1.msra.mxu0 0.0
    %3474 = vmatprep.subr.mxu0 0.0
    %3475 = vmatpush1.msra.mxu0 0.0
    %3476 = vmatprep.subr.mxu0 0.0
    %3477 = vmatpush1.msra.mxu0 0.0
    %3478 = vmatprep.subr.mxu0 0.0
    %3479 = vmatpush1.msra.mxu0 0.0
    %3480 = vmatprep.subr.mxu0 0.0
    %3481 = vmatpush1.msra.mxu0 0.0
    %3482 = vmatprep.subr.mxu0 0.0
    %3483 = vmatpush1.msra.mxu0 0.0
    %3484 = vmatprep.subr.mxu0 0.0
    %3485 = vmatpush1.msra.mxu0 0.0
    %3486 = vmatprep.subr.mxu0 0.0
    %3487 = vmatpush1.msra.mxu0 0.0
    %3488 = vmatprep.subr.mxu0 0.0
    %3489 = vmatpush1.msra.mxu0 0.0
    %3490 = vmatprep.subr.mxu0 0.0
    %3491 = vmatpush1.msra.mxu0 0.0
    %3492 = vmatprep.subr.mxu0 0.0
    %3493 = vmatpush1.msra.mxu0 0.0
    %3494 = vmatprep.subr.mxu0 0.0
    %3495 = vmatpush1.msra.mxu0 0.0
    %3496 = vmatprep.subr.mxu0 0.0
    %3497 = vmatpush1.msra.mxu0 0.0
    %3498 = vmatprep.subr.mxu0 0.0
    %3499 = vmatpush1.msra.mxu0 0.0
    %3500 = vmatprep.subr.mxu0 0.0
    %3501 = vmatpush1.msra.mxu0 0.0
    %3502 = vmatprep.subr.mxu0 0.0
    %3503 = vmatpush1.msra.mxu0 0.0
    %3504 = vmatprep.subr.mxu0 0.0
    %3505 = vmatpush1.msra.mxu0 0.0
    %3506 = vmatprep.subr.mxu0 0.0
    %3507 = vmatpush1.msra.mxu0 0.0
    %3508 = vmatprep.subr.mxu0 0.0
    %3509 = vmatpush1.msra.mxu0 0.0
    %3510 = vmatprep.subr.mxu0 0.0
    %3511 = vmatpush1.msra.mxu0 0.0
    %3512 = vmatprep.subr.mxu0 0.0
    %3513 = vmatpush1.msra.mxu0 0.0
    %3514 = vmatprep.subr.mxu0 0.0
    %3515 = vmatpush1.msra.mxu0 0.0
    %3516 = vmatprep.subr.mxu0 0.0
    %3517 = vmatpush1.msra.mxu0 0.0
    %3518 = vmatprep.subr.mxu0 0.0
    %3519 = vmatpush1.msra.mxu0 0.0
    %3520 = vmatprep.subr.mxu0 0.0
    %3521 = vmatpush1.msra.mxu0 0.0
    %3522 = vmatprep.mubr.f32.mxu0 0.0
    %3523 = vmatmul.mubr.f32.gmra.mrb[0].mxu0 %v3456
    %v3524 = vpop.f32.mrb[0].mxu0
    %v3525 = vadd.f32 0.0, %v3524
    %v3526 = vpop.f32.mrb[0].mxu0
    %3527 = vdwg.mxu0
    %3528 = vrot.lane.b32.xlu0 %v2431, 80
    %v3529 = vpop.permute.xlu0 %3528
    %3530 = vrot.lane.b32.xlu0 %v2528, 16
    %v3531 = vpop.permute.xlu0 %3530
    %v3532 = vsel %vm497, %v3529, 0
    %v3534 = vsel %vm497, %v3531, 0
    %3536 = vmatprep.subr.mxu0 0.0
    %3537 = vmatpush1.xpose.msra.mxu0 %v3534
    %3538 = vmatprep.subr.mxu0 0.0
    %3539 = vmatpush1.xpose.msra.mxu0 0.0
    %3540 = vmatprep.subr.mxu0 0.0
    %3541 = vmatpush1.xpose.msra.mxu0 0.0
    %3542 = vmatprep.subr.mxu0 0.0
    %3543 = vmatpush1.xpose.msra.mxu0 0.0
    %3544 = vmatprep.subr.mxu0 0.0
    %3545 = vmatpush1.xpose.msra.mxu0 0.0
    %3546 = vmatprep.subr.mxu0 0.0
    %3547 = vmatpush1.xpose.msra.mxu0 0.0
    %3548 = vmatprep.subr.mxu0 0.0
    %3549 = vmatpush1.xpose.msra.mxu0 0.0
    %3550 = vmatprep.subr.mxu0 0.0
    %3551 = vmatpush1.xpose.msra.mxu0 0.0
    %3552 = vmatprep.subr.mxu0 0.0
    %3553 = vmatpush1.xpose.msra.mxu0 0.0
    %3554 = vmatprep.subr.mxu0 0.0
    %3555 = vmatpush1.xpose.msra.mxu0 0.0
    %3556 = vmatprep.subr.mxu0 0.0
    %3557 = vmatpush1.xpose.msra.mxu0 0.0
    %3558 = vmatprep.subr.mxu0 0.0
    %3559 = vmatpush1.xpose.msra.mxu0 0.0
    %3560 = vmatprep.subr.mxu0 0.0
    %3561 = vmatpush1.xpose.msra.mxu0 0.0
    %3562 = vmatprep.subr.mxu0 0.0
    %3563 = vmatpush1.xpose.msra.mxu0 0.0
    %3564 = vmatprep.subr.mxu0 0.0
    %3565 = vmatpush1.xpose.msra.mxu0 0.0
    %3566 = vmatprep.subr.mxu0 0.0
    %3567 = vmatpush1.xpose.msra.mxu0 0.0
    %3568 = vmatprep.subr.mxu0 0.0
    %3569 = vmatpush1.xpose.msra.mxu0 0.0
    %3570 = vmatprep.subr.mxu0 0.0
    %3571 = vmatpush1.xpose.msra.mxu0 0.0
    %3572 = vmatprep.subr.mxu0 0.0
    %3573 = vmatpush1.xpose.msra.mxu0 0.0
    %3574 = vmatprep.subr.mxu0 0.0
    %3575 = vmatpush1.xpose.msra.mxu0 0.0
    %3576 = vmatprep.subr.mxu0 0.0
    %3577 = vmatpush1.xpose.msra.mxu0 0.0
    %3578 = vmatprep.subr.mxu0 0.0
    %3579 = vmatpush1.xpose.msra.mxu0 0.0
    %3580 = vmatprep.subr.mxu0 0.0
    %3581 = vmatpush1.xpose.msra.mxu0 0.0
    %3582 = vmatprep.subr.mxu0 0.0
    %3583 = vmatpush1.xpose.msra.mxu0 0.0
    %3584 = vmatprep.subr.mxu0 0.0
    %3585 = vmatpush1.xpose.msra.mxu0 0.0
    %3586 = vmatprep.subr.mxu0 0.0
    %3587 = vmatpush1.xpose.msra.mxu0 0.0
    %3588 = vmatprep.subr.mxu0 0.0
    %3589 = vmatpush1.xpose.msra.mxu0 0.0
    %3590 = vmatprep.subr.mxu0 0.0
    %3591 = vmatpush1.xpose.msra.mxu0 0.0
    %3592 = vmatprep.subr.mxu0 0.0
    %3593 = vmatpush1.xpose.msra.mxu0 0.0
    %3594 = vmatprep.subr.mxu0 0.0
    %3595 = vmatpush1.xpose.msra.mxu0 0.0
    %3596 = vmatprep.subr.mxu0 0.0
    %3597 = vmatpush1.xpose.msra.mxu0 0.0
    %3598 = vmatprep.subr.mxu0 0.0
    %3599 = vmatpush1.xpose.msra.mxu0 0.0
    %3600 = vmatprep.mubr.f32.mxu0 0.0
    %3601 = vmatmul.mubr.f32.gmra.mrb[0].mxu0 %v3532
    %v3602 = vpop.f32.mrb[0].mxu0
    %v3603 = vadd.f32 0.0, %v3602
    %v3604 = vpop.f32.mrb[0].mxu0
    %3605 = vdwg.mxu0
    %v3606 = vmul.f32 %v3603, 0.25
    %v3607 = vadd.f32 %v3606, %v577
    %v3608 = vsel %vm579, %v3607, -inf
    %3609 = vmax.xlane.f32.xlu0 %v3608
    %v3610 = vpop.xlane.xlu0 %3609
    %v3611 = vsub.f32 %v3607, %v3610
    %v3612 = vmul.f32 %v3611, 1.442695
    %v3613 = vpow.pop %v3612
    %v3614 = vsel %vm579, %v3613, 0.0
    %3615 = vadd.xlane.f32.xlu0 %v3614
    %v3616 = vpop.xlane.xlu0 %3615
    %v3617 = vrcp.pop %v3616
    %v3618 = vmul.f32 %v3613, %v3617
    %3619 = vrot.lane.b32.xlu0 %v2338, 80
    %v3620 = vpop.permute.xlu0 %3619
    %v3623 = vsel %vm579, %v3618, 0
    %3625 = vmatprep.subr.mxu0 0.0
    %3626 = vmatpush1.msra.mxu0 %v3620
    %3627 = vmatprep.subr.mxu0 0.0
    %3628 = vmatpush1.msra.mxu0 0.0
    %3629 = vmatprep.subr.mxu0 0.0
    %3630 = vmatpush1.msra.mxu0 0.0
    %3631 = vmatprep.subr.mxu0 0.0
    %3632 = vmatpush1.msra.mxu0 0.0
    %3633 = vmatprep.subr.mxu0 0.0
    %3634 = vmatpush1.msra.mxu0 0.0
    %3635 = vmatprep.subr.mxu0 0.0
    %3636 = vmatpush1.msra.mxu0 0.0
    %3637 = vmatprep.subr.mxu0 0.0
    %3638 = vmatpush1.msra.mxu0 0.0
    %3639 = vmatprep.subr.mxu0 0.0
    %3640 = vmatpush1.msra.mxu0 0.0
    %3641 = vmatprep.subr.mxu0 0.0
    %3642 = vmatpush1.msra.mxu0 0.0
    %3643 = vmatprep.subr.mxu0 0.0
    %3644 = vmatpush1.msra.mxu0 0.0
    %3645 = vmatprep.subr.mxu0 0.0
    %3646 = vmatpush1.msra.mxu0 0.0
    %3647 = vmatprep.subr.mxu0 0.0
    %3648 = vmatpush1.msra.mxu0 0.0
    %3649 = vmatprep.subr.mxu0 0.0
    %3650 = vmatpush1.msra.mxu0 0.0
    %3651 = vmatprep.subr.mxu0 0.0
    %3652 = vmatpush1.msra.mxu0 0.0
    %3653 = vmatprep.subr.mxu0 0.0
    %3654 = vmatpush1.msra.mxu0 0.0
    %3655 = vmatprep.subr.mxu0 0.0
    %3656 = vmatpush1.msra.mxu0 0.0
    %3657 = vmatprep.subr.mxu0 0.0
    %3658 = vmatpush1.msra.mxu0 0.0
    %3659 = vmatprep.subr.mxu0 0.0
    %3660 = vmatpush1.msra.mxu0 0.0
    %3661 = vmatprep.subr.mxu0 0.0
    %3662 = vmatpush1.msra.mxu0 0.0
    %3663 = vmatprep.subr.mxu0 0.0
    %3664 = vmatpush1.msra.mxu0 0.0
    %3665 = vmatprep.subr.mxu0 0.0
    %3666 = vmatpush1.msra.mxu0 0.0
    %3667 = vmatprep.subr.mxu0 0.0
    %3668 = vmatpush1.msra.mxu0 0.0
    %3669 = vmatprep.subr.mxu0 0.0
    %3670 = vmatpush1.msra.mxu0 0.0
    %3671 = vmatprep.subr.mxu0 0.0
    %3672 = vmatpush1.msra.mxu0 0.0
    %3673 = vmatprep.subr.mxu0 0.0
    %3674 = vmatpush1.msra.mxu0 0.0
    %3675 = vmatprep.subr.mxu0 0.0
    %3676 = vmatpush1.msra.mxu0 0.0
    %3677 = vmatprep.subr.mxu0 0.0
    %3678 = vmatpush1.msra.mxu0 0.0
    %3679 = vmatprep.subr.mxu0 0.0
    %3680 = vmatpush1.msra.mxu0 0.0
    %3681 = vmatprep.subr.mxu0 0.0
    %3682 = vmatpush1.msra.mxu0 0.0
    %3683 = vmatprep.subr.mxu0 0.0
    %3684 = vmatpush1.msra.mxu0 0.0
    %3685 = vmatprep.subr.mxu0 0.0
    %3686 = vmatpush1.msra.mxu0 0.0
    %3687 = vmatprep.subr.mxu0 0.0
    %3688 = vmatpush1.msra.mxu0 0.0
    %3689 = vmatprep.mubr.f32.mxu0 0.0
    %3690 = vmatmul.mubr.f32.gmra.mrb[0].mxu0 %v3623
    %v3691 = vpop.f32.mrb[0].mxu0
    %v3692 = vadd.f32 0.0, %v3691
    %v3693 = vpop.f32.mrb[0].mxu0
    %3694 = vdwg.mxu0
    %3695 = vrot.lane.b32.xlu0 %v2432, 80
    %v3696 = vpop.permute.xlu0 %3695
    %3697 = vrot.lane.b32.xlu0 %v2529, 16
    %v3698 = vpop.permute.xlu0 %3697
    %v3699 = vsel %vm497, %v3696, 0
    %v3701 = vsel %vm497, %v3698, 0
    %3703 = vmatprep.subr.mxu0 0.0
    %3704 = vmatpush1.xpose.msra.mxu0 %v3701
    %3705 = vmatprep.subr.mxu0 0.0
    %3706 = vmatpush1.xpose.msra.mxu0 0.0
    %3707 = vmatprep.subr.mxu0 0.0
    %3708 = vmatpush1.xpose.msra.mxu0 0.0
    %3709 = vmatprep.subr.mxu0 0.0
    %3710 = vmatpush1.xpose.msra.mxu0 0.0
    %3711 = vmatprep.subr.mxu0 0.0
    %3712 = vmatpush1.xpose.msra.mxu0 0.0
    %3713 = vmatprep.subr.mxu0 0.0
    %3714 = vmatpush1.xpose.msra.mxu0 0.0
    %3715 = vmatprep.subr.mxu0 0.0
    %3716 = vmatpush1.xpose.msra.mxu0 0.0
    %3717 = vmatprep.subr.mxu0 0.0
    %3718 = vmatpush1.xpose.msra.mxu0 0.0
    %3719 = vmatprep.subr.mxu0 0.0
    %3720 = vmatpush1.xpose.msra.mxu0 0.0
    %3721 = vmatprep.subr.mxu0 0.0
    %3722 = vmatpush1.xpose.msra.mxu0 0.0
    %3723 = vmatprep.subr.mxu0 0.0
    %3724 = vmatpush1.xpose.msra.mxu0 0.0
    %3725 = vmatprep.subr.mxu0 0.0
    %3726 = vmatpush1.xpose.msra.mxu0 0.0
    %3727 = vmatprep.subr.mxu0 0.0
    %3728 = vmatpush1.xpose.msra.mxu0 0.0
    %3729 = vmatprep.subr.mxu0 0.0
    %3730 = vmatpush1.xpose.msra.mxu0 0.0
    %3731 = vmatprep.subr.mxu0 0.0
    %3732 = vmatpush1.xpose.msra.mxu0 0.0
    %3733 = vmatprep.subr.mxu0 0.0
    %3734 = vmatpush1.xpose.msra.mxu0 0.0
    %3735 = vmatprep.subr.mxu0 0.0
    %3736 = vmatpush1.xpose.msra.mxu0 0.0
    %3737 = vmatprep.subr.mxu0 0.0
    %3738 = vmatpush1.xpose.msra.mxu0 0.0
    %3739 = vmatprep.subr.mxu0 0.0
    %3740 = vmatpush1.xpose.msra.mxu0 0.0
    %3741 = vmatprep.subr.mxu0 0.0
    %3742 = vmatpush1.xpose.msra.mxu0 0.0
    %3743 = vmatprep.subr.mxu0 0.0
    %3744 = vmatpush1.xpose.msra.mxu0 0.0
    %3745 = vmatprep.subr.mxu0 0.0
    %3746 = vmatpush1.xpose.msra.mxu0 0.0
    %3747 = vmatprep.subr.mxu0 0.0
    %3748 = vmatpush1.xpose.msra.mxu0 0.0
    %3749 = vmatprep.subr.mxu0 0.0
    %3750 = vmatpush1.xpose.msra.mxu0 0.0
    %3751 = vmatprep.subr.mxu0 0.0
    %3752 = vmatpush1.xpose.msra.mxu0 0.0
    %3753 = vmatprep.subr.mxu0 0.0
    %3754 = vmatpush1.xpose.msra.mxu0 0.0
    %3755 = vmatprep.subr.mxu0 0.0
    %3756 = vmatpush1.xpose.msra.mxu0 0.0
    %3757 = vmatprep.subr.mxu0 0.0
    %3758 = vmatpush1.xpose.msra.mxu0 0.0
    %3759 = vmatprep.subr.mxu0 0.0
    %3760 = vmatpush1.xpose.msra.mxu0 0.0
    %3761 = vmatprep.subr.mxu0 0.0
    %3762 = vmatpush1.xpose.msra.mxu0 0.0
    %3763 = vmatprep.subr.mxu0 0.0
    %3764 = vmatpush1.xpose.msra.mxu0 0.0
    %3765 = vmatprep.subr.mxu0 0.0
    %3766 = vmatpush1.xpose.msra.mxu0 0.0
    %3767 = vmatprep.mubr.f32.mxu0 0.0
    %3768 = vmatmul.mubr.f32.gmra.mrb[0].mxu0 %v3699
    %v3769 = vpop.f32.mrb[0].mxu0
    %v3770 = vadd.f32 0.0, %v3769
    %v3771 = vpop.f32.mrb[0].mxu0
    %3772 = vdwg.mxu0
    %v3773 = vmul.f32 %v3770, 0.25
    %v3774 = vadd.f32 %v3773, %v746
    %v3775 = vsel %vm579, %v3774, -inf
    %3776 = vmax.xlane.f32.xlu0 %v3775
    %v3777 = vpop.xlane.xlu0 %3776
    %v3778 = vsub.f32 %v3774, %v3777
    %v3779 = vmul.f32 %v3778, 1.442695
    %v3780 = vpow.pop %v3779
    %v3781 = vsel %vm579, %v3780, 0.0
    %3782 = vadd.xlane.f32.xlu0 %v3781
    %v3783 = vpop.xlane.xlu0 %3782
    %v3784 = vrcp.pop %v3783
    %v3785 = vmul.f32 %v3780, %v3784
    %3786 = vrot.lane.b32.xlu0 %v2344, 80
    %v3787 = vpop.permute.xlu0 %3786
    %v3790 = vsel %vm579, %v3785, 0
    %3792 = vmatprep.subr.mxu0 0.0
    %3793 = vmatpush1.msra.mxu0 %v3787
    %3794 = vmatprep.subr.mxu0 0.0
    %3795 = vmatpush1.msra.mxu0 0.0
    %3796 = vmatprep.subr.mxu0 0.0
    %3797 = vmatpush1.msra.mxu0 0.0
    %3798 = vmatprep.subr.mxu0 0.0
    %3799 = vmatpush1.msra.mxu0 0.0
    %3800 = vmatprep.subr.mxu0 0.0
    %3801 = vmatpush1.msra.mxu0 0.0
    %3802 = vmatprep.subr.mxu0 0.0
    %3803 = vmatpush1.msra.mxu0 0.0
    %3804 = vmatprep.subr.mxu0 0.0
    %3805 = vmatpush1.msra.mxu0 0.0
    %3806 = vmatprep.subr.mxu0 0.0
    %3807 = vmatpush1.msra.mxu0 0.0
    %3808 = vmatprep.subr.mxu0 0.0
    %3809 = vmatpush1.msra.mxu0 0.0
    %3810 = vmatprep.subr.mxu0 0.0
    %3811 = vmatpush1.msra.mxu0 0.0
    %3812 = vmatprep.subr.mxu0 0.0
    %3813 = vmatpush1.msra.mxu0 0.0
    %3814 = vmatprep.subr.mxu0 0.0
    %3815 = vmatpush1.msra.mxu0 0.0
    %3816 = vmatprep.subr.mxu0 0.0
    %3817 = vmatpush1.msra.mxu0 0.0
    %3818 = vmatprep.subr.mxu0 0.0
    %3819 = vmatpush1.msra.mxu0 0.0
    %3820 = vmatprep.subr.mxu0 0.0
    %3821 = vmatpush1.msra.mxu0 0.0
    %3822 = vmatprep.subr.mxu0 0.0
    %3823 = vmatpush1.msra.mxu0 0.0
    %3824 = vmatprep.subr.mxu0 0.0
    %3825 = vmatpush1.msra.mxu0 0.0
    %3826 = vmatprep.subr.mxu0 0.0
    %3827 = vmatpush1.msra.mxu0 0.0
    %3828 = vmatprep.subr.mxu0 0.0
    %3829 = vmatpush1.msra.mxu0 0.0
    %3830 = vmatprep.subr.mxu0 0.0
    %3831 = vmatpush1.msra.mxu0 0.0
    %3832 = vmatprep.subr.mxu0 0.0
    %3833 = vmatpush1.msra.mxu0 0.0
    %3834 = vmatprep.subr.mxu0 0.0
    %3835 = vmatpush1.msra.mxu0 0.0
    %3836 = vmatprep.subr.mxu0 0.0
    %3837 = vmatpush1.msra.mxu0 0.0
    %3838 = vmatprep.subr.mxu0 0.0
    %3839 = vmatpush1.msra.mxu0 0.0
    %3840 = vmatprep.subr.mxu0 0.0
    %3841 = vmatpush1.msra.mxu0 0.0
    %3842 = vmatprep.subr.mxu0 0.0
    %3843 = vmatpush1.msra.mxu0 0.0
    %3844 = vmatprep.subr.mxu0 0.0
    %3845 = vmatpush1.msra.mxu0 0.0
    %3846 = vmatprep.subr.mxu0 0.0
    %3847 = vmatpush1.msra.mxu0 0.0
    %3848 = vmatprep.subr.mxu0 0.0
    %3849 = vmatpush1.msra.mxu0 0.0
    %3850 = vmatprep.subr.mxu0 0.0
    %3851 = vmatpush1.msra.mxu0 0.0
    %3852 = vmatprep.subr.mxu0 0.0
    %3853 = vmatpush1.msra.mxu0 0.0
    %3854 = vmatprep.subr.mxu0 0.0
    %3855 = vmatpush1.msra.mxu0 0.0
    %3856 = vmatprep.mubr.f32.mxu0 0.0
    %3857 = vmatmul.mubr.f32.gmra.mrb[0].mxu0 %v3790
    %v3858 = vpop.f32.mrb[0].mxu0
    %v3859 = vadd.f32 0.0, %v3858
    %v3860 = vpop.f32.mrb[0].mxu0
    %3861 = vdwg.mxu0
    %3864 = vrot.lane.b32.xlu0 %v3023, 16
    %v3865 = vpop.permute.xlu0 %3864
    %3866 = vrot.lane.b32.xlu0 %v3191, 16
    %v3867 = vpop.permute.xlu0 %3866
    %3872 = vrot.lane.b32.xlu0 %v3358, 32
    %v3873 = vpop.permute.xlu0 %3872
    %3874 = vrot.lane.b32.xlu0 %v3525, 32
    %v3875 = vpop.permute.xlu0 %3874
    %3880 = vrot.lane.b32.xlu0 %v3692, 48
    %v3881 = vpop.permute.xlu0 %3880
    %3882 = vrot.lane.b32.xlu0 %v3859, 48
    %v3883 = vpop.permute.xlu0 %3882
    %v3886 = vsel %vm497, %v2691, %v3865
    %v3887 = vsel %vm497, %v2855, %v3867
    %v3888 = vsel %vm1862, %v3886, %v3873
    %v3889 = vsel %vm1862, %v3887, %v3875
    %v3890 = vsel %vm1865, %v3888, %v3881
    %v3891 = vsel %vm1865, %v3889, %v3883
    %s3892 = scalar_lea.vmem %s10, 64
    %v3893 = vld [vmem:[%s3892] sm:$0xff]
    %v3894 = vld [vmem:[%s3892 + $0x8] sm:$0xff]
    %v3895 = vld [vmem:[%s3892 + $0x10] sm:$0xff]
    %v3896 = vld [vmem:[%s3892 + $0x18] sm:$0xff]
    %v3897 = vld [vmem:[%s3892 + $0x20] sm:$0xff]
    %v3898 = vld [vmem:[%s3892 + $0x28] sm:$0xff]
    %v3899 = vld [vmem:[%s3892 + $0x30] sm:$0xff]
    %v3900 = vld [vmem:[%s3892 + $0x38] sm:$0xff]
    %v3902 = vsel %vm179, %v3890, 0
    %v3905 = vsel %vm179, %v3891, 0
    %3907 = vmatprep.subr.mxu0 0.0
    %3908 = vmatpush1.msra.mxu0 %v3893
    %3909 = vmatprep.subr.mxu0 0.0
    %3910 = vmatpush1.msra.mxu0 %v3894
    %3911 = vmatprep.subr.mxu0 0.0
    %3912 = vmatpush1.msra.mxu0 %v3895
    %3913 = vmatprep.subr.mxu0 0.0
    %3914 = vmatpush1.msra.mxu0 %v3896
    %3915 = vmatprep.subr.mxu0 0.0
    %3916 = vmatpush1.msra.mxu0 %v3897
    %3917 = vmatprep.subr.mxu0 0.0
    %3918 = vmatpush1.msra.mxu0 %v3898
    %3919 = vmatprep.subr.mxu0 0.0
    %3920 = vmatpush1.msra.mxu0 %v3899
    %3921 = vmatprep.subr.mxu0 0.0
    %3922 = vmatpush1.msra.mxu0 %v3900
    %3923 = vmatprep.subr.mxu0 0.0
    %3924 = vmatpush1.msra.mxu0 0.0
    %3925 = vmatprep.subr.mxu0 0.0
    %3926 = vmatpush1.msra.mxu0 0.0
    %3927 = vmatprep.subr.mxu0 0.0
    %3928 = vmatpush1.msra.mxu0 0.0
    %3929 = vmatprep.subr.mxu0 0.0
    %3930 = vmatpush1.msra.mxu0 0.0
    %3931 = vmatprep.subr.mxu0 0.0
    %3932 = vmatpush1.msra.mxu0 0.0
    %3933 = vmatprep.subr.mxu0 0.0
    %3934 = vmatpush1.msra.mxu0 0.0
    %3935 = vmatprep.subr.mxu0 0.0
    %3936 = vmatpush1.msra.mxu0 0.0
    %3937 = vmatprep.subr.mxu0 0.0
    %3938 = vmatpush1.msra.mxu0 0.0
    %3939 = vmatprep.subr.mxu0 0.0
    %3940 = vmatpush1.msra.mxu0 0.0
    %3941 = vmatprep.subr.mxu0 0.0
    %3942 = vmatpush1.msra.mxu0 0.0
    %3943 = vmatprep.subr.mxu0 0.0
    %3944 = vmatpush1.msra.mxu0 0.0
    %3945 = vmatprep.subr.mxu0 0.0
    %3946 = vmatpush1.msra.mxu0 0.0
    %3947 = vmatprep.subr.mxu0 0.0
    %3948 = vmatpush1.msra.mxu0 0.0
    %3949 = vmatprep.subr.mxu0 0.0
    %3950 = vmatpush1.msra.mxu0 0.0
    %3951 = vmatprep.subr.mxu0 0.0
    %3952 = vmatpush1.msra.mxu0 0.0
    %3953 = vmatprep.subr.mxu0 0.0
    %3954 = vmatpush1.msra.mxu0 0.0
    %3955 = vmatprep.subr.mxu0 0.0
    %3956 = vmatpush1.msra.mxu0 0.0
    %3957 = vmatprep.subr.mxu0 0.0
    %3958 = vmatpush1.msra.mxu0 0.0
    %3959 = vmatprep.subr.mxu0 0.0
    %3960 = vmatpush1.msra.mxu0 0.0
    %3961 = vmatprep.subr.mxu0 0.0
    %3962 = vmatpush1.msra.mxu0 0.0
    %3963 = vmatprep.subr.mxu0 0.0
    %3964 = vmatpush1.msra.mxu0 0.0
    %3965 = vmatprep.subr.mxu0 0.0
    %3966 = vmatpush1.msra.mxu0 0.0
    %3967 = vmatprep.subr.mxu0 0.0
    %3968 = vmatpush1.msra.mxu0 0.0
    %3969 = vmatprep.subr.mxu0 0.0
    %3970 = vmatpush1.msra.mxu0 0.0
    %3971 = vmatprep.mubr.f32.mxu0 0.0
    %3972 = vmatmul.mubr.f32.gmra.mrb[0].mxu0 %v3902
    %v3973 = vpop.f32.mrb[0].mxu0
    %v3974 = vadd.f32 0.0, %v3973
    %v3975 = vpop.f32.mrb[0].mxu0
    %3976 = vmatprep.mubr.f32.mxu0 0.0
    %3977 = vmatmul.mubr.f32.gmra.mrb[0].mxu0 %v3905
    %v3978 = vpop.f32.mrb[0].mxu0
    %v3979 = vadd.f32 0.0, %v3978
    %v3980 = vpop.f32.mrb[0].mxu0
    %3981 = vdwg.mxu0
    %v3982 = vadd.f32 %v2218, %v3974
    %v3983 = vadd.f32 %v2219, %v3979
    %s3984 = scalar_lea.vmem %s8, 1
    %v3985 = vld [vmem:[%s3984] sm:$0x1]
    %v3986 = vmul.f32 %v3982, %v3982
    %v3987 = vmul.f32 %v3983, %v3983
    %v3988 = vsel %vm179, %v3986, 0.0
    %3989 = vadd.xlane.f32.xlu0 %v3988
    %v3990 = vpop.xlane.xlu0 %3989
    %v3991 = vsel %vm179, %v3987, 0.0
    %3992 = vadd.xlane.f32.xlu0 %v3991
    %v3993 = vpop.xlane.xlu0 %3992
    %v3994 = vmul.f32 %v3990, %v186
    %v3995 = vmul.f32 %v3993, %v186
    %v3996 = vadd.f32 %v3994, 1e-06
    %v3997 = vadd.f32 %v3995, 1e-06
    %v3998 = vrsqrt.pop %v3996
    %v3999 = vrsqrt.pop %v3997
    %v4000 = vmul.f32 %v3982, %v3998
    %v4001 = vmul.f32 %v3983, %v3999
    %v4003 = vlaneseq
    %v4004 = vshrl.u32 %v4003, 7
    %v4005 = vsub.s32 0, %v4004
    %v4006 = vrot.slane %v3985, %v4005
    %v4008 = vmul.f32 %v4000, %v4006
    %v4009 = vmul.f32 %v4001, %v4006
    %s4010 = scalar_lea.vmem %s11, 128
    %v4011 = vld [vmem:[%s4010] sm:$0xff]
    %v4012 = vld [vmem:[%s4010 + $0x8] sm:$0xff]
    %v4013 = vld [vmem:[%s4010 + $0x10] sm:$0xff]
    %v4014 = vld [vmem:[%s4010 + $0x18] sm:$0xff]
    %v4015 = vld [vmem:[%s4010 + $0x20] sm:$0xff]
    %v4016 = vld [vmem:[%s4010 + $0x28] sm:$0xff]
    %v4017 = vld [vmem:[%s4010 + $0x30] sm:$0xff]
    %v4018 = vld [vmem:[%s4010 + $0x38] sm:$0xff]
    %v4019 = vld [vmem:[%s4010 + $0x40] sm:$0xff]
    %v4020 = vld [vmem:[%s4010 + $0x48] sm:$0xff]
    %v4021 = vld [vmem:[%s4010 + $0x50] sm:$0xff]
    %v4022 = vld [vmem:[%s4010 + $0x58] sm:$0xff]
    %v4023 = vld [vmem:[%s4010 + $0x60] sm:$0xff]
    %v4024 = vld [vmem:[%s4010 + $0x68] sm:$0xff]
    %v4025 = vld [vmem:[%s4010 + $0x70] sm:$0xff]
    %v4026 = vld [vmem:[%s4010 + $0x78] sm:$0xff]
    %v4028 = vsel %vm179, %v4008, 0
    %v4031 = vsel %vm179, %v4009, 0
    %4033 = vmatprep.subr.mxu0 %v4012
    %4034 = vmatpush1.msra.mxu0 %v4011
    %4035 = vmatprep.subr.mxu0 %v4014
    %4036 = vmatpush1.msra.mxu0 %v4013
    %4037 = vmatprep.subr.mxu0 %v4016
    %4038 = vmatpush1.msra.mxu0 %v4015
    %4039 = vmatprep.subr.mxu0 %v4018
    %4040 = vmatpush1.msra.mxu0 %v4017
    %4041 = vmatprep.subr.mxu0 %v4020
    %4042 = vmatpush1.msra.mxu0 %v4019
    %4043 = vmatprep.subr.mxu0 %v4022
    %4044 = vmatpush1.msra.mxu0 %v4021
    %4045 = vmatprep.subr.mxu0 %v4024
    %4046 = vmatpush1.msra.mxu0 %v4023
    %4047 = vmatprep.subr.mxu0 %v4026
    %4048 = vmatpush1.msra.mxu0 %v4025
    %4049 = vmatprep.subr.mxu0 0.0
    %4050 = vmatpush1.msra.mxu0 0.0
    %4051 = vmatprep.subr.mxu0 0.0
    %4052 = vmatpush1.msra.mxu0 0.0
    %4053 = vmatprep.subr.mxu0 0.0
    %4054 = vmatpush1.msra.mxu0 0.0
    %4055 = vmatprep.subr.mxu0 0.0
    %4056 = vmatpush1.msra.mxu0 0.0
    %4057 = vmatprep.subr.mxu0 0.0
    %4058 = vmatpush1.msra.mxu0 0.0
    %4059 = vmatprep.subr.mxu0 0.0
    %4060 = vmatpush1.msra.mxu0 0.0
    %4061 = vmatprep.subr.mxu0 0.0
    %4062 = vmatpush1.msra.mxu0 0.0
    %4063 = vmatprep.subr.mxu0 0.0
    %4064 = vmatpush1.msra.mxu0 0.0
    %4065 = vmatprep.subr.mxu0 0.0
    %4066 = vmatpush1.msra.mxu0 0.0
    %4067 = vmatprep.subr.mxu0 0.0
    %4068 = vmatpush1.msra.mxu0 0.0
    %4069 = vmatprep.subr.mxu0 0.0
    %4070 = vmatpush1.msra.mxu0 0.0
    %4071 = vmatprep.subr.mxu0 0.0
    %4072 = vmatpush1.msra.mxu0 0.0
    %4073 = vmatprep.subr.mxu0 0.0
    %4074 = vmatpush1.msra.mxu0 0.0
    %4075 = vmatprep.subr.mxu0 0.0
    %4076 = vmatpush1.msra.mxu0 0.0
    %4077 = vmatprep.subr.mxu0 0.0
    %4078 = vmatpush1.msra.mxu0 0.0
    %4079 = vmatprep.subr.mxu0 0.0
    %4080 = vmatpush1.msra.mxu0 0.0
    %4081 = vmatprep.subr.mxu0 0.0
    %4082 = vmatpush1.msra.mxu0 0.0
    %4083 = vmatprep.subr.mxu0 0.0
    %4084 = vmatpush1.msra.mxu0 0.0
    %4085 = vmatprep.subr.mxu0 0.0
    %4086 = vmatpush1.msra.mxu0 0.0
    %4087 = vmatprep.subr.mxu0 0.0
    %4088 = vmatpush1.msra.mxu0 0.0
    %4089 = vmatprep.subr.mxu0 0.0
    %4090 = vmatpush1.msra.mxu0 0.0
    %4091 = vmatprep.subr.mxu0 0.0
    %4092 = vmatpush1.msra.mxu0 0.0
    %4093 = vmatprep.subr.mxu0 0.0
    %4094 = vmatpush1.msra.mxu0 0.0
    %4095 = vmatprep.subr.mxu0 0.0
    %4096 = vmatpush1.msra.mxu0 0.0
    %4097 = vmatprep.mubr.f32.mxu0 0.0
    %4098 = vmatmul.mubr.f32.gmra.mrb[0].mxu0 %v4028
    %v4099 = vpop.f32.mrb[0].mxu0
    %v4100 = vadd.f32 0.0, %v4099
    %v4101 = vpop.f32.mrb[0].mxu0
    %v4102 = vadd.f32 0.0, %v4101
    %4103 = vmatprep.mubr.f32.mxu0 0.0
    %4104 = vmatmul.mubr.f32.gmra.mrb[0].mxu0 %v4031
    %v4105 = vpop.f32.mrb[0].mxu0
    %v4106 = vadd.f32 0.0, %v4105
    %v4107 = vpop.f32.mrb[0].mxu0
    %v4108 = vadd.f32 0.0, %v4107
    %4109 = vdwg.mxu0
    %v4110 = vxor.u32 %v4100, 2147483648
    %v4111 = vxor.u32 %v4102, 2147483648
    %v4112 = vxor.u32 %v4106, 2147483648
    %v4113 = vxor.u32 %v4108, 2147483648
    %v4114 = vmul.f32 %v4110, 1.442695
    %v4115 = vpow.pop %v4114
    %v4116 = vmul.f32 %v4111, 1.442695
    %v4117 = vpow.pop %v4116
    %v4118 = vmul.f32 %v4112, 1.442695
    %v4119 = vpow.pop %v4118
    %v4120 = vmul.f32 %v4113, 1.442695
    %v4121 = vpow.pop %v4120
    %v4122 = vadd.f32 %v4115, 1.0
    %v4123 = vadd.f32 %v4117, 1.0
    %v4124 = vadd.f32 %v4119, 1.0
    %v4125 = vadd.f32 %v4121, 1.0
    %v4126 = vrcp.pop %v4122
    %v4127 = vmul.f32 1.0, %v4126
    %v4128 = vrcp.pop %v4123
    %v4129 = vmul.f32 1.0, %v4128
    %v4130 = vrcp.pop %v4124
    %v4131 = vmul.f32 1.0, %v4130
    %v4132 = vrcp.pop %v4125
    %v4133 = vmul.f32 1.0, %v4132
    %v4134 = vmul.f32 %v4100, %v4127
    %v4135 = vmul.f32 %v4102, %v4129
    %v4136 = vmul.f32 %v4106, %v4131
    %v4137 = vmul.f32 %v4108, %v4133
    %s4138 = scalar_lea.vmem %s12, 256
    %v4139 = vld [vmem:[%s4138] sm:$0xff]
    %v4140 = vld [vmem:[%s4138 + $0x8] sm:$0xff]
    %v4141 = vld [vmem:[%s4138 + $0x10] sm:$0xff]
    %v4142 = vld [vmem:[%s4138 + $0x18] sm:$0xff]
    %v4143 = vld [vmem:[%s4138 + $0x20] sm:$0xff]
    %v4144 = vld [vmem:[%s4138 + $0x28] sm:$0xff]
    %v4145 = vld [vmem:[%s4138 + $0x30] sm:$0xff]
    %v4146 = vld [vmem:[%s4138 + $0x38] sm:$0xff]
    %v4147 = vld [vmem:[%s4138 + $0x40] sm:$0xff]
    %v4148 = vld [vmem:[%s4138 + $0x48] sm:$0xff]
    %v4149 = vld [vmem:[%s4138 + $0x50] sm:$0xff]
    %v4150 = vld [vmem:[%s4138 + $0x58] sm:$0xff]
    %v4151 = vld [vmem:[%s4138 + $0x60] sm:$0xff]
    %v4152 = vld [vmem:[%s4138 + $0x68] sm:$0xff]
    %v4153 = vld [vmem:[%s4138 + $0x70] sm:$0xff]
    %v4154 = vld [vmem:[%s4138 + $0x78] sm:$0xff]
    %v4155 = vld [vmem:[%s4138 + $0x80] sm:$0xff]
    %v4156 = vld [vmem:[%s4138 + $0x88] sm:$0xff]
    %v4157 = vld [vmem:[%s4138 + $0x90] sm:$0xff]
    %v4158 = vld [vmem:[%s4138 + $0x98] sm:$0xff]
    %v4159 = vld [vmem:[%s4138 + $0xa0] sm:$0xff]
    %v4160 = vld [vmem:[%s4138 + $0xa8] sm:$0xff]
    %v4161 = vld [vmem:[%s4138 + $0xb0] sm:$0xff]
    %v4162 = vld [vmem:[%s4138 + $0xb8] sm:$0xff]
    %v4163 = vld [vmem:[%s4138 + $0xc0] sm:$0xff]
    %v4164 = vld [vmem:[%s4138 + $0xc8] sm:$0xff]
    %v4165 = vld [vmem:[%s4138 + $0xd0] sm:$0xff]
    %v4166 = vld [vmem:[%s4138 + $0xd8] sm:$0xff]
    %v4167 = vld [vmem:[%s4138 + $0xe0] sm:$0xff]
    %v4168 = vld [vmem:[%s4138 + $0xe8] sm:$0xff]
    %v4169 = vld [vmem:[%s4138 + $0xf0] sm:$0xff]
    %v4170 = vld [vmem:[%s4138 + $0xf8] sm:$0xff]
    %4171 = vmatprep.subr.mxu0 0.0
    %4172 = vmatpush1.msra.mxu0 %v4139
    %4173 = vmatprep.subr.mxu0 0.0
    %4174 = vmatpush1.msra.mxu0 %v4140
    %4175 = vmatprep.subr.mxu0 0.0
    %4176 = vmatpush1.msra.mxu0 %v4141
    %4177 = vmatprep.subr.mxu0 0.0
    %4178 = vmatpush1.msra.mxu0 %v4142
    %4179 = vmatprep.subr.mxu0 0.0
    %4180 = vmatpush1.msra.mxu0 %v4143
    %4181 = vmatprep.subr.mxu0 0.0
    %4182 = vmatpush1.msra.mxu0 %v4144
    %4183 = vmatprep.subr.mxu0 0.0
    %4184 = vmatpush1.msra.mxu0 %v4145
    %4185 = vmatprep.subr.mxu0 0.0
    %4186 = vmatpush1.msra.mxu0 %v4146
    %4187 = vmatprep.subr.mxu0 0.0
    %4188 = vmatpush1.msra.mxu0 %v4147
    %4189 = vmatprep.subr.mxu0 0.0
    %4190 = vmatpush1.msra.mxu0 %v4148
    %4191 = vmatprep.subr.mxu0 0.0
    %4192 = vmatpush1.msra.mxu0 %v4149
    %4193 = vmatprep.subr.mxu0 0.0
    %4194 = vmatpush1.msra.mxu0 %v4150
    %4195 = vmatprep.subr.mxu0 0.0
    %4196 = vmatpush1.msra.mxu0 %v4151
    %4197 = vmatprep.subr.mxu0 0.0
    %4198 = vmatpush1.msra.mxu0 %v4152
    %4199 = vmatprep.subr.mxu0 0.0
    %4200 = vmatpush1.msra.mxu0 %v4153
    %4201 = vmatprep.subr.mxu0 0.0
    %4202 = vmatpush1.msra.mxu0 %v4154
    %4203 = vmatprep.subr.mxu0 0.0
    %4204 = vmatpush1.msra.mxu0 %v4155
    %4205 = vmatprep.subr.mxu0 0.0
    %4206 = vmatpush1.msra.mxu0 %v4156
    %4207 = vmatprep.subr.mxu0 0.0
    %4208 = vmatpush1.msra.mxu0 %v4157
    %4209 = vmatprep.subr.mxu0 0.0
    %4210 = vmatpush1.msra.mxu0 %v4158
    %4211 = vmatprep.subr.mxu0 0.0
    %4212 = vmatpush1.msra.mxu0 %v4159
    %4213 = vmatprep.subr.mxu0 0.0
    %4214 = vmatpush1.msra.mxu0 %v4160
    %4215 = vmatprep.subr.mxu0 0.0
    %4216 = vmatpush1.msra.mxu0 %v4161
    %4217 = vmatprep.subr.mxu0 0.0
    %4218 = vmatpush1.msra.mxu0 %v4162
    %4219 = vmatprep.subr.mxu0 0.0
    %4220 = vmatpush1.msra.mxu0 %v4163
    %4221 = vmatprep.subr.mxu0 0.0
    %4222 = vmatpush1.msra.mxu0 %v4164
    %4223 = vmatprep.subr.mxu0 0.0
    %4224 = vmatpush1.msra.mxu0 %v4165
    %4225 = vmatprep.subr.mxu0 0.0
    %4226 = vmatpush1.msra.mxu0 %v4166
    %4227 = vmatprep.subr.mxu0 0.0
    %4228 = vmatpush1.msra.mxu0 %v4167
    %4229 = vmatprep.subr.mxu0 0.0
    %4230 = vmatpush1.msra.mxu0 %v4168
    %4231 = vmatprep.subr.mxu0 0.0
    %4232 = vmatpush1.msra.mxu0 %v4169
    %4233 = vmatprep.subr.mxu0 0.0
    %4234 = vmatpush1.msra.mxu0 %v4170
    %4235 = vmatprep.mubr.f32.mxu0 %v4135
    %4236 = vmatmul.mubr.f32.gmra.mrb[0].mxu0 %v4134
    %v4237 = vpop.f32.mrb[0].mxu0
    %v4238 = vadd.f32 0.0, %v4237
    %v4239 = vpop.f32.mrb[0].mxu0
    %4240 = vmatprep.mubr.f32.mxu0 %v4137
    %4241 = vmatmul.mubr.f32.gmra.mrb[0].mxu0 %v4136
    %v4242 = vpop.f32.mrb[0].mxu0
    %v4243 = vadd.f32 0.0, %v4242
    %v4244 = vpop.f32.mrb[0].mxu0
    %4245 = vdwg.mxu0
    %v4246 = vadd.f32 %v3982, %v4238
    %v4247 = vadd.f32 %v3983, %v4243
    %v4248 = vld [vmem:[%s13] sm:$0x1]
    %v4249 = vmul.f32 %v4246, %v4246
    %v4250 = vmul.f32 %v4247, %v4247
    %v4251 = vsel %vm179, %v4249, 0.0
    %4252 = vadd.xlane.f32.xlu0 %v4251
    %v4253 = vpop.xlane.xlu0 %4252
    %v4254 = vsel %vm179, %v4250, 0.0
    %4255 = vadd.xlane.f32.xlu0 %v4254
    %v4256 = vpop.xlane.xlu0 %4255
    %v4257 = vmul.f32 %v4253, %v186
    %v4258 = vmul.f32 %v4256, %v186
    %v4259 = vadd.f32 %v4257, 1e-06
    %v4260 = vadd.f32 %v4258, 1e-06
    %v4261 = vrsqrt.pop %v4259
    %v4262 = vrsqrt.pop %v4260
    %v4263 = vmul.f32 %v4246, %v4261
    %v4264 = vmul.f32 %v4247, %v4262
    %v4266 = vlaneseq
    %v4267 = vshrl.u32 %v4266, 7
    %v4268 = vsub.s32 0, %v4267
    %v4269 = vrot.slane %v4248, %v4268
    %v4271 = vmul.f32 %v4263, %v4269
    %v4272 = vmul.f32 %v4264, %v4269
    %v4273 = vld [vmem:[%s2] sm:$0x3]
    %v4275 = vsel %vm497, %v4273, 0
    %4277 = vmatprep.subr.mxu0 0.0
    %4278 = vmatpush1.msra.mxu0 %v4271
    %4279 = vmatprep.subr.mxu0 0.0
    %4280 = vmatpush1.msra.mxu0 %v4272
    %4281 = vmatprep.subr.mxu0 0.0
    %4282 = vmatpush1.msra.mxu0 0.0
    %4283 = vmatprep.subr.mxu0 0.0
    %4284 = vmatpush1.msra.mxu0 0.0
    %4285 = vmatprep.subr.mxu0 0.0
    %4286 = vmatpush1.msra.mxu0 0.0
    %4287 = vmatprep.subr.mxu0 0.0
    %4288 = vmatpush1.msra.mxu0 0.0
    %4289 = vmatprep.subr.mxu0 0.0
    %4290 = vmatpush1.msra.mxu0 0.0
    %4291 = vmatprep.subr.mxu0 0.0
    %4292 = vmatpush1.msra.mxu0 0.0
    %4293 = vmatprep.subr.mxu0 0.0
    %4294 = vmatpush1.msra.mxu0 0.0
    %4295 = vmatprep.subr.mxu0 0.0
    %4296 = vmatpush1.msra.mxu0 0.0
    %4297 = vmatprep.subr.mxu0 0.0
    %4298 = vmatpush1.msra.mxu0 0.0
    %4299 = vmatprep.subr.mxu0 0.0
    %4300 = vmatpush1.msra.mxu0 0.0
    %4301 = vmatprep.subr.mxu0 0.0
    %4302 = vmatpush1.msra.mxu0 0.0
    %4303 = vmatprep.subr.mxu0 0.0
    %4304 = vmatpush1.msra.mxu0 0.0
    %4305 = vmatprep.subr.mxu0 0.0
    %4306 = vmatpush1.msra.mxu0 0.0
    %4307 = vmatprep.subr.mxu0 0.0
    %4308 = vmatpush1.msra.mxu0 0.0
    %4309 = vmatprep.subr.mxu0 0.0
    %4310 = vmatpush1.msra.mxu0 0.0
    %4311 = vmatprep.subr.mxu0 0.0
    %4312 = vmatpush1.msra.mxu0 0.0
    %4313 = vmatprep.subr.mxu0 0.0
    %4314 = vmatpush1.msra.mxu0 0.0
    %4315 = vmatprep.subr.mxu0 0.0
    %4316 = vmatpush1.msra.mxu0 0.0
    %4317 = vmatprep.subr.mxu0 0.0
    %4318 = vmatpush1.msra.mxu0 0.0
    %4319 = vmatprep.subr.mxu0 0.0
    %4320 = vmatpush1.msra.mxu0 0.0
    %4321 = vmatprep.subr.mxu0 0.0
    %4322 = vmatpush1.msra.mxu0 0.0
    %4323 = vmatprep.subr.mxu0 0.0
    %4324 = vmatpush1.msra.mxu0 0.0
    %4325 = vmatprep.subr.mxu0 0.0
    %4326 = vmatpush1.msra.mxu0 0.0
    %4327 = vmatprep.subr.mxu0 0.0
    %4328 = vmatpush1.msra.mxu0 0.0
    %4329 = vmatprep.subr.mxu0 0.0
    %4330 = vmatpush1.msra.mxu0 0.0
    %4331 = vmatprep.subr.mxu0 0.0
    %4332 = vmatpush1.msra.mxu0 0.0
    %4333 = vmatprep.subr.mxu0 0.0
    %4334 = vmatpush1.msra.mxu0 0.0
    %4335 = vmatprep.subr.mxu0 0.0
    %4336 = vmatpush1.msra.mxu0 0.0
    %4337 = vmatprep.subr.mxu0 0.0
    %4338 = vmatpush1.msra.mxu0 0.0
    %4339 = vmatprep.subr.mxu0 0.0
    %4340 = vmatpush1.msra.mxu0 0.0
    %4341 = vmatprep.mubr.f32.mxu0 0.0
    %4342 = vmatmul.mubr.f32.gmra.mrb[0].mxu0 %v4275
    %v4343 = vpop.f32.mrb[0].mxu0
    %v4344 = vadd.f32 0.0, %v4343
    %v4345 = vpop.f32.mrb[0].mxu0
    %4346 = vdwg.mxu0
    %vm4347 = vcmask 123904
    %v4348 = vsel %vm4347, %v4273, 0.0
    %4349 = vadd.xlane.f32.xlu0 %v4348
    %v4350 = vpop.xlane.xlu0 %4349
    %v4351 = vmax.f32 %v4350, 1e-09
    %v4352 = vrcp.pop %v4351
    %v4353 = vmul.f32 %v4344, %v4352
    %v4354 = vld [vmem:[%s14] sm:$0xff]
    %v4355 = vld [vmem:[%s14 + $0x8] sm:$0xff]
    %v4356 = vld [vmem:[%s14 + $0x10] sm:$0xff]
    %v4357 = vld [vmem:[%s14 + $0x18] sm:$0xff]
    %v4358 = vld [vmem:[%s14 + $0x20] sm:$0xff]
    %v4359 = vld [vmem:[%s14 + $0x28] sm:$0xff]
    %v4360 = vld [vmem:[%s14 + $0x30] sm:$0xff]
    %v4361 = vld [vmem:[%s14 + $0x38] sm:$0xff]
    %v4362 = vld [vmem:[%s15] sm:$0x1]
    %v4364 = vlaneseq
    %v4365 = vshrl.u32 %v4364, 7
    %v4366 = vsub.s32 0, %v4365
    %v4367 = vrot.slane %v4362, %v4366
    %v4370 = vsel %vm179, %v4353, 0
    %4372 = vmatprep.subr.mxu0 0.0
    %4373 = vmatpush1.msra.mxu0 %v4354
    %4374 = vmatprep.subr.mxu0 0.0
    %4375 = vmatpush1.msra.mxu0 %v4355
    %4376 = vmatprep.subr.mxu0 0.0
    %4377 = vmatpush1.msra.mxu0 %v4356
    %4378 = vmatprep.subr.mxu0 0.0
    %4379 = vmatpush1.msra.mxu0 %v4357
    %4380 = vmatprep.subr.mxu0 0.0
    %4381 = vmatpush1.msra.mxu0 %v4358
    %4382 = vmatprep.subr.mxu0 0.0
    %4383 = vmatpush1.msra.mxu0 %v4359
    %4384 = vmatprep.subr.mxu0 0.0
    %4385 = vmatpush1.msra.mxu0 %v4360
    %4386 = vmatprep.subr.mxu0 0.0
    %4387 = vmatpush1.msra.mxu0 %v4361
    %4388 = vmatprep.subr.mxu0 0.0
    %4389 = vmatpush1.msra.mxu0 0.0
    %4390 = vmatprep.subr.mxu0 0.0
    %4391 = vmatpush1.msra.mxu0 0.0
    %4392 = vmatprep.subr.mxu0 0.0
    %4393 = vmatpush1.msra.mxu0 0.0
    %4394 = vmatprep.subr.mxu0 0.0
    %4395 = vmatpush1.msra.mxu0 0.0
    %4396 = vmatprep.subr.mxu0 0.0
    %4397 = vmatpush1.msra.mxu0 0.0
    %4398 = vmatprep.subr.mxu0 0.0
    %4399 = vmatpush1.msra.mxu0 0.0
    %4400 = vmatprep.subr.mxu0 0.0
    %4401 = vmatpush1.msra.mxu0 0.0
    %4402 = vmatprep.subr.mxu0 0.0
    %4403 = vmatpush1.msra.mxu0 0.0
    %4404 = vmatprep.subr.mxu0 0.0
    %4405 = vmatpush1.msra.mxu0 0.0
    %4406 = vmatprep.subr.mxu0 0.0
    %4407 = vmatpush1.msra.mxu0 0.0
    %4408 = vmatprep.subr.mxu0 0.0
    %4409 = vmatpush1.msra.mxu0 0.0
    %4410 = vmatprep.subr.mxu0 0.0
    %4411 = vmatpush1.msra.mxu0 0.0
    %4412 = vmatprep.subr.mxu0 0.0
    %4413 = vmatpush1.msra.mxu0 0.0
    %4414 = vmatprep.subr.mxu0 0.0
    %4415 = vmatpush1.msra.mxu0 0.0
    %4416 = vmatprep.subr.mxu0 0.0
    %4417 = vmatpush1.msra.mxu0 0.0
    %4418 = vmatprep.subr.mxu0 0.0
    %4419 = vmatpush1.msra.mxu0 0.0
    %4420 = vmatprep.subr.mxu0 0.0
    %4421 = vmatpush1.msra.mxu0 0.0
    %4422 = vmatprep.subr.mxu0 0.0
    %4423 = vmatpush1.msra.mxu0 0.0
    %4424 = vmatprep.subr.mxu0 0.0
    %4425 = vmatpush1.msra.mxu0 0.0
    %4426 = vmatprep.subr.mxu0 0.0
    %4427 = vmatpush1.msra.mxu0 0.0
    %4428 = vmatprep.subr.mxu0 0.0
    %4429 = vmatpush1.msra.mxu0 0.0
    %4430 = vmatprep.subr.mxu0 0.0
    %4431 = vmatpush1.msra.mxu0 0.0
    %4432 = vmatprep.subr.mxu0 0.0
    %4433 = vmatpush1.msra.mxu0 0.0
    %4434 = vmatprep.subr.mxu0 0.0
    %4435 = vmatpush1.msra.mxu0 0.0
    %4436 = vmatprep.mubr.f32.mxu0 0.0
    %4437 = vmatmul.mubr.f32.gmra.mrb[0].mxu0 %v4370
    %v4438 = vpop.f32.mrb[0].mxu0
    %v4439 = vadd.f32 %v4367, %v4438
    %v4440 = vpop.f32.mrb[0].mxu0
    %4441 = vdwg.mxu0
    %4442 = vst [vmem:[#allocation2] sm:$0x3] %v4439
    // Predicated region
    $region66: #{classifier_forward.1} parent=1 // pred_check
      _
    $region67: #{classifier_forward.1} parent=1 // pred_check_branch
      %4444 = sbr.rel (0) target = $region69
    $region68: #{classifier_forward.1} parent=1 // pred_region
      %s4446 = ssub.s32 32, 32
      %4447 = vsyncadd [#allocation3], %s4446
      %s4449 = sshll.u32 [#allocation2], 4
      %s4450 = int_to_ptr.vmem [resolvable:$true] %s4449
      %4452 = dma.vmem_to_hbm [thread:$0]  %s4450, 32, %s16, [#allocation3]
    $region69: #{classifier_forward.1} parent=1 // pred_fallthru
      _
    // Predicated region
    $region70: #{classifier_forward.1} parent=1 // pred_check
      _
    $region71: #{classifier_forward.1} parent=1 // pred_check_branch
      %4454 = sbr.rel (0) target = $region73
    $region72: #{classifier_forward.1} parent=1 // pred_region
      %4455 = dma.done [#allocation3], 32
    $region73: #{classifier_forward.1} parent=1 // pred_fallthru
      _
    %4456 = vsyncpa [#allocation3], 1

</llo_original>
